<compile_context>
chip_gen: v7x
topology: tpu7x:2x2x1
jax: 0.10.0
libtpu: 0.0.40
codegen_flags: <defaults>
</compile_context>

<pallas_src>
import math

import jax
import jax.numpy as jnp
from jax import lax
from jax.experimental import pallas as pl
from jax.experimental.pallas import tpu as pltpu


# ----------------------------------------------------------------------------
# Fused whole-network kernel: one invocation, no grid, everything in VMEM.
# ----------------------------------------------------------------------------
def _make_fused_kernel(n, hw, meta, taps, out_w):
    """meta: tuple of (cout, norm, act) per layer (static).
    taps: layer indices whose f32 outputs are network outputs, in order.
    out_w: lane width of the single packed output slab (multiple of 128)."""
    inv_sqrt2 = 1.0 / math.sqrt(2.0)
    inv_hw = 1.0 / float(hw)
    eps = 1e-5
    n_layers = len(meta)
    m = n * hw

    def kernel(*refs):
        x_ref = refs[0]
        w_refs = refs[1:1 + n_layers]
        b_ref = refs[1 + n_layers]
        o_ref = refs[2 + n_layers]

        # Cast the input once; inter-layer activations are carried as bf16
        # (MXU operands).  Norm / act / tapped outputs stay in f32.
        h = x_ref[...].astype(jnp.bfloat16)

        pieces = []
        for i, (cout, norm, act) in enumerate(meta):
            # 1x1 conv == per-pixel matmul over channels; f32 accumulation.
            y = jnp.dot(h, w_refs[i][...], preferred_element_type=jnp.float32)
            y = y + b_ref[i:i + 1, :cout]                    # (M,Cout)+(1,Cout)
            if norm:
                # InstanceNorm2d(affine=False): per-sample, per-channel over
                # HW.  Two-pass (centered) stats, biased variance, eps=1e-5.
                y3 = y.reshape(n, hw, cout)
                mean = jnp.sum(y3, axis=1, keepdims=True) * inv_hw
                cen = y3 - mean
                var = jnp.sum(cen * cen, axis=1, keepdims=True) * inv_hw
                y = (cen * lax.rsqrt(var + eps)).reshape(m, cout)
            if act:
                # Exact-erf GELU (PyTorch nn.GELU() default).
                y = 0.5 * y * (1.0 + lax.erf(y * inv_sqrt2))
            if i in taps:
                pieces.append(y)
            if i + 1 < n_layers:
                h = y.astype(jnp.bfloat16)

        # Single lane-dense output slab, zero-padded up to a multiple of 128,
        # written with one unmasked full-ref store.
        pad = out_w - sum(p.shape[-1] for p in pieces)
        if pad:
            pieces.append(jnp.zeros((m, pad), jnp.float32))
        o_ref[...] = jnp.concatenate(pieces, axis=-1)

    return kernel


# ----------------------------------------------------------------------------
# Flatten the Auto model into a purely sequential chain of 1x1-conv layers.
# ----------------------------------------------------------------------------
def _pack_network(params):
    """conv1/conv3 of each SAS block are fused into one layer by concatenating
    output channels (shared input); the concat feeding conv4 is then simply the
    fused layer's output (same channel order as torch.cat([x1, x2], dim=1)),
    so conv4 keeps its original unsplit weight.

    Returns (layers, taps) with layers = [(W f32 (cin,cout), b f32 (cout,),
    norm, act)] and taps = indices of the four network outputs (chain order)."""
    layers, taps = [], []

    def add(p, norm, act, tap=False):
        w, b = p
        layers.append((jnp.asarray(w, jnp.float32),
                       jnp.asarray(b, jnp.float32), norm, act))
        if tap:
            taps.append(len(layers) - 1)

    def add_sas(p, tap=False):
        w1, b1 = p["conv1"]
        w3, b3 = p["conv3"]
        # sas.conv2 (3x3 depthwise) is dead code in the reference forward.
        add((jnp.concatenate([w1, w3], axis=1),
             jnp.concatenate([b1, b3], axis=0)), True, True)
        add(p["conv4"], False, False)
        add(p["conv5"], True, True, tap=tap)

    add(params["enc_conv1"], False, False)
    add_sas(params["enc_sas2"])
    add_sas(params["enc_sas3"], tap=True)              # output 1: 64 ch
    add_sas(params["enc_sas4"])
    add(params["enc_conv5"], False, False, tap=True)   # output 2: mid ch
    add(params["dec_conv1"], False, False)
    add(params["dec_conv2"], True, True, tap=True)     # output 3: 64 ch
    add(params["dec_conv3"], False, False)
    add(params["dec_conv4"], True, True)
    add(params["dec_conv5"], False, False)
    add(params["dec_conv6"], True, True, tap=True)     # output 4: in ch
    return layers, tuple(taps)


# ----------------------------------------------------------------------------
# Deterministic parameter init (PyTorch Conv2d-style uniform fan-in bounds)
# ----------------------------------------------------------------------------
def _init_conv(key, cin, cout):
    kw, kb = jax.random.split(key)
    bound = 1.0 / math.sqrt(cin)                       # 1x1 kernel -> fan_in = cin
    w = jax.random.uniform(kw, (cin, cout), jnp.float32, -bound, bound)
    b = jax.random.uniform(kb, (cout,), jnp.float32, -bound, bound)
    return w, b


def _init_sas(key, cin, cout):
    ks = jax.random.split(key, 4)
    return {
        "conv1": _init_conv(ks[0], cin, cout),
        "conv3": _init_conv(ks[1], cin, cout),
        "conv4": _init_conv(ks[2], 2 * cout, cout // 2),
        "conv5": _init_conv(ks[3], cout // 2, cout),
    }


def init_params(key, in_channel=200, mid_channel=32):
    ks = jax.random.split(key, 11)
    return {
        "enc_conv1": _init_conv(ks[0], in_channel, in_channel),
        "enc_sas2": _init_sas(ks[1], in_channel, 128),
        "enc_sas3": _init_sas(ks[2], 128, 64),
        "enc_sas4": _init_sas(ks[3], 64, 32),
        "enc_conv5": _init_conv(ks[4], 32, mid_channel),
        "dec_conv1": _init_conv(ks[5], mid_channel, 64),
        "dec_conv2": _init_conv(ks[6], 64, 64),
        "dec_conv3": _init_conv(ks[7], 64, 128),
        "dec_conv4": _init_conv(ks[8], 128, 128),
        "dec_conv5": _init_conv(ks[9], 128, in_channel),
        "dec_conv6": _init_conv(ks[10], in_channel, in_channel),
    }


# ----------------------------------------------------------------------------
# Model forward: one fused pallas_call for the whole network
# ----------------------------------------------------------------------------
def auto_forward(x_nchw, params):
    N, C, H, W = x_nchw.shape
    HW = H * W
    M = N * HW

    layers, taps = _pack_network(params)
    meta = tuple((int(w.shape[1]), norm, act) for (w, _, norm, act) in layers)

    # bf16 MXU operands (f32 accumulation inside the kernel).
    weights = [w.astype(jnp.bfloat16) for (w, _, _, _) in layers]

    # All biases packed into one lane-dense f32 array: one row per layer.
    bmax = max(cout for cout, _, _ in meta)
    bias = jnp.zeros((len(layers), bmax), jnp.float32)
    for i, (_, b, _, _) in enumerate(layers):
        bias = bias.at[i, : b.shape[0]].set(b)

    tap_widths = [meta[t][0] for t in taps]
    out_w = ((sum(tap_widths) + 127) // 128) * 128     # lane-dense output slab

    # NCHW -> (N*HW, C): pixels on sublanes, channels on lanes; batch merged
    # into the matmul M axis so single-TC chips see full-height (M=128) dots.
    x = jnp.transpose(x_nchw, (0, 2, 3, 1)).reshape(M, C)

    mm_flops = 2 * M * sum(int(w.shape[0]) * int(w.shape[1]) for w in weights)
    transcendentals = M * sum(cout for cout, _, act in meta if act)
    bytes_accessed = (int(x.size) * 4
                      + sum(int(w.size) * 2 for w in weights)
                      + int(bias.size) * 4 + M * out_w * 4)
    cost = pl.CostEstimate(flops=mm_flops, transcendentals=transcendentals,
                           bytes_accessed=bytes_accessed)

    # TODO(synk): on v7x, shard the M axis across the two TensorCores with
    # pl.core_map / CORE_PARALLEL; a single fused invocation uses one TC.
    # TODO(synk): before scaling H*W beyond toy sizes, add an HW grid axis and
    # accumulate InstanceNorm statistics across pixel tiles.
    out = pl.pallas_call(
        _make_fused_kernel(N, HW, meta, taps, out_w),
        out_shape=jax.ShapeDtypeStruct((M, out_w), jnp.float32),
        compiler_params=pltpu.CompilerParams(
            vmem_limit_bytes=32 * 1024 * 1024),
        cost_estimate=cost,
    )(x, *weights, bias)

    # Split the packed slab back into the four NCHW outputs.
    results, col = [], 0
    for w_ in tap_widths:
        y = out[:, col:col + w_].reshape(N, H, W, w_)
        results.append(jnp.transpose(y, (0, 3, 1, 2)))
        col += w_
    return tuple(results)


# ----------------------------------------------------------------------------
if __name__ == "__main__":
    N, C, H, W = 2, 200, 8, 8  # in_channel=200, mid_channel=32 (module defaults)
    key = jax.random.PRNGKey(0)
    kx, kp = jax.random.split(key)
    x = jax.random.normal(kx, (N, C, H, W), jnp.float32)
    params = init_params(kp, in_channel=C, mid_channel=32)

    fwd = jax.jit(auto_forward)
    enc64, enc32, dec64, dec200 = fwd(x, params)
    jax.block_until_ready((enc64, enc32, dec64, dec200))

    assert enc64.shape == (N, 64, H, W)
    assert enc32.shape == (N, 32, H, W)
    assert dec64.shape == (N, 64, H, W)
    assert dec200.shape == (N, C, H, W)
    assert all(bool(jnp.all(jnp.isfinite(t)))
               for t in (enc64, enc32, dec64, dec200))

    print("KERNEL_OK")
</pallas_src>

<mosaic_0001>
module attributes {stable_mosaic.version = 11 : i64} {
  func.func @kernel(%arg0: memref<128x200xf32, #tpu.memory_space<vmem>>, %arg1: memref<200x200xbf16, #tpu.memory_space<vmem>>, %arg2: memref<200x256xbf16, #tpu.memory_space<vmem>>, %arg3: memref<256x64xbf16, #tpu.memory_space<vmem>>, %arg4: memref<64x128xbf16, #tpu.memory_space<vmem>>, %arg5: memref<128x128xbf16, #tpu.memory_space<vmem>>, %arg6: memref<128x32xbf16, #tpu.memory_space<vmem>>, %arg7: memref<32x64xbf16, #tpu.memory_space<vmem>>, %arg8: memref<64x64xbf16, #tpu.memory_space<vmem>>, %arg9: memref<64x16xbf16, #tpu.memory_space<vmem>>, %arg10: memref<16x32xbf16, #tpu.memory_space<vmem>>, %arg11: memref<32x32xbf16, #tpu.memory_space<vmem>>, %arg12: memref<32x64xbf16, #tpu.memory_space<vmem>>, %arg13: memref<64x64xbf16, #tpu.memory_space<vmem>>, %arg14: memref<64x128xbf16, #tpu.memory_space<vmem>>, %arg15: memref<128x128xbf16, #tpu.memory_space<vmem>>, %arg16: memref<128x200xbf16, #tpu.memory_space<vmem>>, %arg17: memref<200x200xbf16, #tpu.memory_space<vmem>>, %arg18: memref<17x256xf32, #tpu.memory_space<vmem>>, %arg19: memref<128x384xf32, #tpu.memory_space<vmem>>) attributes {dimension_semantics = [], scalar_prefetch = 0 : i64, scratch_operands = 0 : i64, tpu.core_type = #tpu.core_type<tc>} {
    %c0 = arith.constant 0 : index
    %c0_0 = arith.constant 0 : index
    %0 = vector.load %arg0[%c0, %c0_0] : memref<128x200xf32, #tpu.memory_space<vmem>>, vector<128x200xf32>
    %1 = arith.truncf %0 : vector<128x200xf32> to vector<128x200xbf16>
    %c0_1 = arith.constant 0 : index
    %c0_2 = arith.constant 0 : index
    %2 = vector.load %arg1[%c0_1, %c0_2] : memref<200x200xbf16, #tpu.memory_space<vmem>>, vector<200x200xbf16>
    %cst = arith.constant dense<0.000000e+00> : vector<128x200xf32>
    %3 = tpu.matmul %1, %2, %cst {dimension_numbers = #tpu.dot_dimension_numbers<[1], [0], [0], [1], [0, 0, 1, 1], [], []>} : vector<128x200xbf16>, vector<200x200xbf16>, vector<128x200xf32> -> vector<128x200xf32>
    %c0_3 = arith.constant 0 : index
    %c0_4 = arith.constant 0 : index
    %4 = vector.load %arg18[%c0_3, %c0_4] : memref<17x256xf32, #tpu.memory_space<vmem>>, vector<1x200xf32>
    %5 = vector.broadcast %4 : vector<1x200xf32> to vector<128x200xf32>
    %6 = arith.addf %3, %5 : vector<128x200xf32>
    %7 = arith.truncf %6 : vector<128x200xf32> to vector<128x200xbf16>
    %c0_5 = arith.constant 0 : index
    %c0_6 = arith.constant 0 : index
    %8 = vector.load %arg2[%c0_5, %c0_6] : memref<200x256xbf16, #tpu.memory_space<vmem>>, vector<200x256xbf16>
    %cst_7 = arith.constant dense<0.000000e+00> : vector<128x256xf32>
    %9 = tpu.matmul %7, %8, %cst_7 {dimension_numbers = #tpu.dot_dimension_numbers<[1], [0], [0], [1], [0, 0, 1, 1], [], []>} : vector<128x200xbf16>, vector<200x256xbf16>, vector<128x256xf32> -> vector<128x256xf32>
    %c1 = arith.constant 1 : index
    %c0_8 = arith.constant 0 : index
    %10 = vector.load %arg18[%c1, %c0_8] : memref<17x256xf32, #tpu.memory_space<vmem>>, vector<1x256xf32>
    %11 = vector.broadcast %10 : vector<1x256xf32> to vector<128x256xf32>
    %12 = arith.addf %9, %11 : vector<128x256xf32>
    %13 = vector.shape_cast %12 : vector<128x256xf32> to vector<2x64x256xf32>
    %cst_9 = arith.constant dense<0.000000e+00> : vector<2x256xf32>
    %14 = vector.multi_reduction <add>, %13, %cst_9 [1] : vector<2x64x256xf32> to vector<2x256xf32>
    %15 = vector.shape_cast %14 : vector<2x256xf32> to vector<2x1x256xf32>
    %cst_10 = arith.constant 1.562500e-02 : f32
    %16 = vector.broadcast %cst_10 : f32 to vector<2x1x256xf32>
    %17 = arith.mulf %15, %16 : vector<2x1x256xf32>
    %18 = vector.broadcast %17 : vector<2x1x256xf32> to vector<2x64x256xf32>
    %19 = arith.subf %13, %18 : vector<2x64x256xf32>
    %20 = arith.mulf %19, %19 : vector<2x64x256xf32>
    %cst_11 = arith.constant dense<0.000000e+00> : vector<2x256xf32>
    %21 = vector.multi_reduction <add>, %20, %cst_11 [1] : vector<2x64x256xf32> to vector<2x256xf32>
    %22 = vector.shape_cast %21 : vector<2x256xf32> to vector<2x1x256xf32>
    %cst_12 = arith.constant 1.562500e-02 : f32
    %23 = vector.broadcast %cst_12 : f32 to vector<2x1x256xf32>
    %24 = arith.mulf %22, %23 : vector<2x1x256xf32>
    %cst_13 = arith.constant 9.99999974E-6 : f32
    %25 = vector.broadcast %cst_13 : f32 to vector<2x1x256xf32>
    %26 = arith.addf %24, %25 : vector<2x1x256xf32>
    %27 = math.rsqrt %26 : vector<2x1x256xf32>
    %28 = vector.broadcast %27 : vector<2x1x256xf32> to vector<2x64x256xf32>
    %29 = arith.mulf %19, %28 : vector<2x64x256xf32>
    %30 = vector.shape_cast %29 : vector<2x64x256xf32> to vector<128x256xf32>
    %cst_14 = arith.constant 5.000000e-01 : f32
    %31 = vector.broadcast %cst_14 : f32 to vector<128x256xf32>
    %32 = arith.mulf %31, %30 : vector<128x256xf32>
    %cst_15 = arith.constant 0.707106769 : f32
    %33 = vector.broadcast %cst_15 : f32 to vector<128x256xf32>
    %34 = arith.mulf %30, %33 : vector<128x256xf32>
    %35 = math.erf %34 : vector<128x256xf32>
    %cst_16 = arith.constant 1.000000e+00 : f32
    %36 = vector.broadcast %cst_16 : f32 to vector<128x256xf32>
    %37 = arith.addf %36, %35 : vector<128x256xf32>
    %38 = arith.mulf %32, %37 : vector<128x256xf32>
    %39 = arith.truncf %38 : vector<128x256xf32> to vector<128x256xbf16>
    %c0_17 = arith.constant 0 : index
    %c0_18 = arith.constant 0 : index
    %40 = vector.load %arg3[%c0_17, %c0_18] : memref<256x64xbf16, #tpu.memory_space<vmem>>, vector<256x64xbf16>
    %cst_19 = arith.constant dense<0.000000e+00> : vector<128x64xf32>
    %41 = tpu.matmul %39, %40, %cst_19 {dimension_numbers = #tpu.dot_dimension_numbers<[1], [0], [0], [1], [0, 0, 1, 1], [], []>} : vector<128x256xbf16>, vector<256x64xbf16>, vector<128x64xf32> -> vector<128x64xf32>
    %c2 = arith.constant 2 : index
    %c0_20 = arith.constant 0 : index
    %42 = vector.load %arg18[%c2, %c0_20] : memref<17x256xf32, #tpu.memory_space<vmem>>, vector<1x64xf32>
    %43 = vector.broadcast %42 : vector<1x64xf32> to vector<128x64xf32>
    %44 = arith.addf %41, %43 : vector<128x64xf32>
    %45 = arith.truncf %44 : vector<128x64xf32> to vector<128x64xbf16>
    %c0_21 = arith.constant 0 : index
    %c0_22 = arith.constant 0 : index
    %46 = vector.load %arg4[%c0_21, %c0_22] : memref<64x128xbf16, #tpu.memory_space<vmem>>, vector<64x128xbf16>
    %cst_23 = arith.constant dense<0.000000e+00> : vector<128x128xf32>
    %47 = tpu.matmul %45, %46, %cst_23 {dimension_numbers = #tpu.dot_dimension_numbers<[1], [0], [0], [1], [0, 0, 1, 1], [], []>} : vector<128x64xbf16>, vector<64x128xbf16>, vector<128x128xf32> -> vector<128x128xf32>
    %c3 = arith.constant 3 : index
    %c0_24 = arith.constant 0 : index
    %48 = vector.load %arg18[%c3, %c0_24] : memref<17x256xf32, #tpu.memory_space<vmem>>, vector<1x128xf32>
    %49 = vector.broadcast %48 : vector<1x128xf32> to vector<128x128xf32>
    %50 = arith.addf %47, %49 : vector<128x128xf32>
    %51 = vector.shape_cast %50 : vector<128x128xf32> to vector<2x64x128xf32>
    %cst_25 = arith.constant dense<0.000000e+00> : vector<2x128xf32>
    %52 = vector.multi_reduction <add>, %51, %cst_25 [1] : vector<2x64x128xf32> to vector<2x128xf32>
    %53 = vector.shape_cast %52 : vector<2x128xf32> to vector<2x1x128xf32>
    %cst_26 = arith.constant 1.562500e-02 : f32
    %54 = vector.broadcast %cst_26 : f32 to vector<2x1x128xf32>
    %55 = arith.mulf %53, %54 : vector<2x1x128xf32>
    %56 = vector.broadcast %55 : vector<2x1x128xf32> to vector<2x64x128xf32>
    %57 = arith.subf %51, %56 : vector<2x64x128xf32>
    %58 = arith.mulf %57, %57 : vector<2x64x128xf32>
    %cst_27 = arith.constant dense<0.000000e+00> : vector<2x128xf32>
    %59 = vector.multi_reduction <add>, %58, %cst_27 [1] : vector<2x64x128xf32> to vector<2x128xf32>
    %60 = vector.shape_cast %59 : vector<2x128xf32> to vector<2x1x128xf32>
    %cst_28 = arith.constant 1.562500e-02 : f32
    %61 = vector.broadcast %cst_28 : f32 to vector<2x1x128xf32>
    %62 = arith.mulf %60, %61 : vector<2x1x128xf32>
    %cst_29 = arith.constant 9.99999974E-6 : f32
    %63 = vector.broadcast %cst_29 : f32 to vector<2x1x128xf32>
    %64 = arith.addf %62, %63 : vector<2x1x128xf32>
    %65 = math.rsqrt %64 : vector<2x1x128xf32>
    %66 = vector.broadcast %65 : vector<2x1x128xf32> to vector<2x64x128xf32>
    %67 = arith.mulf %57, %66 : vector<2x64x128xf32>
    %68 = vector.shape_cast %67 : vector<2x64x128xf32> to vector<128x128xf32>
    %cst_30 = arith.constant 5.000000e-01 : f32
    %69 = vector.broadcast %cst_30 : f32 to vector<128x128xf32>
    %70 = arith.mulf %69, %68 : vector<128x128xf32>
    %cst_31 = arith.constant 0.707106769 : f32
    %71 = vector.broadcast %cst_31 : f32 to vector<128x128xf32>
    %72 = arith.mulf %68, %71 : vector<128x128xf32>
    %73 = math.erf %72 : vector<128x128xf32>
    %cst_32 = arith.constant 1.000000e+00 : f32
    %74 = vector.broadcast %cst_32 : f32 to vector<128x128xf32>
    %75 = arith.addf %74, %73 : vector<128x128xf32>
    %76 = arith.mulf %70, %75 : vector<128x128xf32>
    %77 = arith.truncf %76 : vector<128x128xf32> to vector<128x128xbf16>
    %c0_33 = arith.constant 0 : index
    %c0_34 = arith.constant 0 : index
    %78 = vector.load %arg5[%c0_33, %c0_34] : memref<128x128xbf16, #tpu.memory_space<vmem>>, vector<128x128xbf16>
    %cst_35 = arith.constant dense<0.000000e+00> : vector<128x128xf32>
    %79 = tpu.matmul %77, %78, %cst_35 {dimension_numbers = #tpu.dot_dimension_numbers<[1], [0], [0], [1], [0, 0, 1, 1], [], []>} : vector<128x128xbf16>, vector<128x128xbf16>, vector<128x128xf32> -> vector<128x128xf32>
    %c4 = arith.constant 4 : index
    %c0_36 = arith.constant 0 : index
    %80 = vector.load %arg18[%c4, %c0_36] : memref<17x256xf32, #tpu.memory_space<vmem>>, vector<1x128xf32>
    %81 = vector.broadcast %80 : vector<1x128xf32> to vector<128x128xf32>
    %82 = arith.addf %79, %81 : vector<128x128xf32>
    %83 = vector.shape_cast %82 : vector<128x128xf32> to vector<2x64x128xf32>
    %cst_37 = arith.constant dense<0.000000e+00> : vector<2x128xf32>
    %84 = vector.multi_reduction <add>, %83, %cst_37 [1] : vector<2x64x128xf32> to vector<2x128xf32>
    %85 = vector.shape_cast %84 : vector<2x128xf32> to vector<2x1x128xf32>
    %cst_38 = arith.constant 1.562500e-02 : f32
    %86 = vector.broadcast %cst_38 : f32 to vector<2x1x128xf32>
    %87 = arith.mulf %85, %86 : vector<2x1x128xf32>
    %88 = vector.broadcast %87 : vector<2x1x128xf32> to vector<2x64x128xf32>
    %89 = arith.subf %83, %88 : vector<2x64x128xf32>
    %90 = arith.mulf %89, %89 : vector<2x64x128xf32>
    %cst_39 = arith.constant dense<0.000000e+00> : vector<2x128xf32>
    %91 = vector.multi_reduction <add>, %90, %cst_39 [1] : vector<2x64x128xf32> to vector<2x128xf32>
    %92 = vector.shape_cast %91 : vector<2x128xf32> to vector<2x1x128xf32>
    %cst_40 = arith.constant 1.562500e-02 : f32
    %93 = vector.broadcast %cst_40 : f32 to vector<2x1x128xf32>
    %94 = arith.mulf %92, %93 : vector<2x1x128xf32>
    %cst_41 = arith.constant 9.99999974E-6 : f32
    %95 = vector.broadcast %cst_41 : f32 to vector<2x1x128xf32>
    %96 = arith.addf %94, %95 : vector<2x1x128xf32>
    %97 = math.rsqrt %96 : vector<2x1x128xf32>
    %98 = vector.broadcast %97 : vector<2x1x128xf32> to vector<2x64x128xf32>
    %99 = arith.mulf %89, %98 : vector<2x64x128xf32>
    %100 = vector.shape_cast %99 : vector<2x64x128xf32> to vector<128x128xf32>
    %cst_42 = arith.constant 5.000000e-01 : f32
    %101 = vector.broadcast %cst_42 : f32 to vector<128x128xf32>
    %102 = arith.mulf %101, %100 : vector<128x128xf32>
    %cst_43 = arith.constant 0.707106769 : f32
    %103 = vector.broadcast %cst_43 : f32 to vector<128x128xf32>
    %104 = arith.mulf %100, %103 : vector<128x128xf32>
    %105 = math.erf %104 : vector<128x128xf32>
    %cst_44 = arith.constant 1.000000e+00 : f32
    %106 = vector.broadcast %cst_44 : f32 to vector<128x128xf32>
    %107 = arith.addf %106, %105 : vector<128x128xf32>
    %108 = arith.mulf %102, %107 : vector<128x128xf32>
    %109 = arith.truncf %108 : vector<128x128xf32> to vector<128x128xbf16>
    %c0_45 = arith.constant 0 : index
    %c0_46 = arith.constant 0 : index
    %110 = vector.load %arg6[%c0_45, %c0_46] : memref<128x32xbf16, #tpu.memory_space<vmem>>, vector<128x32xbf16>
    %cst_47 = arith.constant dense<0.000000e+00> : vector<128x32xf32>
    %111 = tpu.matmul %109, %110, %cst_47 {dimension_numbers = #tpu.dot_dimension_numbers<[1], [0], [0], [1], [0, 0, 1, 1], [], []>} : vector<128x128xbf16>, vector<128x32xbf16>, vector<128x32xf32> -> vector<128x32xf32>
    %c5 = arith.constant 5 : index
    %c0_48 = arith.constant 0 : index
    %112 = vector.load %arg18[%c5, %c0_48] : memref<17x256xf32, #tpu.memory_space<vmem>>, vector<1x32xf32>
    %113 = vector.broadcast %112 : vector<1x32xf32> to vector<128x32xf32>
    %114 = arith.addf %111, %113 : vector<128x32xf32>
    %115 = arith.truncf %114 : vector<128x32xf32> to vector<128x32xbf16>
    %c0_49 = arith.constant 0 : index
    %c0_50 = arith.constant 0 : index
    %116 = vector.load %arg7[%c0_49, %c0_50] : memref<32x64xbf16, #tpu.memory_space<vmem>>, vector<32x64xbf16>
    %cst_51 = arith.constant dense<0.000000e+00> : vector<128x64xf32>
    %117 = tpu.matmul %115, %116, %cst_51 {dimension_numbers = #tpu.dot_dimension_numbers<[1], [0], [0], [1], [0, 0, 1, 1], [], []>} : vector<128x32xbf16>, vector<32x64xbf16>, vector<128x64xf32> -> vector<128x64xf32>
    %c6 = arith.constant 6 : index
    %c0_52 = arith.constant 0 : index
    %118 = vector.load %arg18[%c6, %c0_52] : memref<17x256xf32, #tpu.memory_space<vmem>>, vector<1x64xf32>
    %119 = vector.broadcast %118 : vector<1x64xf32> to vector<128x64xf32>
    %120 = arith.addf %117, %119 : vector<128x64xf32>
    %121 = vector.shape_cast %120 : vector<128x64xf32> to vector<2x64x64xf32>
    %cst_53 = arith.constant dense<0.000000e+00> : vector<2x64xf32>
    %122 = vector.multi_reduction <add>, %121, %cst_53 [1] : vector<2x64x64xf32> to vector<2x64xf32>
    %123 = vector.shape_cast %122 : vector<2x64xf32> to vector<2x1x64xf32>
    %cst_54 = arith.constant 1.562500e-02 : f32
    %124 = vector.broadcast %cst_54 : f32 to vector<2x1x64xf32>
    %125 = arith.mulf %123, %124 : vector<2x1x64xf32>
    %126 = vector.broadcast %125 : vector<2x1x64xf32> to vector<2x64x64xf32>
    %127 = arith.subf %121, %126 : vector<2x64x64xf32>
    %128 = arith.mulf %127, %127 : vector<2x64x64xf32>
    %cst_55 = arith.constant dense<0.000000e+00> : vector<2x64xf32>
    %129 = vector.multi_reduction <add>, %128, %cst_55 [1] : vector<2x64x64xf32> to vector<2x64xf32>
    %130 = vector.shape_cast %129 : vector<2x64xf32> to vector<2x1x64xf32>
    %cst_56 = arith.constant 1.562500e-02 : f32
    %131 = vector.broadcast %cst_56 : f32 to vector<2x1x64xf32>
    %132 = arith.mulf %130, %131 : vector<2x1x64xf32>
    %cst_57 = arith.constant 9.99999974E-6 : f32
    %133 = vector.broadcast %cst_57 : f32 to vector<2x1x64xf32>
    %134 = arith.addf %132, %133 : vector<2x1x64xf32>
    %135 = math.rsqrt %134 : vector<2x1x64xf32>
    %136 = vector.broadcast %135 : vector<2x1x64xf32> to vector<2x64x64xf32>
    %137 = arith.mulf %127, %136 : vector<2x64x64xf32>
    %138 = vector.shape_cast %137 : vector<2x64x64xf32> to vector<128x64xf32>
    %cst_58 = arith.constant 5.000000e-01 : f32
    %139 = vector.broadcast %cst_58 : f32 to vector<128x64xf32>
    %140 = arith.mulf %139, %138 : vector<128x64xf32>
    %cst_59 = arith.constant 0.707106769 : f32
    %141 = vector.broadcast %cst_59 : f32 to vector<128x64xf32>
    %142 = arith.mulf %138, %141 : vector<128x64xf32>
    %143 = math.erf %142 : vector<128x64xf32>
    %cst_60 = arith.constant 1.000000e+00 : f32
    %144 = vector.broadcast %cst_60 : f32 to vector<128x64xf32>
    %145 = arith.addf %144, %143 : vector<128x64xf32>
    %146 = arith.mulf %140, %145 : vector<128x64xf32>
    %147 = arith.truncf %146 : vector<128x64xf32> to vector<128x64xbf16>
    %c0_61 = arith.constant 0 : index
    %c0_62 = arith.constant 0 : index
    %148 = vector.load %arg8[%c0_61, %c0_62] : memref<64x64xbf16, #tpu.memory_space<vmem>>, vector<64x64xbf16>
    %cst_63 = arith.constant dense<0.000000e+00> : vector<128x64xf32>
    %149 = tpu.matmul %147, %148, %cst_63 {dimension_numbers = #tpu.dot_dimension_numbers<[1], [0], [0], [1], [0, 0, 1, 1], [], []>} : vector<128x64xbf16>, vector<64x64xbf16>, vector<128x64xf32> -> vector<128x64xf32>
    %c7 = arith.constant 7 : index
    %c0_64 = arith.constant 0 : index
    %150 = vector.load %arg18[%c7, %c0_64] : memref<17x256xf32, #tpu.memory_space<vmem>>, vector<1x64xf32>
    %151 = vector.broadcast %150 : vector<1x64xf32> to vector<128x64xf32>
    %152 = arith.addf %149, %151 : vector<128x64xf32>
    %153 = vector.shape_cast %152 : vector<128x64xf32> to vector<2x64x64xf32>
    %cst_65 = arith.constant dense<0.000000e+00> : vector<2x64xf32>
    %154 = vector.multi_reduction <add>, %153, %cst_65 [1] : vector<2x64x64xf32> to vector<2x64xf32>
    %155 = vector.shape_cast %154 : vector<2x64xf32> to vector<2x1x64xf32>
    %cst_66 = arith.constant 1.562500e-02 : f32
    %156 = vector.broadcast %cst_66 : f32 to vector<2x1x64xf32>
    %157 = arith.mulf %155, %156 : vector<2x1x64xf32>
    %158 = vector.broadcast %157 : vector<2x1x64xf32> to vector<2x64x64xf32>
    %159 = arith.subf %153, %158 : vector<2x64x64xf32>
    %160 = arith.mulf %159, %159 : vector<2x64x64xf32>
    %cst_67 = arith.constant dense<0.000000e+00> : vector<2x64xf32>
    %161 = vector.multi_reduction <add>, %160, %cst_67 [1] : vector<2x64x64xf32> to vector<2x64xf32>
    %162 = vector.shape_cast %161 : vector<2x64xf32> to vector<2x1x64xf32>
    %cst_68 = arith.constant 1.562500e-02 : f32
    %163 = vector.broadcast %cst_68 : f32 to vector<2x1x64xf32>
    %164 = arith.mulf %162, %163 : vector<2x1x64xf32>
    %cst_69 = arith.constant 9.99999974E-6 : f32
    %165 = vector.broadcast %cst_69 : f32 to vector<2x1x64xf32>
    %166 = arith.addf %164, %165 : vector<2x1x64xf32>
    %167 = math.rsqrt %166 : vector<2x1x64xf32>
    %168 = vector.broadcast %167 : vector<2x1x64xf32> to vector<2x64x64xf32>
    %169 = arith.mulf %159, %168 : vector<2x64x64xf32>
    %170 = vector.shape_cast %169 : vector<2x64x64xf32> to vector<128x64xf32>
    %cst_70 = arith.constant 5.000000e-01 : f32
    %171 = vector.broadcast %cst_70 : f32 to vector<128x64xf32>
    %172 = arith.mulf %171, %170 : vector<128x64xf32>
    %cst_71 = arith.constant 0.707106769 : f32
    %173 = vector.broadcast %cst_71 : f32 to vector<128x64xf32>
    %174 = arith.mulf %170, %173 : vector<128x64xf32>
    %175 = math.erf %174 : vector<128x64xf32>
    %cst_72 = arith.constant 1.000000e+00 : f32
    %176 = vector.broadcast %cst_72 : f32 to vector<128x64xf32>
    %177 = arith.addf %176, %175 : vector<128x64xf32>
    %178 = arith.mulf %172, %177 : vector<128x64xf32>
    %179 = arith.truncf %178 : vector<128x64xf32> to vector<128x64xbf16>
    %c0_73 = arith.constant 0 : index
    %c0_74 = arith.constant 0 : index
    %180 = vector.load %arg9[%c0_73, %c0_74] : memref<64x16xbf16, #tpu.memory_space<vmem>>, vector<64x16xbf16>
    %cst_75 = arith.constant dense<0.000000e+00> : vector<128x16xf32>
    %181 = tpu.matmul %179, %180, %cst_75 {dimension_numbers = #tpu.dot_dimension_numbers<[1], [0], [0], [1], [0, 0, 1, 1], [], []>} : vector<128x64xbf16>, vector<64x16xbf16>, vector<128x16xf32> -> vector<128x16xf32>
    %c8 = arith.constant 8 : index
    %c0_76 = arith.constant 0 : index
    %182 = vector.load %arg18[%c8, %c0_76] : memref<17x256xf32, #tpu.memory_space<vmem>>, vector<1x16xf32>
    %183 = vector.broadcast %182 : vector<1x16xf32> to vector<128x16xf32>
    %184 = arith.addf %181, %183 : vector<128x16xf32>
    %185 = arith.truncf %184 : vector<128x16xf32> to vector<128x16xbf16>
    %c0_77 = arith.constant 0 : index
    %c0_78 = arith.constant 0 : index
    %186 = vector.load %arg10[%c0_77, %c0_78] : memref<16x32xbf16, #tpu.memory_space<vmem>>, vector<16x32xbf16>
    %cst_79 = arith.constant dense<0.000000e+00> : vector<128x32xf32>
    %187 = tpu.matmul %185, %186, %cst_79 {dimension_numbers = #tpu.dot_dimension_numbers<[1], [0], [0], [1], [0, 0, 1, 1], [], []>} : vector<128x16xbf16>, vector<16x32xbf16>, vector<128x32xf32> -> vector<128x32xf32>
    %c9 = arith.constant 9 : index
    %c0_80 = arith.constant 0 : index
    %188 = vector.load %arg18[%c9, %c0_80] : memref<17x256xf32, #tpu.memory_space<vmem>>, vector<1x32xf32>
    %189 = vector.broadcast %188 : vector<1x32xf32> to vector<128x32xf32>
    %190 = arith.addf %187, %189 : vector<128x32xf32>
    %191 = vector.shape_cast %190 : vector<128x32xf32> to vector<2x64x32xf32>
    %cst_81 = arith.constant dense<0.000000e+00> : vector<2x32xf32>
    %192 = vector.multi_reduction <add>, %191, %cst_81 [1] : vector<2x64x32xf32> to vector<2x32xf32>
    %193 = vector.shape_cast %192 : vector<2x32xf32> to vector<2x1x32xf32>
    %cst_82 = arith.constant 1.562500e-02 : f32
    %194 = vector.broadcast %cst_82 : f32 to vector<2x1x32xf32>
    %195 = arith.mulf %193, %194 : vector<2x1x32xf32>
    %196 = vector.broadcast %195 : vector<2x1x32xf32> to vector<2x64x32xf32>
    %197 = arith.subf %191, %196 : vector<2x64x32xf32>
    %198 = arith.mulf %197, %197 : vector<2x64x32xf32>
    %cst_83 = arith.constant dense<0.000000e+00> : vector<2x32xf32>
    %199 = vector.multi_reduction <add>, %198, %cst_83 [1] : vector<2x64x32xf32> to vector<2x32xf32>
    %200 = vector.shape_cast %199 : vector<2x32xf32> to vector<2x1x32xf32>
    %cst_84 = arith.constant 1.562500e-02 : f32
    %201 = vector.broadcast %cst_84 : f32 to vector<2x1x32xf32>
    %202 = arith.mulf %200, %201 : vector<2x1x32xf32>
    %cst_85 = arith.constant 9.99999974E-6 : f32
    %203 = vector.broadcast %cst_85 : f32 to vector<2x1x32xf32>
    %204 = arith.addf %202, %203 : vector<2x1x32xf32>
    %205 = math.rsqrt %204 : vector<2x1x32xf32>
    %206 = vector.broadcast %205 : vector<2x1x32xf32> to vector<2x64x32xf32>
    %207 = arith.mulf %197, %206 : vector<2x64x32xf32>
    %208 = vector.shape_cast %207 : vector<2x64x32xf32> to vector<128x32xf32>
    %cst_86 = arith.constant 5.000000e-01 : f32
    %209 = vector.broadcast %cst_86 : f32 to vector<128x32xf32>
    %210 = arith.mulf %209, %208 : vector<128x32xf32>
    %cst_87 = arith.constant 0.707106769 : f32
    %211 = vector.broadcast %cst_87 : f32 to vector<128x32xf32>
    %212 = arith.mulf %208, %211 : vector<128x32xf32>
    %213 = math.erf %212 : vector<128x32xf32>
    %cst_88 = arith.constant 1.000000e+00 : f32
    %214 = vector.broadcast %cst_88 : f32 to vector<128x32xf32>
    %215 = arith.addf %214, %213 : vector<128x32xf32>
    %216 = arith.mulf %210, %215 : vector<128x32xf32>
    %217 = arith.truncf %216 : vector<128x32xf32> to vector<128x32xbf16>
    %c0_89 = arith.constant 0 : index
    %c0_90 = arith.constant 0 : index
    %218 = vector.load %arg11[%c0_89, %c0_90] : memref<32x32xbf16, #tpu.memory_space<vmem>>, vector<32x32xbf16>
    %cst_91 = arith.constant dense<0.000000e+00> : vector<128x32xf32>
    %219 = tpu.matmul %217, %218, %cst_91 {dimension_numbers = #tpu.dot_dimension_numbers<[1], [0], [0], [1], [0, 0, 1, 1], [], []>} : vector<128x32xbf16>, vector<32x32xbf16>, vector<128x32xf32> -> vector<128x32xf32>
    %c10 = arith.constant 10 : index
    %c0_92 = arith.constant 0 : index
    %220 = vector.load %arg18[%c10, %c0_92] : memref<17x256xf32, #tpu.memory_space<vmem>>, vector<1x32xf32>
    %221 = vector.broadcast %220 : vector<1x32xf32> to vector<128x32xf32>
    %222 = arith.addf %219, %221 : vector<128x32xf32>
    %223 = arith.truncf %222 : vector<128x32xf32> to vector<128x32xbf16>
    %c0_93 = arith.constant 0 : index
    %c0_94 = arith.constant 0 : index
    %224 = vector.load %arg12[%c0_93, %c0_94] : memref<32x64xbf16, #tpu.memory_space<vmem>>, vector<32x64xbf16>
    %cst_95 = arith.constant dense<0.000000e+00> : vector<128x64xf32>
    %225 = tpu.matmul %223, %224, %cst_95 {dimension_numbers = #tpu.dot_dimension_numbers<[1], [0], [0], [1], [0, 0, 1, 1], [], []>} : vector<128x32xbf16>, vector<32x64xbf16>, vector<128x64xf32> -> vector<128x64xf32>
    %c11 = arith.constant 11 : index
    %c0_96 = arith.constant 0 : index
    %226 = vector.load %arg18[%c11, %c0_96] : memref<17x256xf32, #tpu.memory_space<vmem>>, vector<1x64xf32>
    %227 = vector.broadcast %226 : vector<1x64xf32> to vector<128x64xf32>
    %228 = arith.addf %225, %227 : vector<128x64xf32>
    %229 = arith.truncf %228 : vector<128x64xf32> to vector<128x64xbf16>
    %c0_97 = arith.constant 0 : index
    %c0_98 = arith.constant 0 : index
    %230 = vector.load %arg13[%c0_97, %c0_98] : memref<64x64xbf16, #tpu.memory_space<vmem>>, vector<64x64xbf16>
    %cst_99 = arith.constant dense<0.000000e+00> : vector<128x64xf32>
    %231 = tpu.matmul %229, %230, %cst_99 {dimension_numbers = #tpu.dot_dimension_numbers<[1], [0], [0], [1], [0, 0, 1, 1], [], []>} : vector<128x64xbf16>, vector<64x64xbf16>, vector<128x64xf32> -> vector<128x64xf32>
    %c12 = arith.constant 12 : index
    %c0_100 = arith.constant 0 : index
    %232 = vector.load %arg18[%c12, %c0_100] : memref<17x256xf32, #tpu.memory_space<vmem>>, vector<1x64xf32>
    %233 = vector.broadcast %232 : vector<1x64xf32> to vector<128x64xf32>
    %234 = arith.addf %231, %233 : vector<128x64xf32>
    %235 = vector.shape_cast %234 : vector<128x64xf32> to vector<2x64x64xf32>
    %cst_101 = arith.constant dense<0.000000e+00> : vector<2x64xf32>
    %236 = vector.multi_reduction <add>, %235, %cst_101 [1] : vector<2x64x64xf32> to vector<2x64xf32>
    %237 = vector.shape_cast %236 : vector<2x64xf32> to vector<2x1x64xf32>
    %cst_102 = arith.constant 1.562500e-02 : f32
    %238 = vector.broadcast %cst_102 : f32 to vector<2x1x64xf32>
    %239 = arith.mulf %237, %238 : vector<2x1x64xf32>
    %240 = vector.broadcast %239 : vector<2x1x64xf32> to vector<2x64x64xf32>
    %241 = arith.subf %235, %240 : vector<2x64x64xf32>
    %242 = arith.mulf %241, %241 : vector<2x64x64xf32>
    %cst_103 = arith.constant dense<0.000000e+00> : vector<2x64xf32>
    %243 = vector.multi_reduction <add>, %242, %cst_103 [1] : vector<2x64x64xf32> to vector<2x64xf32>
    %244 = vector.shape_cast %243 : vector<2x64xf32> to vector<2x1x64xf32>
    %cst_104 = arith.constant 1.562500e-02 : f32
    %245 = vector.broadcast %cst_104 : f32 to vector<2x1x64xf32>
    %246 = arith.mulf %244, %245 : vector<2x1x64xf32>
    %cst_105 = arith.constant 9.99999974E-6 : f32
    %247 = vector.broadcast %cst_105 : f32 to vector<2x1x64xf32>
    %248 = arith.addf %246, %247 : vector<2x1x64xf32>
    %249 = math.rsqrt %248 : vector<2x1x64xf32>
    %250 = vector.broadcast %249 : vector<2x1x64xf32> to vector<2x64x64xf32>
    %251 = arith.mulf %241, %250 : vector<2x64x64xf32>
    %252 = vector.shape_cast %251 : vector<2x64x64xf32> to vector<128x64xf32>
    %cst_106 = arith.constant 5.000000e-01 : f32
    %253 = vector.broadcast %cst_106 : f32 to vector<128x64xf32>
    %254 = arith.mulf %253, %252 : vector<128x64xf32>
    %cst_107 = arith.constant 0.707106769 : f32
    %255 = vector.broadcast %cst_107 : f32 to vector<128x64xf32>
    %256 = arith.mulf %252, %255 : vector<128x64xf32>
    %257 = math.erf %256 : vector<128x64xf32>
    %cst_108 = arith.constant 1.000000e+00 : f32
    %258 = vector.broadcast %cst_108 : f32 to vector<128x64xf32>
    %259 = arith.addf %258, %257 : vector<128x64xf32>
    %260 = arith.mulf %254, %259 : vector<128x64xf32>
    %261 = arith.truncf %260 : vector<128x64xf32> to vector<128x64xbf16>
    %c0_109 = arith.constant 0 : index
    %c0_110 = arith.constant 0 : index
    %262 = vector.load %arg14[%c0_109, %c0_110] : memref<64x128xbf16, #tpu.memory_space<vmem>>, vector<64x128xbf16>
    %cst_111 = arith.constant dense<0.000000e+00> : vector<128x128xf32>
    %263 = tpu.matmul %261, %262, %cst_111 {dimension_numbers = #tpu.dot_dimension_numbers<[1], [0], [0], [1], [0, 0, 1, 1], [], []>} : vector<128x64xbf16>, vector<64x128xbf16>, vector<128x128xf32> -> vector<128x128xf32>
    %c13 = arith.constant 13 : index
    %c0_112 = arith.constant 0 : index
    %264 = vector.load %arg18[%c13, %c0_112] : memref<17x256xf32, #tpu.memory_space<vmem>>, vector<1x128xf32>
    %265 = vector.broadcast %264 : vector<1x128xf32> to vector<128x128xf32>
    %266 = arith.addf %263, %265 : vector<128x128xf32>
    %267 = arith.truncf %266 : vector<128x128xf32> to vector<128x128xbf16>
    %c0_113 = arith.constant 0 : index
    %c0_114 = arith.constant 0 : index
    %268 = vector.load %arg15[%c0_113, %c0_114] : memref<128x128xbf16, #tpu.memory_space<vmem>>, vector<128x128xbf16>
    %cst_115 = arith.constant dense<0.000000e+00> : vector<128x128xf32>
    %269 = tpu.matmul %267, %268, %cst_115 {dimension_numbers = #tpu.dot_dimension_numbers<[1], [0], [0], [1], [0, 0, 1, 1], [], []>} : vector<128x128xbf16>, vector<128x128xbf16>, vector<128x128xf32> -> vector<128x128xf32>
    %c14 = arith.constant 14 : index
    %c0_116 = arith.constant 0 : index
    %270 = vector.load %arg18[%c14, %c0_116] : memref<17x256xf32, #tpu.memory_space<vmem>>, vector<1x128xf32>
    %271 = vector.broadcast %270 : vector<1x128xf32> to vector<128x128xf32>
    %272 = arith.addf %269, %271 : vector<128x128xf32>
    %273 = vector.shape_cast %272 : vector<128x128xf32> to vector<2x64x128xf32>
    %cst_117 = arith.constant dense<0.000000e+00> : vector<2x128xf32>
    %274 = vector.multi_reduction <add>, %273, %cst_117 [1] : vector<2x64x128xf32> to vector<2x128xf32>
    %275 = vector.shape_cast %274 : vector<2x128xf32> to vector<2x1x128xf32>
    %cst_118 = arith.constant 1.562500e-02 : f32
    %276 = vector.broadcast %cst_118 : f32 to vector<2x1x128xf32>
    %277 = arith.mulf %275, %276 : vector<2x1x128xf32>
    %278 = vector.broadcast %277 : vector<2x1x128xf32> to vector<2x64x128xf32>
    %279 = arith.subf %273, %278 : vector<2x64x128xf32>
    %280 = arith.mulf %279, %279 : vector<2x64x128xf32>
    %cst_119 = arith.constant dense<0.000000e+00> : vector<2x128xf32>
    %281 = vector.multi_reduction <add>, %280, %cst_119 [1] : vector<2x64x128xf32> to vector<2x128xf32>
    %282 = vector.shape_cast %281 : vector<2x128xf32> to vector<2x1x128xf32>
    %cst_120 = arith.constant 1.562500e-02 : f32
    %283 = vector.broadcast %cst_120 : f32 to vector<2x1x128xf32>
    %284 = arith.mulf %282, %283 : vector<2x1x128xf32>
    %cst_121 = arith.constant 9.99999974E-6 : f32
    %285 = vector.broadcast %cst_121 : f32 to vector<2x1x128xf32>
    %286 = arith.addf %284, %285 : vector<2x1x128xf32>
    %287 = math.rsqrt %286 : vector<2x1x128xf32>
    %288 = vector.broadcast %287 : vector<2x1x128xf32> to vector<2x64x128xf32>
    %289 = arith.mulf %279, %288 : vector<2x64x128xf32>
    %290 = vector.shape_cast %289 : vector<2x64x128xf32> to vector<128x128xf32>
    %cst_122 = arith.constant 5.000000e-01 : f32
    %291 = vector.broadcast %cst_122 : f32 to vector<128x128xf32>
    %292 = arith.mulf %291, %290 : vector<128x128xf32>
    %cst_123 = arith.constant 0.707106769 : f32
    %293 = vector.broadcast %cst_123 : f32 to vector<128x128xf32>
    %294 = arith.mulf %290, %293 : vector<128x128xf32>
    %295 = math.erf %294 : vector<128x128xf32>
    %cst_124 = arith.constant 1.000000e+00 : f32
    %296 = vector.broadcast %cst_124 : f32 to vector<128x128xf32>
    %297 = arith.addf %296, %295 : vector<128x128xf32>
    %298 = arith.mulf %292, %297 : vector<128x128xf32>
    %299 = arith.truncf %298 : vector<128x128xf32> to vector<128x128xbf16>
    %c0_125 = arith.constant 0 : index
    %c0_126 = arith.constant 0 : index
    %300 = vector.load %arg16[%c0_125, %c0_126] : memref<128x200xbf16, #tpu.memory_space<vmem>>, vector<128x200xbf16>
    %cst_127 = arith.constant dense<0.000000e+00> : vector<128x200xf32>
    %301 = tpu.matmul %299, %300, %cst_127 {dimension_numbers = #tpu.dot_dimension_numbers<[1], [0], [0], [1], [0, 0, 1, 1], [], []>} : vector<128x128xbf16>, vector<128x200xbf16>, vector<128x200xf32> -> vector<128x200xf32>
    %c15 = arith.constant 15 : index
    %c0_128 = arith.constant 0 : index
    %302 = vector.load %arg18[%c15, %c0_128] : memref<17x256xf32, #tpu.memory_space<vmem>>, vector<1x200xf32>
    %303 = vector.broadcast %302 : vector<1x200xf32> to vector<128x200xf32>
    %304 = arith.addf %301, %303 : vector<128x200xf32>
    %305 = arith.truncf %304 : vector<128x200xf32> to vector<128x200xbf16>
    %c0_129 = arith.constant 0 : index
    %c0_130 = arith.constant 0 : index
    %306 = vector.load %arg17[%c0_129, %c0_130] : memref<200x200xbf16, #tpu.memory_space<vmem>>, vector<200x200xbf16>
    %cst_131 = arith.constant dense<0.000000e+00> : vector<128x200xf32>
    %307 = tpu.matmul %305, %306, %cst_131 {dimension_numbers = #tpu.dot_dimension_numbers<[1], [0], [0], [1], [0, 0, 1, 1], [], []>} : vector<128x200xbf16>, vector<200x200xbf16>, vector<128x200xf32> -> vector<128x200xf32>
    %c16 = arith.constant 16 : index
    %c0_132 = arith.constant 0 : index
    %308 = vector.load %arg18[%c16, %c0_132] : memref<17x256xf32, #tpu.memory_space<vmem>>, vector<1x200xf32>
    %309 = vector.broadcast %308 : vector<1x200xf32> to vector<128x200xf32>
    %310 = arith.addf %307, %309 : vector<128x200xf32>
    %311 = vector.shape_cast %310 : vector<128x200xf32> to vector<2x64x200xf32>
    %cst_133 = arith.constant dense<0.000000e+00> : vector<2x200xf32>
    %312 = vector.multi_reduction <add>, %311, %cst_133 [1] : vector<2x64x200xf32> to vector<2x200xf32>
    %313 = vector.shape_cast %312 : vector<2x200xf32> to vector<2x1x200xf32>
    %cst_134 = arith.constant 1.562500e-02 : f32
    %314 = vector.broadcast %cst_134 : f32 to vector<2x1x200xf32>
    %315 = arith.mulf %313, %314 : vector<2x1x200xf32>
    %316 = vector.broadcast %315 : vector<2x1x200xf32> to vector<2x64x200xf32>
    %317 = arith.subf %311, %316 : vector<2x64x200xf32>
    %318 = arith.mulf %317, %317 : vector<2x64x200xf32>
    %cst_135 = arith.constant dense<0.000000e+00> : vector<2x200xf32>
    %319 = vector.multi_reduction <add>, %318, %cst_135 [1] : vector<2x64x200xf32> to vector<2x200xf32>
    %320 = vector.shape_cast %319 : vector<2x200xf32> to vector<2x1x200xf32>
    %cst_136 = arith.constant 1.562500e-02 : f32
    %321 = vector.broadcast %cst_136 : f32 to vector<2x1x200xf32>
    %322 = arith.mulf %320, %321 : vector<2x1x200xf32>
    %cst_137 = arith.constant 9.99999974E-6 : f32
    %323 = vector.broadcast %cst_137 : f32 to vector<2x1x200xf32>
    %324 = arith.addf %322, %323 : vector<2x1x200xf32>
    %325 = math.rsqrt %324 : vector<2x1x200xf32>
    %326 = vector.broadcast %325 : vector<2x1x200xf32> to vector<2x64x200xf32>
    %327 = arith.mulf %317, %326 : vector<2x64x200xf32>
    %328 = vector.shape_cast %327 : vector<2x64x200xf32> to vector<128x200xf32>
    %cst_138 = arith.constant 5.000000e-01 : f32
    %329 = vector.broadcast %cst_138 : f32 to vector<128x200xf32>
    %330 = arith.mulf %329, %328 : vector<128x200xf32>
    %cst_139 = arith.constant 0.707106769 : f32
    %331 = vector.broadcast %cst_139 : f32 to vector<128x200xf32>
    %332 = arith.mulf %328, %331 : vector<128x200xf32>
    %333 = math.erf %332 : vector<128x200xf32>
    %cst_140 = arith.constant 1.000000e+00 : f32
    %334 = vector.broadcast %cst_140 : f32 to vector<128x200xf32>
    %335 = arith.addf %334, %333 : vector<128x200xf32>
    %336 = arith.mulf %330, %335 : vector<128x200xf32>
    %cst_141 = arith.constant 0.000000e+00 : f32
    %337 = vector.broadcast %cst_141 : f32 to vector<128x24xf32>
    %338 = tpu.concatenate %146, %222, %260, %336, %337 in 1 : vector<128x64xf32>, vector<128x32xf32>, vector<128x64xf32>, vector<128x200xf32>, vector<128x24xf32> -> vector<128x384xf32>
    %c0_142 = arith.constant 0 : index
    %c0_143 = arith.constant 0 : index
    %339 = vector.load %arg19[%c0_142, %c0_143] : memref<128x384xf32, #tpu.memory_space<vmem>>, vector<128x384xf32>
    tpu.vector_store %arg19[%c0_142, %c0_143], %338 {strides = array<i32>} : memref<128x384xf32, #tpu.memory_space<vmem>>, vector<128x384xf32>,
    return
  }
}

</mosaic_0001>

<llo_original>
// kernel: auto_forward.1
$region0: #{auto_forward.1}
  #allocation0 [shape = 'u32[]', space=smem, size = 0x4, offset = 0x4, fixed_abs, tag = 'smem constant byte address 0x4 - core index']
  #allocation1 [shape = 'u32[144,128]{1,0:T(1,128)}', space=vmem, size = 0x12000, scoped, tag = 'internal scratch']
  %s0 = inlined_call_operand.vmem [shape: f32[128,200], index: 0, kind: input, shape index: {}]
  %s1 = inlined_call_operand.vmem [shape: bf16[200,200], index: 1, kind: input, shape index: {}]
  %s2 = inlined_call_operand.vmem [shape: bf16[200,256], index: 2, kind: input, shape index: {}]
  %s3 = inlined_call_operand.vmem [shape: bf16[256,64], index: 3, kind: input, shape index: {}]
  %s4 = inlined_call_operand.vmem [shape: bf16[64,128], index: 4, kind: input, shape index: {}]
  %s5 = inlined_call_operand.vmem [shape: bf16[128,128], index: 5, kind: input, shape index: {}]
  %s6 = inlined_call_operand.vmem [shape: bf16[128,32], index: 6, kind: input, shape index: {}]
  %s7 = inlined_call_operand.vmem [shape: bf16[32,64], index: 7, kind: input, shape index: {}]
  %s8 = inlined_call_operand.vmem [shape: bf16[64,64], index: 8, kind: input, shape index: {}]
  %s9 = inlined_call_operand.vmem [shape: bf16[64,16], index: 9, kind: input, shape index: {}]
  %s10 = inlined_call_operand.vmem [shape: bf16[16,32], index: 10, kind: input, shape index: {}]
  %s11 = inlined_call_operand.vmem [shape: bf16[32,32], index: 11, kind: input, shape index: {}]
  %s12 = inlined_call_operand.vmem [shape: bf16[32,64], index: 12, kind: input, shape index: {}]
  %s13 = inlined_call_operand.vmem [shape: bf16[64,64], index: 13, kind: input, shape index: {}]
  %s14 = inlined_call_operand.vmem [shape: bf16[64,128], index: 14, kind: input, shape index: {}]
  %s15 = inlined_call_operand.vmem [shape: bf16[128,128], index: 15, kind: input, shape index: {}]
  %s16 = inlined_call_operand.vmem [shape: bf16[128,200], index: 16, kind: input, shape index: {}]
  %s17 = inlined_call_operand.vmem [shape: bf16[200,200], index: 17, kind: input, shape index: {}]
  %s18 = inlined_call_operand.vmem [shape: f32[17,256], index: 18, kind: input, shape index: {}]
  %s19 = inlined_call_operand.vmem [shape: f32[128,384], index: 19, kind: output, shape index: {}]
  %s20 = sld [smem:[#allocation0]]
  $region86: #{auto_forward.1} parent=0
    _
  %s22 = ssub.s32 1, %s20
  %s23 = scalar_select 0, %s22, %s20
  // Predicated region
  $region2: #{auto_forward.1} parent=0 // pred_check
    _
  $region3: #{auto_forward.1} parent=0 // pred_check_branch
    %25 = sbr.rel (0) target = $region5
  $region4: #{auto_forward.1} parent=0 // pred_region
    _
  $region5: #{auto_forward.1} parent=0 // pred_fallthru
    _
  // Predicated region
  $region6: #{auto_forward.1} parent=0 // pred_check
    _
  $region7: #{auto_forward.1} parent=0 // pred_check_branch
    %27 = sbr.rel (0) target = $region9
  $region8: #{auto_forward.1} parent=0 // pred_region
    _
  $region9: #{auto_forward.1} parent=0 // pred_fallthru
    _
  // Predicated region
  $region10: #{auto_forward.1} parent=0 // pred_check
    _
  $region11: #{auto_forward.1} parent=0 // pred_check_branch
    %29 = sbr.rel (0) target = $region13
  $region12: #{auto_forward.1} parent=0 // pred_region
    _
  $region13: #{auto_forward.1} parent=0 // pred_fallthru
    _
  // Predicated region
  $region14: #{auto_forward.1} parent=0 // pred_check
    _
  $region15: #{auto_forward.1} parent=0 // pred_check_branch
    %31 = sbr.rel (0) target = $region17
  $region16: #{auto_forward.1} parent=0 // pred_region
    _
  $region17: #{auto_forward.1} parent=0 // pred_fallthru
    _
  // Predicated region
  $region18: #{auto_forward.1} parent=0 // pred_check
    _
  $region19: #{auto_forward.1} parent=0 // pred_check_branch
    %33 = sbr.rel (0) target = $region21
  $region20: #{auto_forward.1} parent=0 // pred_region
    _
  $region21: #{auto_forward.1} parent=0 // pred_fallthru
    _
  // Predicated region
  $region22: #{auto_forward.1} parent=0 // pred_check
    _
  $region23: #{auto_forward.1} parent=0 // pred_check_branch
    %35 = sbr.rel (0) target = $region25
  $region24: #{auto_forward.1} parent=0 // pred_region
    _
  $region25: #{auto_forward.1} parent=0 // pred_fallthru
    _
  // Predicated region
  $region26: #{auto_forward.1} parent=0 // pred_check
    _
  $region27: #{auto_forward.1} parent=0 // pred_check_branch
    %37 = sbr.rel (0) target = $region29
  $region28: #{auto_forward.1} parent=0 // pred_region
    _
  $region29: #{auto_forward.1} parent=0 // pred_fallthru
    _
  // Predicated region
  $region30: #{auto_forward.1} parent=0 // pred_check
    _
  $region31: #{auto_forward.1} parent=0 // pred_check_branch
    %39 = sbr.rel (0) target = $region33
  $region32: #{auto_forward.1} parent=0 // pred_region
    _
  $region33: #{auto_forward.1} parent=0 // pred_fallthru
    _
  // Predicated region
  $region34: #{auto_forward.1} parent=0 // pred_check
    _
  $region35: #{auto_forward.1} parent=0 // pred_check_branch
    %41 = sbr.rel (0) target = $region37
  $region36: #{auto_forward.1} parent=0 // pred_region
    _
  $region37: #{auto_forward.1} parent=0 // pred_fallthru
    _
  // Predicated region
  $region38: #{auto_forward.1} parent=0 // pred_check
    _
  $region39: #{auto_forward.1} parent=0 // pred_check_branch
    %43 = sbr.rel (0) target = $region41
  $region40: #{auto_forward.1} parent=0 // pred_region
    _
  $region41: #{auto_forward.1} parent=0 // pred_fallthru
    _
  // Predicated region
  $region42: #{auto_forward.1} parent=0 // pred_check
    _
  $region43: #{auto_forward.1} parent=0 // pred_check_branch
    %45 = sbr.rel (0) target = $region45
  $region44: #{auto_forward.1} parent=0 // pred_region
    _
  $region45: #{auto_forward.1} parent=0 // pred_fallthru
    _
  // Predicated region
  $region46: #{auto_forward.1} parent=0 // pred_check
    _
  $region47: #{auto_forward.1} parent=0 // pred_check_branch
    %47 = sbr.rel (0) target = $region49
  $region48: #{auto_forward.1} parent=0 // pred_region
    _
  $region49: #{auto_forward.1} parent=0 // pred_fallthru
    _
  // Predicated region
  $region50: #{auto_forward.1} parent=0 // pred_check
    _
  $region51: #{auto_forward.1} parent=0 // pred_check_branch
    %49 = sbr.rel (0) target = $region53
  $region52: #{auto_forward.1} parent=0 // pred_region
    _
  $region53: #{auto_forward.1} parent=0 // pred_fallthru
    _
  // Predicated region
  $region54: #{auto_forward.1} parent=0 // pred_check
    _
  $region55: #{auto_forward.1} parent=0 // pred_check_branch
    %51 = sbr.rel (0) target = $region57
  $region56: #{auto_forward.1} parent=0 // pred_region
    _
  $region57: #{auto_forward.1} parent=0 // pred_fallthru
    _
  // Predicated region
  $region58: #{auto_forward.1} parent=0 // pred_check
    _
  $region59: #{auto_forward.1} parent=0 // pred_check_branch
    %53 = sbr.rel (0) target = $region61
  $region60: #{auto_forward.1} parent=0 // pred_region
    _
  $region61: #{auto_forward.1} parent=0 // pred_fallthru
    _
  // Predicated region
  $region62: #{auto_forward.1} parent=0 // pred_check
    _
  $region63: #{auto_forward.1} parent=0 // pred_check_branch
    %55 = sbr.rel (0) target = $region65
  $region64: #{auto_forward.1} parent=0 // pred_region
    _
  $region65: #{auto_forward.1} parent=0 // pred_fallthru
    _
  // Predicated region
  $region66: #{auto_forward.1} parent=0 // pred_check
    _
  $region67: #{auto_forward.1} parent=0 // pred_check_branch
    %57 = sbr.rel (0) target = $region69
  $region68: #{auto_forward.1} parent=0 // pred_region
    _
  $region69: #{auto_forward.1} parent=0 // pred_fallthru
    _
  // Predicated region
  $region70: #{auto_forward.1} parent=0 // pred_check
    _
  $region71: #{auto_forward.1} parent=0 // pred_check_branch
    %59 = sbr.rel (0) target = $region73
  $region72: #{auto_forward.1} parent=0 // pred_region
    _
  $region73: #{auto_forward.1} parent=0 // pred_fallthru
    _
  // Predicated region
  $region74: #{auto_forward.1} parent=0 // pred_check
    _
  $region75: #{auto_forward.1} parent=0 // pred_check_branch
    %61 = sbr.rel (0) target = $region77
  $region76: #{auto_forward.1} parent=0 // pred_region
    _
  $region77: #{auto_forward.1} parent=0 // pred_fallthru
    _
  %v63 = vld [vmem:[%s0] sm:$0xff]
  %v64 = vld [vmem:[%s0 + $0x8] sm:$0xff]
  %v65 = vld [vmem:[%s0 + $0x10] sm:$0xff]
  %v66 = vld [vmem:[%s0 + $0x18] sm:$0xff]
  %v67 = vld [vmem:[%s0 + $0x20] sm:$0xff]
  %v68 = vld [vmem:[%s0 + $0x28] sm:$0xff]
  %v69 = vld [vmem:[%s0 + $0x30] sm:$0xff]
  %v70 = vld [vmem:[%s0 + $0x38] sm:$0xff]
  %v71 = vld [vmem:[%s0 + $0x40] sm:$0xff]
  %v72 = vld [vmem:[%s0 + $0x48] sm:$0xff]
  %v73 = vld [vmem:[%s0 + $0x50] sm:$0xff]
  %v74 = vld [vmem:[%s0 + $0x58] sm:$0xff]
  %v75 = vld [vmem:[%s0 + $0x60] sm:$0xff]
  %v76 = vld [vmem:[%s0 + $0x68] sm:$0xff]
  %v77 = vld [vmem:[%s0 + $0x70] sm:$0xff]
  %v78 = vld [vmem:[%s0 + $0x78] sm:$0xff]
  %v79 = vld [vmem:[%s0 + $0x80] sm:$0xff]
  %v80 = vld [vmem:[%s0 + $0x88] sm:$0xff]
  %v81 = vld [vmem:[%s0 + $0x90] sm:$0xff]
  %v82 = vld [vmem:[%s0 + $0x98] sm:$0xff]
  %v83 = vld [vmem:[%s0 + $0xa0] sm:$0xff]
  %v84 = vld [vmem:[%s0 + $0xa8] sm:$0xff]
  %v85 = vld [vmem:[%s0 + $0xb0] sm:$0xff]
  %v86 = vld [vmem:[%s0 + $0xb8] sm:$0xff]
  %v87 = vld [vmem:[%s0 + $0xc0] sm:$0xff]
  %v88 = vld [vmem:[%s0 + $0xc8] sm:$0xff]
  %v89 = vld [vmem:[%s0 + $0xd0] sm:$0xff]
  %v90 = vld [vmem:[%s0 + $0xd8] sm:$0xff]
  %v91 = vld [vmem:[%s0 + $0xe0] sm:$0xff]
  %v92 = vld [vmem:[%s0 + $0xe8] sm:$0xff]
  %v93 = vld [vmem:[%s0 + $0xf0] sm:$0xff]
  %v94 = vld [vmem:[%s0 + $0xf8] sm:$0xff]
  %v95 = vpack.c.bf16 %v65, %v63
  %v96 = vpack.c.bf16 %v66, %v64
  %v97 = vpack.c.bf16 %v69, %v67
  %v98 = vpack.c.bf16 %v70, %v68
  %v99 = vpack.c.bf16 %v73, %v71
  %v100 = vpack.c.bf16 %v74, %v72
  %v101 = vpack.c.bf16 %v77, %v75
  %v102 = vpack.c.bf16 %v78, %v76
  %v103 = vpack.c.bf16 %v81, %v79
  %v104 = vpack.c.bf16 %v82, %v80
  %v105 = vpack.c.bf16 %v85, %v83
  %v106 = vpack.c.bf16 %v86, %v84
  %v107 = vpack.c.bf16 %v89, %v87
  %v108 = vpack.c.bf16 %v90, %v88
  %v109 = vpack.c.bf16 %v93, %v91
  %v110 = vpack.c.bf16 %v94, %v92
  %v111 = vld [vmem:[%s1] sm:$0xff]
  %v112 = vld [vmem:[%s1 + $0x8] sm:$0xff]
  %v113 = vld [vmem:[%s1 + $0x10] sm:$0xff]
  %v114 = vld [vmem:[%s1 + $0x18] sm:$0xff]
  %v115 = vld [vmem:[%s1 + $0x20] sm:$0xff]
  %v116 = vld [vmem:[%s1 + $0x28] sm:$0xff]
  %v117 = vld [vmem:[%s1 + $0x30] sm:$0xff]
  %v118 = vld [vmem:[%s1 + $0x38] sm:$0xff]
  %v119 = vld [vmem:[%s1 + $0x40] sm:$0xff]
  %v120 = vld [vmem:[%s1 + $0x48] sm:$0xff]
  %v121 = vld [vmem:[%s1 + $0x50] sm:$0xff]
  %v122 = vld [vmem:[%s1 + $0x58] sm:$0xff]
  %v123 = vld [vmem:[%s1 + $0x60] sm:$0xff]
  %v124 = vld [vmem:[%s1 + $0x68] sm:$0xff]
  %v125 = vld [vmem:[%s1 + $0x70] sm:$0xff]
  %v126 = vld [vmem:[%s1 + $0x78] sm:$0xff]
  %v127 = vld [vmem:[%s1 + $0x80] sm:$0xff]
  %v128 = vld [vmem:[%s1 + $0x88] sm:$0xff]
  %v129 = vld [vmem:[%s1 + $0x90] sm:$0xff]
  %v130 = vld [vmem:[%s1 + $0x98] sm:$0xff]
  %v131 = vld [vmem:[%s1 + $0xa0] sm:$0xff]
  %v132 = vld [vmem:[%s1 + $0xa8] sm:$0xff]
  %v133 = vld [vmem:[%s1 + $0xb0] sm:$0xff]
  %v134 = vld [vmem:[%s1 + $0xb8] sm:$0xff]
  %v135 = vld [vmem:[%s1 + $0xc0] sm:$0xff]
  %v136 = vld [vmem:[%s18] ss:$8 sm:$0x3]
  %v138 = vlaneseq
  %v139 = vshrl.u32 %v138, 7
  %v140 = vsub.s32 0, %v139
  %v141 = vrot.slane %v136, %v140
  %v142 = vlaneseq
  %v143 = vshrl.u32 %v142, 7
  %v144 = vsub.s32 1, %v143
  %v145 = vrot.slane %v136, %v144
  %v173 = vunpack.c.l.b16 %v111
  %v174 = vunpack.c.h.b16 %v111
  %v175 = vunpack.c.l.b16 %v112
  %v176 = vunpack.c.h.b16 %v112
  %v177 = vunpack.c.l.b16 %v113
  %v178 = vunpack.c.h.b16 %v113
  %v179 = vunpack.c.l.b16 %v114
  %v180 = vunpack.c.h.b16 %v114
  %v181 = vunpack.c.l.b16 %v115
  %v182 = vunpack.c.h.b16 %v115
  %v183 = vunpack.c.l.b16 %v116
  %v184 = vunpack.c.h.b16 %v116
  %v185 = vunpack.c.l.b16 %v117
  %v186 = vunpack.c.h.b16 %v117
  %v187 = vunpack.c.l.b16 %v118
  %v188 = vunpack.c.h.b16 %v118
  %v189 = vunpack.c.l.b16 %v119
  %v190 = vunpack.c.h.b16 %v119
  %v191 = vunpack.c.l.b16 %v120
  %v192 = vunpack.c.h.b16 %v120
  %v193 = vunpack.c.l.b16 %v121
  %v194 = vunpack.c.h.b16 %v121
  %v195 = vunpack.c.l.b16 %v122
  %v196 = vunpack.c.h.b16 %v122
  %v197 = vunpack.c.l.b16 %v123
  %v198 = vunpack.c.h.b16 %v123
  %v199 = vunpack.c.l.b16 %v124
  %v200 = vunpack.c.h.b16 %v124
  %v201 = vunpack.c.l.b16 %v125
  %v202 = vunpack.c.h.b16 %v125
  %v203 = vunpack.c.l.b16 %v126
  %v204 = vunpack.c.h.b16 %v126
  %v205 = vunpack.c.l.b16 %v127
  %v206 = vunpack.c.h.b16 %v127
  %v207 = vunpack.c.l.b16 %v128
  %v208 = vunpack.c.h.b16 %v128
  %v209 = vunpack.c.l.b16 %v129
  %v210 = vunpack.c.h.b16 %v129
  %v211 = vunpack.c.l.b16 %v130
  %v212 = vunpack.c.h.b16 %v130
  %v213 = vunpack.c.l.b16 %v131
  %v214 = vunpack.c.h.b16 %v131
  %v215 = vunpack.c.l.b16 %v132
  %v216 = vunpack.c.h.b16 %v132
  %v217 = vunpack.c.l.b16 %v133
  %v218 = vunpack.c.h.b16 %v133
  %v219 = vunpack.c.l.b16 %v134
  %v220 = vunpack.c.h.b16 %v134
  %v221 = vunpack.c.l.b16 %v135
  %v222 = vunpack.c.h.b16 %v135
  %v223 = vpack.c.b16 %v175, %v173
  %v224 = vpack.c.b16 %v176, %v174
  %v225 = vpack.c.b16 %v179, %v177
  %v226 = vpack.c.b16 %v180, %v178
  %v227 = vpack.c.b16 %v183, %v181
  %v228 = vpack.c.b16 %v184, %v182
  %v229 = vpack.c.b16 %v187, %v185
  %v230 = vpack.c.b16 %v188, %v186
  %v231 = vpack.c.b16 %v191, %v189
  %v232 = vpack.c.b16 %v192, %v190
  %v233 = vpack.c.b16 %v195, %v193
  %v234 = vpack.c.b16 %v196, %v194
  %v235 = vpack.c.b16 %v199, %v197
  %v236 = vpack.c.b16 %v200, %v198
  %v237 = vpack.c.b16 %v203, %v201
  %v238 = vpack.c.b16 %v204, %v202
  %v239 = vpack.c.b16 %v207, %v205
  %v240 = vpack.c.b16 %v208, %v206
  %v241 = vpack.c.b16 %v211, %v209
  %v242 = vpack.c.b16 %v212, %v210
  %v243 = vpack.c.b16 %v215, %v213
  %v244 = vpack.c.b16 %v216, %v214
  %v245 = vpack.c.b16 %v219, %v217
  %v246 = vpack.c.b16 %v220, %v218
  %v247 = vpack.c.b16 %v221, %v221
  %v248 = vpack.c.b16 %v222, %v222
  %vm273 = vcmask 588800
  %v275 = vsel %vm273, %v96, 0
  %v278 = vsel %vm273, %v98, 0
  %v281 = vsel %vm273, %v100, 0
  %v284 = vsel %vm273, %v102, 0
  %v287 = vsel %vm273, %v104, 0
  %v290 = vsel %vm273, %v106, 0
  %v293 = vsel %vm273, %v108, 0
  %v296 = vsel %vm273, %v110, 0
  %vm298 = vcmask 1043456
  %v300 = vsel %vm298, %v247, 0
  %v303 = vsel %vm298, %v248, 0
  %305 = vmatprep.subr.bf16.mxu0 %v224
  %306 = vmatpush1.bf16.msra.mxu0 %v223
  %307 = vmatprep.subr.bf16.mxu0 %v226
  %308 = vmatpush1.bf16.msra.mxu0 %v225
  %309 = vmatprep.subr.bf16.mxu0 %v228
  %310 = vmatpush1.bf16.msra.mxu0 %v227
  %311 = vmatprep.subr.bf16.mxu0 %v230
  %312 = vmatpush1.bf16.msra.mxu0 %v229
  %313 = vmatprep.subr.bf16.mxu0 %v232
  %314 = vmatpush1.bf16.msra.mxu0 %v231
  %315 = vmatprep.subr.bf16.mxu0 %v234
  %316 = vmatpush1.bf16.msra.mxu0 %v233
  %317 = vmatprep.subr.bf16.mxu0 %v236
  %318 = vmatpush1.bf16.msra.mxu0 %v235
  %319 = vmatprep.subr.bf16.mxu0 %v238
  %320 = vmatpush1.bf16.msra.mxu0 %v237
  %321 = vmatprep.subr.bf16.mxu0 %v240
  %322 = vmatpush1.bf16.msra.mxu0 %v239
  %323 = vmatprep.subr.bf16.mxu0 %v242
  %324 = vmatpush1.bf16.msra.mxu0 %v241
  %325 = vmatprep.subr.bf16.mxu0 %v244
  %326 = vmatpush1.bf16.msra.mxu0 %v243
  %327 = vmatprep.subr.bf16.mxu0 %v246
  %328 = vmatpush1.bf16.msra.mxu0 %v245
  %329 = vmatprep.subr.bf16.mxu0 %v303
  %330 = vmatpush1.bf16.msra.mxu0 %v300
  %331 = vmatprep.subr.bf16.mxu0 0
  %332 = vmatpush1.bf16.msra.mxu0 0
  %333 = vmatprep.subr.bf16.mxu0 0
  %334 = vmatpush1.bf16.msra.mxu0 0
  %335 = vmatprep.subr.bf16.mxu0 0
  %336 = vmatpush1.bf16.msra.mxu0 0
  %337 = vmatprep.mubr.bf16.mxu0 %v275
  %338 = vmatmul.mubr.bf16.gmra.mrb[0].mxu0 %v95
  %v339 = vpop.f32.mrb[0].mxu0
  %v340 = vadd.f32 %v141, %v339
  %v341 = vpop.f32.mrb[0].mxu0
  %v342 = vadd.f32 %v145, %v341
  %v343 = vpop.f32.mrb[0].mxu0
  %v344 = vadd.f32 %v141, %v343
  %v345 = vpop.f32.mrb[0].mxu0
  %v346 = vadd.f32 %v145, %v345
  %347 = vmatprep.mubr.bf16.mxu0 %v278
  %348 = vmatmul.mubr.bf16.gmra.mrb[0].mxu0 %v97
  %v349 = vpop.f32.mrb[0].mxu0
  %v350 = vadd.f32 %v141, %v349
  %v351 = vpop.f32.mrb[0].mxu0
  %v352 = vadd.f32 %v145, %v351
  %v353 = vpop.f32.mrb[0].mxu0
  %v354 = vadd.f32 %v141, %v353
  %v355 = vpop.f32.mrb[0].mxu0
  %v356 = vadd.f32 %v145, %v355
  %357 = vmatprep.mubr.bf16.mxu0 %v281
  %358 = vmatmul.mubr.bf16.gmra.mrb[0].mxu0 %v99
  %v359 = vpop.f32.mrb[0].mxu0
  %v360 = vadd.f32 %v141, %v359
  %v361 = vpop.f32.mrb[0].mxu0
  %v362 = vadd.f32 %v145, %v361
  %v363 = vpop.f32.mrb[0].mxu0
  %v364 = vadd.f32 %v141, %v363
  %v365 = vpop.f32.mrb[0].mxu0
  %v366 = vadd.f32 %v145, %v365
  %367 = vmatprep.mubr.bf16.mxu0 %v284
  %368 = vmatmul.mubr.bf16.gmra.mrb[0].mxu0 %v101
  %v369 = vpop.f32.mrb[0].mxu0
  %v370 = vadd.f32 %v141, %v369
  %v371 = vpop.f32.mrb[0].mxu0
  %v372 = vadd.f32 %v145, %v371
  %v373 = vpop.f32.mrb[0].mxu0
  %v374 = vadd.f32 %v141, %v373
  %v375 = vpop.f32.mrb[0].mxu0
  %v376 = vadd.f32 %v145, %v375
  %377 = vmatprep.mubr.bf16.mxu0 %v287
  %378 = vmatmul.mubr.bf16.gmra.mrb[0].mxu0 %v103
  %v379 = vpop.f32.mrb[0].mxu0
  %v380 = vadd.f32 %v141, %v379
  %v381 = vpop.f32.mrb[0].mxu0
  %v382 = vadd.f32 %v145, %v381
  %v383 = vpop.f32.mrb[0].mxu0
  %v384 = vadd.f32 %v141, %v383
  %v385 = vpop.f32.mrb[0].mxu0
  %v386 = vadd.f32 %v145, %v385
  %387 = vmatprep.mubr.bf16.mxu0 %v290
  %388 = vmatmul.mubr.bf16.gmra.mrb[0].mxu0 %v105
  %v389 = vpop.f32.mrb[0].mxu0
  %v390 = vadd.f32 %v141, %v389
  %v391 = vpop.f32.mrb[0].mxu0
  %v392 = vadd.f32 %v145, %v391
  %v393 = vpop.f32.mrb[0].mxu0
  %v394 = vadd.f32 %v141, %v393
  %v395 = vpop.f32.mrb[0].mxu0
  %v396 = vadd.f32 %v145, %v395
  %397 = vmatprep.mubr.bf16.mxu0 %v293
  %398 = vmatmul.mubr.bf16.gmra.mrb[0].mxu0 %v107
  %v399 = vpop.f32.mrb[0].mxu0
  %v400 = vadd.f32 %v141, %v399
  %v401 = vpop.f32.mrb[0].mxu0
  %v402 = vadd.f32 %v145, %v401
  %v403 = vpop.f32.mrb[0].mxu0
  %v404 = vadd.f32 %v141, %v403
  %v405 = vpop.f32.mrb[0].mxu0
  %v406 = vadd.f32 %v145, %v405
  %407 = vmatprep.mubr.bf16.mxu0 %v296
  %408 = vmatmul.mubr.bf16.gmra.mrb[0].mxu0 %v109
  %v409 = vpop.f32.mrb[0].mxu0
  %v410 = vadd.f32 %v141, %v409
  %v411 = vpop.f32.mrb[0].mxu0
  %v412 = vadd.f32 %v145, %v411
  %v413 = vpop.f32.mrb[0].mxu0
  %v414 = vadd.f32 %v141, %v413
  %v415 = vpop.f32.mrb[0].mxu0
  %v416 = vadd.f32 %v145, %v415
  %417 = vdwg.mxu0
  %v418 = vpack.c.bf16 %v344, %v340
  %v419 = vpack.c.bf16 %v346, %v342
  %v420 = vpack.c.bf16 %v354, %v350
  %v421 = vpack.c.bf16 %v356, %v352
  %v422 = vpack.c.bf16 %v364, %v360
  %v423 = vpack.c.bf16 %v366, %v362
  %v424 = vpack.c.bf16 %v374, %v370
  %v425 = vpack.c.bf16 %v376, %v372
  %v426 = vpack.c.bf16 %v384, %v380
  %v427 = vpack.c.bf16 %v386, %v382
  %v428 = vpack.c.bf16 %v394, %v390
  %v429 = vpack.c.bf16 %v396, %v392
  %v430 = vpack.c.bf16 %v404, %v400
  %v431 = vpack.c.bf16 %v406, %v402
  %v432 = vpack.c.bf16 %v414, %v410
  %v433 = vpack.c.bf16 %v416, %v412
  %v434 = vld [vmem:[%s2] sm:$0xff]
  %v435 = vld [vmem:[%s2 + $0x8] sm:$0xff]
  %v436 = vld [vmem:[%s2 + $0x10] sm:$0xff]
  %v437 = vld [vmem:[%s2 + $0x18] sm:$0xff]
  %v438 = vld [vmem:[%s2 + $0x20] sm:$0xff]
  %v439 = vld [vmem:[%s2 + $0x28] sm:$0xff]
  %v440 = vld [vmem:[%s2 + $0x30] sm:$0xff]
  %v441 = vld [vmem:[%s2 + $0x38] sm:$0xff]
  %v442 = vld [vmem:[%s2 + $0x40] sm:$0xff]
  %v443 = vld [vmem:[%s2 + $0x48] sm:$0xff]
  %v444 = vld [vmem:[%s2 + $0x50] sm:$0xff]
  %v445 = vld [vmem:[%s2 + $0x58] sm:$0xff]
  %v446 = vld [vmem:[%s2 + $0x60] sm:$0xff]
  %v447 = vld [vmem:[%s2 + $0x68] sm:$0xff]
  %v448 = vld [vmem:[%s2 + $0x70] sm:$0xff]
  %v449 = vld [vmem:[%s2 + $0x78] sm:$0xff]
  %v450 = vld [vmem:[%s2 + $0x80] sm:$0xff]
  %v451 = vld [vmem:[%s2 + $0x88] sm:$0xff]
  %v452 = vld [vmem:[%s2 + $0x90] sm:$0xff]
  %v453 = vld [vmem:[%s2 + $0x98] sm:$0xff]
  %v454 = vld [vmem:[%s2 + $0xa0] sm:$0xff]
  %v455 = vld [vmem:[%s2 + $0xa8] sm:$0xff]
  %v456 = vld [vmem:[%s2 + $0xb0] sm:$0xff]
  %v457 = vld [vmem:[%s2 + $0xb8] sm:$0xff]
  %v458 = vld [vmem:[%s2 + $0xc0] sm:$0xff]
  %s459 = scalar_lea.vmem %s18, 1
  %v460 = vld [vmem:[%s459] ss:$8 sm:$0x3]
  %v462 = vlaneseq
  %v463 = vshrl.u32 %v462, 7
  %v464 = vsub.s32 0, %v463
  %v465 = vrot.slane %v460, %v464
  %v466 = vlaneseq
  %v467 = vshrl.u32 %v466, 7
  %v468 = vsub.s32 1, %v467
  %v469 = vrot.slane %v460, %v468
  %v497 = vunpack.c.l.b16 %v434
  %v498 = vunpack.c.h.b16 %v434
  %v499 = vunpack.c.l.b16 %v435
  %v500 = vunpack.c.h.b16 %v435
  %v501 = vunpack.c.l.b16 %v436
  %v502 = vunpack.c.h.b16 %v436
  %v503 = vunpack.c.l.b16 %v437
  %v504 = vunpack.c.h.b16 %v437
  %v505 = vunpack.c.l.b16 %v438
  %v506 = vunpack.c.h.b16 %v438
  %v507 = vunpack.c.l.b16 %v439
  %v508 = vunpack.c.h.b16 %v439
  %v509 = vunpack.c.l.b16 %v440
  %v510 = vunpack.c.h.b16 %v440
  %v511 = vunpack.c.l.b16 %v441
  %v512 = vunpack.c.h.b16 %v441
  %v513 = vunpack.c.l.b16 %v442
  %v514 = vunpack.c.h.b16 %v442
  %v515 = vunpack.c.l.b16 %v443
  %v516 = vunpack.c.h.b16 %v443
  %v517 = vunpack.c.l.b16 %v444
  %v518 = vunpack.c.h.b16 %v444
  %v519 = vunpack.c.l.b16 %v445
  %v520 = vunpack.c.h.b16 %v445
  %v521 = vunpack.c.l.b16 %v446
  %v522 = vunpack.c.h.b16 %v446
  %v523 = vunpack.c.l.b16 %v447
  %v524 = vunpack.c.h.b16 %v447
  %v525 = vunpack.c.l.b16 %v448
  %v526 = vunpack.c.h.b16 %v448
  %v527 = vunpack.c.l.b16 %v449
  %v528 = vunpack.c.h.b16 %v449
  %v529 = vunpack.c.l.b16 %v450
  %v530 = vunpack.c.h.b16 %v450
  %v531 = vunpack.c.l.b16 %v451
  %v532 = vunpack.c.h.b16 %v451
  %v533 = vunpack.c.l.b16 %v452
  %v534 = vunpack.c.h.b16 %v452
  %v535 = vunpack.c.l.b16 %v453
  %v536 = vunpack.c.h.b16 %v453
  %v537 = vunpack.c.l.b16 %v454
  %v538 = vunpack.c.h.b16 %v454
  %v539 = vunpack.c.l.b16 %v455
  %v540 = vunpack.c.h.b16 %v455
  %v541 = vunpack.c.l.b16 %v456
  %v542 = vunpack.c.h.b16 %v456
  %v543 = vunpack.c.l.b16 %v457
  %v544 = vunpack.c.h.b16 %v457
  %v545 = vunpack.c.l.b16 %v458
  %v546 = vunpack.c.h.b16 %v458
  %v547 = vpack.c.b16 %v499, %v497
  %v548 = vpack.c.b16 %v500, %v498
  %v549 = vpack.c.b16 %v503, %v501
  %v550 = vpack.c.b16 %v504, %v502
  %v551 = vpack.c.b16 %v507, %v505
  %v552 = vpack.c.b16 %v508, %v506
  %v553 = vpack.c.b16 %v511, %v509
  %v554 = vpack.c.b16 %v512, %v510
  %v555 = vpack.c.b16 %v515, %v513
  %v556 = vpack.c.b16 %v516, %v514
  %v557 = vpack.c.b16 %v519, %v517
  %v558 = vpack.c.b16 %v520, %v518
  %v559 = vpack.c.b16 %v523, %v521
  %v560 = vpack.c.b16 %v524, %v522
  %v561 = vpack.c.b16 %v527, %v525
  %v562 = vpack.c.b16 %v528, %v526
  %v563 = vpack.c.b16 %v531, %v529
  %v564 = vpack.c.b16 %v532, %v530
  %v565 = vpack.c.b16 %v535, %v533
  %v566 = vpack.c.b16 %v536, %v534
  %v567 = vpack.c.b16 %v539, %v537
  %v568 = vpack.c.b16 %v540, %v538
  %v569 = vpack.c.b16 %v543, %v541
  %v570 = vpack.c.b16 %v544, %v542
  %v571 = vpack.c.b16 %v545, %v545
  %v572 = vpack.c.b16 %v546, %v546
  %v598 = vsel %vm273, %v419, 0
  %v601 = vsel %vm273, %v421, 0
  %v604 = vsel %vm273, %v423, 0
  %v607 = vsel %vm273, %v425, 0
  %v610 = vsel %vm273, %v427, 0
  %v613 = vsel %vm273, %v429, 0
  %v616 = vsel %vm273, %v431, 0
  %v619 = vsel %vm273, %v433, 0
  %v622 = vsel %vm298, %v571, 0
  %v625 = vsel %vm298, %v572, 0
  %627 = vmatprep.subr.bf16.mxu0 %v548
  %628 = vmatpush1.bf16.msra.mxu0 %v547
  %629 = vmatprep.subr.bf16.mxu0 %v550
  %630 = vmatpush1.bf16.msra.mxu0 %v549
  %631 = vmatprep.subr.bf16.mxu0 %v552
  %632 = vmatpush1.bf16.msra.mxu0 %v551
  %633 = vmatprep.subr.bf16.mxu0 %v554
  %634 = vmatpush1.bf16.msra.mxu0 %v553
  %635 = vmatprep.subr.bf16.mxu0 %v556
  %636 = vmatpush1.bf16.msra.mxu0 %v555
  %637 = vmatprep.subr.bf16.mxu0 %v558
  %638 = vmatpush1.bf16.msra.mxu0 %v557
  %639 = vmatprep.subr.bf16.mxu0 %v560
  %640 = vmatpush1.bf16.msra.mxu0 %v559
  %641 = vmatprep.subr.bf16.mxu0 %v562
  %642 = vmatpush1.bf16.msra.mxu0 %v561
  %643 = vmatprep.subr.bf16.mxu0 %v564
  %644 = vmatpush1.bf16.msra.mxu0 %v563
  %645 = vmatprep.subr.bf16.mxu0 %v566
  %646 = vmatpush1.bf16.msra.mxu0 %v565
  %647 = vmatprep.subr.bf16.mxu0 %v568
  %648 = vmatpush1.bf16.msra.mxu0 %v567
  %649 = vmatprep.subr.bf16.mxu0 %v570
  %650 = vmatpush1.bf16.msra.mxu0 %v569
  %651 = vmatprep.subr.bf16.mxu0 %v625
  %652 = vmatpush1.bf16.msra.mxu0 %v622
  %653 = vmatprep.subr.bf16.mxu0 0
  %654 = vmatpush1.bf16.msra.mxu0 0
  %655 = vmatprep.subr.bf16.mxu0 0
  %656 = vmatpush1.bf16.msra.mxu0 0
  %657 = vmatprep.subr.bf16.mxu0 0
  %658 = vmatpush1.bf16.msra.mxu0 0
  %659 = vmatprep.mubr.bf16.mxu0 %v598
  %660 = vmatmul.mubr.bf16.gmra.mrb[0].mxu0 %v418
  %v661 = vpop.f32.mrb[0].mxu0
  %v662 = vadd.f32 %v465, %v661
  %v663 = vpop.f32.mrb[0].mxu0
  %v664 = vadd.f32 %v469, %v663
  %v665 = vpop.f32.mrb[0].mxu0
  %v666 = vadd.f32 %v465, %v665
  %v667 = vpop.f32.mrb[0].mxu0
  %v668 = vadd.f32 %v469, %v667
  %669 = vmatprep.mubr.bf16.mxu0 %v601
  %670 = vmatmul.mubr.bf16.gmra.mrb[0].mxu0 %v420
  %v671 = vpop.f32.mrb[0].mxu0
  %v672 = vadd.f32 %v465, %v671
  %v673 = vpop.f32.mrb[0].mxu0
  %v674 = vadd.f32 %v469, %v673
  %v675 = vpop.f32.mrb[0].mxu0
  %v676 = vadd.f32 %v465, %v675
  %v677 = vpop.f32.mrb[0].mxu0
  %v678 = vadd.f32 %v469, %v677
  %679 = vmatprep.mubr.bf16.mxu0 %v604
  %680 = vmatmul.mubr.bf16.gmra.mrb[0].mxu0 %v422
  %v681 = vpop.f32.mrb[0].mxu0
  %v682 = vadd.f32 %v465, %v681
  %v683 = vpop.f32.mrb[0].mxu0
  %v684 = vadd.f32 %v469, %v683
  %v685 = vpop.f32.mrb[0].mxu0
  %v686 = vadd.f32 %v465, %v685
  %v687 = vpop.f32.mrb[0].mxu0
  %v688 = vadd.f32 %v469, %v687
  %689 = vmatprep.mubr.bf16.mxu0 %v607
  %690 = vmatmul.mubr.bf16.gmra.mrb[0].mxu0 %v424
  %v691 = vpop.f32.mrb[0].mxu0
  %v692 = vadd.f32 %v465, %v691
  %v693 = vpop.f32.mrb[0].mxu0
  %v694 = vadd.f32 %v469, %v693
  %v695 = vpop.f32.mrb[0].mxu0
  %v696 = vadd.f32 %v465, %v695
  %v697 = vpop.f32.mrb[0].mxu0
  %v698 = vadd.f32 %v469, %v697
  %699 = vmatprep.mubr.bf16.mxu0 %v610
  %700 = vmatmul.mubr.bf16.gmra.mrb[0].mxu0 %v426
  %v701 = vpop.f32.mrb[0].mxu0
  %v702 = vadd.f32 %v465, %v701
  %v703 = vpop.f32.mrb[0].mxu0
  %v704 = vadd.f32 %v469, %v703
  %v705 = vpop.f32.mrb[0].mxu0
  %v706 = vadd.f32 %v465, %v705
  %v707 = vpop.f32.mrb[0].mxu0
  %v708 = vadd.f32 %v469, %v707
  %709 = vmatprep.mubr.bf16.mxu0 %v613
  %710 = vmatmul.mubr.bf16.gmra.mrb[0].mxu0 %v428
  %v711 = vpop.f32.mrb[0].mxu0
  %v712 = vadd.f32 %v465, %v711
  %v713 = vpop.f32.mrb[0].mxu0
  %v714 = vadd.f32 %v469, %v713
  %v715 = vpop.f32.mrb[0].mxu0
  %v716 = vadd.f32 %v465, %v715
  %v717 = vpop.f32.mrb[0].mxu0
  %v718 = vadd.f32 %v469, %v717
  %719 = vmatprep.mubr.bf16.mxu0 %v616
  %720 = vmatmul.mubr.bf16.gmra.mrb[0].mxu0 %v430
  %v721 = vpop.f32.mrb[0].mxu0
  %v722 = vadd.f32 %v465, %v721
  %v723 = vpop.f32.mrb[0].mxu0
  %v724 = vadd.f32 %v469, %v723
  %v725 = vpop.f32.mrb[0].mxu0
  %v726 = vadd.f32 %v465, %v725
  %v727 = vpop.f32.mrb[0].mxu0
  %v728 = vadd.f32 %v469, %v727
  %729 = vmatprep.mubr.bf16.mxu0 %v619
  %730 = vmatmul.mubr.bf16.gmra.mrb[0].mxu0 %v432
  %v731 = vpop.f32.mrb[0].mxu0
  %v732 = vadd.f32 %v465, %v731
  %v733 = vpop.f32.mrb[0].mxu0
  %v734 = vadd.f32 %v469, %v733
  %v735 = vpop.f32.mrb[0].mxu0
  %v736 = vadd.f32 %v465, %v735
  %v737 = vpop.f32.mrb[0].mxu0
  %v738 = vadd.f32 %v469, %v737
  %739 = vdwg.mxu0
  %v740 = vadd.f32 %v662, %v666
  %v741 = vadd.f32 %v740, %v672
  %v742 = vadd.f32 %v741, %v676
  %v743 = vadd.f32 %v742, %v682
  %v744 = vadd.f32 %v743, %v686
  %v745 = vadd.f32 %v744, %v692
  %v746 = vadd.f32 %v745, %v696
  %v747 = vrot.slane %v746, 4
  %v748 = vadd.f32 %v746, %v747
  %v749 = vrot.slane %v748, 2
  %v750 = vadd.f32 %v748, %v749
  %v751 = vrot.slane %v750, 1
  %v752 = vadd.f32 %v750, %v751
  %v753 = vadd.f32 %v664, %v668
  %v754 = vadd.f32 %v753, %v674
  %v755 = vadd.f32 %v754, %v678
  %v756 = vadd.f32 %v755, %v684
  %v757 = vadd.f32 %v756, %v688
  %v758 = vadd.f32 %v757, %v694
  %v759 = vadd.f32 %v758, %v698
  %v760 = vrot.slane %v759, 4
  %v761 = vadd.f32 %v759, %v760
  %v762 = vrot.slane %v761, 2
  %v763 = vadd.f32 %v761, %v762
  %v764 = vrot.slane %v763, 1
  %v765 = vadd.f32 %v763, %v764
  %v766 = vadd.f32 %v702, %v706
  %v767 = vadd.f32 %v766, %v712
  %v768 = vadd.f32 %v767, %v716
  %v769 = vadd.f32 %v768, %v722
  %v770 = vadd.f32 %v769, %v726
  %v771 = vadd.f32 %v770, %v732
  %v772 = vadd.f32 %v771, %v736
  %v773 = vrot.slane %v772, 4
  %v774 = vadd.f32 %v772, %v773
  %v775 = vrot.slane %v774, 2
  %v776 = vadd.f32 %v774, %v775
  %v777 = vrot.slane %v776, 1
  %v778 = vadd.f32 %v776, %v777
  %v779 = vadd.f32 %v704, %v708
  %v780 = vadd.f32 %v779, %v714
  %v781 = vadd.f32 %v780, %v718
  %v782 = vadd.f32 %v781, %v724
  %v783 = vadd.f32 %v782, %v728
  %v784 = vadd.f32 %v783, %v734
  %v785 = vadd.f32 %v784, %v738
  %v786 = vrot.slane %v785, 4
  %v787 = vadd.f32 %v785, %v786
  %v788 = vrot.slane %v787, 2
  %v789 = vadd.f32 %v787, %v788
  %v790 = vrot.slane %v789, 1
  %v791 = vadd.f32 %v789, %v790
  %v792 = vmul.f32 %v752, 0.015625
  %v793 = vmul.f32 %v765, 0.015625
  %v794 = vmul.f32 %v778, 0.015625
  %v795 = vmul.f32 %v791, 0.015625
  %v796 = vsub.f32 %v662, %v792
  %v797 = vsub.f32 %v664, %v793
  %v798 = vsub.f32 %v666, %v792
  %v799 = vsub.f32 %v668, %v793
  %v800 = vsub.f32 %v672, %v792
  %v801 = vsub.f32 %v674, %v793
  %v802 = vsub.f32 %v676, %v792
  %v803 = vsub.f32 %v678, %v793
  %v804 = vsub.f32 %v682, %v792
  %v805 = vsub.f32 %v684, %v793
  %v806 = vsub.f32 %v686, %v792
  %v807 = vsub.f32 %v688, %v793
  %v808 = vsub.f32 %v692, %v792
  %v809 = vsub.f32 %v694, %v793
  %v810 = vsub.f32 %v696, %v792
  %v811 = vsub.f32 %v698, %v793
  %v812 = vsub.f32 %v702, %v794
  %v813 = vsub.f32 %v704, %v795
  %v814 = vsub.f32 %v706, %v794
  %v815 = vsub.f32 %v708, %v795
  %v816 = vsub.f32 %v712, %v794
  %v817 = vsub.f32 %v714, %v795
  %v818 = vsub.f32 %v716, %v794
  %v819 = vsub.f32 %v718, %v795
  %v820 = vsub.f32 %v722, %v794
  %v821 = vsub.f32 %v724, %v795
  %v822 = vsub.f32 %v726, %v794
  %v823 = vsub.f32 %v728, %v795
  %v824 = vsub.f32 %v732, %v794
  %v825 = vsub.f32 %v734, %v795
  %v826 = vsub.f32 %v736, %v794
  %v827 = vsub.f32 %v738, %v795
  %v828 = vmul.f32 %v796, %v796
  %v829 = vmul.f32 %v797, %v797
  %v830 = vmul.f32 %v798, %v798
  %v831 = vmul.f32 %v799, %v799
  %v832 = vmul.f32 %v800, %v800
  %v833 = vmul.f32 %v801, %v801
  %v834 = vmul.f32 %v802, %v802
  %v835 = vmul.f32 %v803, %v803
  %v836 = vmul.f32 %v804, %v804
  %v837 = vmul.f32 %v805, %v805
  %v838 = vmul.f32 %v806, %v806
  %v839 = vmul.f32 %v807, %v807
  %v840 = vmul.f32 %v808, %v808
  %v841 = vmul.f32 %v809, %v809
  %v842 = vmul.f32 %v810, %v810
  %v843 = vmul.f32 %v811, %v811
  %v844 = vmul.f32 %v812, %v812
  %v845 = vmul.f32 %v813, %v813
  %v846 = vmul.f32 %v814, %v814
  %v847 = vmul.f32 %v815, %v815
  %v848 = vmul.f32 %v816, %v816
  %v849 = vmul.f32 %v817, %v817
  %v850 = vmul.f32 %v818, %v818
  %v851 = vmul.f32 %v819, %v819
  %v852 = vmul.f32 %v820, %v820
  %v853 = vmul.f32 %v821, %v821
  %v854 = vmul.f32 %v822, %v822
  %v855 = vmul.f32 %v823, %v823
  %v856 = vmul.f32 %v824, %v824
  %v857 = vmul.f32 %v825, %v825
  %v858 = vmul.f32 %v826, %v826
  %v859 = vmul.f32 %v827, %v827
  %v860 = vadd.f32 %v828, %v830
  %v861 = vadd.f32 %v860, %v832
  %v862 = vadd.f32 %v861, %v834
  %v863 = vadd.f32 %v862, %v836
  %v864 = vadd.f32 %v863, %v838
  %v865 = vadd.f32 %v864, %v840
  %v866 = vadd.f32 %v865, %v842
  %v867 = vrot.slane %v866, 4
  %v868 = vadd.f32 %v866, %v867
  %v869 = vrot.slane %v868, 2
  %v870 = vadd.f32 %v868, %v869
  %v871 = vrot.slane %v870, 1
  %v872 = vadd.f32 %v870, %v871
  %v873 = vadd.f32 %v829, %v831
  %v874 = vadd.f32 %v873, %v833
  %v875 = vadd.f32 %v874, %v835
  %v876 = vadd.f32 %v875, %v837
  %v877 = vadd.f32 %v876, %v839
  %v878 = vadd.f32 %v877, %v841
  %v879 = vadd.f32 %v878, %v843
  %v880 = vrot.slane %v879, 4
  %v881 = vadd.f32 %v879, %v880
  %v882 = vrot.slane %v881, 2
  %v883 = vadd.f32 %v881, %v882
  %v884 = vrot.slane %v883, 1
  %v885 = vadd.f32 %v883, %v884
  %v886 = vadd.f32 %v844, %v846
  %v887 = vadd.f32 %v886, %v848
  %v888 = vadd.f32 %v887, %v850
  %v889 = vadd.f32 %v888, %v852
  %v890 = vadd.f32 %v889, %v854
  %v891 = vadd.f32 %v890, %v856
  %v892 = vadd.f32 %v891, %v858
  %v893 = vrot.slane %v892, 4
  %v894 = vadd.f32 %v892, %v893
  %v895 = vrot.slane %v894, 2
  %v896 = vadd.f32 %v894, %v895
  %v897 = vrot.slane %v896, 1
  %v898 = vadd.f32 %v896, %v897
  %v899 = vadd.f32 %v845, %v847
  %v900 = vadd.f32 %v899, %v849
  %v901 = vadd.f32 %v900, %v851
  %v902 = vadd.f32 %v901, %v853
  %v903 = vadd.f32 %v902, %v855
  %v904 = vadd.f32 %v903, %v857
  %v905 = vadd.f32 %v904, %v859
  %v906 = vrot.slane %v905, 4
  %v907 = vadd.f32 %v905, %v906
  %v908 = vrot.slane %v907, 2
  %v909 = vadd.f32 %v907, %v908
  %v910 = vrot.slane %v909, 1
  %v911 = vadd.f32 %v909, %v910
  %v912 = vmul.f32 %v872, 0.015625
  %v913 = vmul.f32 %v885, 0.015625
  %v914 = vmul.f32 %v898, 0.015625
  %v915 = vmul.f32 %v911, 0.015625
  %v916 = vadd.f32 %v912, 1e-05
  %v917 = vadd.f32 %v913, 1e-05
  %v918 = vadd.f32 %v914, 1e-05
  %v919 = vadd.f32 %v915, 1e-05
  %v920 = vrsqrt.pop %v916
  %v921 = vrsqrt.pop %v917
  %v922 = vrsqrt.pop %v918
  %v923 = vrsqrt.pop %v919
  %v924 = vmul.f32 %v796, %v920
  %v925 = vmul.f32 %v797, %v921
  %v926 = vmul.f32 %v798, %v920
  %v927 = vmul.f32 %v799, %v921
  %v928 = vmul.f32 %v800, %v920
  %v929 = vmul.f32 %v801, %v921
  %v930 = vmul.f32 %v802, %v920
  %v931 = vmul.f32 %v803, %v921
  %v932 = vmul.f32 %v804, %v920
  %v933 = vmul.f32 %v805, %v921
  %v934 = vmul.f32 %v806, %v920
  %v935 = vmul.f32 %v807, %v921
  %v936 = vmul.f32 %v808, %v920
  %v937 = vmul.f32 %v809, %v921
  %v938 = vmul.f32 %v810, %v920
  %v939 = vmul.f32 %v811, %v921
  %v940 = vmul.f32 %v812, %v922
  %v941 = vmul.f32 %v813, %v923
  %v942 = vmul.f32 %v814, %v922
  %v943 = vmul.f32 %v815, %v923
  %v944 = vmul.f32 %v816, %v922
  %v945 = vmul.f32 %v817, %v923
  %v946 = vmul.f32 %v818, %v922
  %v947 = vmul.f32 %v819, %v923
  %v948 = vmul.f32 %v820, %v922
  %v949 = vmul.f32 %v821, %v923
  %v950 = vmul.f32 %v822, %v922
  %v951 = vmul.f32 %v823, %v923
  %v952 = vmul.f32 %v824, %v922
  %v953 = vmul.f32 %v825, %v923
  %v954 = vmul.f32 %v826, %v922
  %v955 = vmul.f32 %v827, %v923
  %v956 = vmul.f32 %v924, 0.5
  %v957 = vmul.f32 %v925, 0.5
  %v958 = vmul.f32 %v926, 0.5
  %v959 = vmul.f32 %v927, 0.5
  %v960 = vmul.f32 %v928, 0.5
  %v961 = vmul.f32 %v929, 0.5
  %v962 = vmul.f32 %v930, 0.5
  %v963 = vmul.f32 %v931, 0.5
  %v964 = vmul.f32 %v932, 0.5
  %v965 = vmul.f32 %v933, 0.5
  %v966 = vmul.f32 %v934, 0.5
  %v967 = vmul.f32 %v935, 0.5
  %v968 = vmul.f32 %v936, 0.5
  %v969 = vmul.f32 %v937, 0.5
  %v970 = vmul.f32 %v938, 0.5
  %v971 = vmul.f32 %v939, 0.5
  %v972 = vmul.f32 %v940, 0.5
  %v973 = vmul.f32 %v941, 0.5
  %v974 = vmul.f32 %v942, 0.5
  %v975 = vmul.f32 %v943, 0.5
  %v976 = vmul.f32 %v944, 0.5
  %v977 = vmul.f32 %v945, 0.5
  %v978 = vmul.f32 %v946, 0.5
  %v979 = vmul.f32 %v947, 0.5
  %v980 = vmul.f32 %v948, 0.5
  %v981 = vmul.f32 %v949, 0.5
  %v982 = vmul.f32 %v950, 0.5
  %v983 = vmul.f32 %v951, 0.5
  %v984 = vmul.f32 %v952, 0.5
  %v985 = vmul.f32 %v953, 0.5
  %v986 = vmul.f32 %v954, 0.5
  %v987 = vmul.f32 %v955, 0.5
  %v988 = vmul.f32 %v924, 0.70710677
  %v989 = vmul.f32 %v925, 0.70710677
  %v990 = vmul.f32 %v926, 0.70710677
  %v991 = vmul.f32 %v927, 0.70710677
  %v992 = vmul.f32 %v928, 0.70710677
  %v993 = vmul.f32 %v929, 0.70710677
  %v994 = vmul.f32 %v930, 0.70710677
  %v995 = vmul.f32 %v931, 0.70710677
  %v996 = vmul.f32 %v932, 0.70710677
  %v997 = vmul.f32 %v933, 0.70710677
  %v998 = vmul.f32 %v934, 0.70710677
  %v999 = vmul.f32 %v935, 0.70710677
  %v1000 = vmul.f32 %v936, 0.70710677
  %v1001 = vmul.f32 %v937, 0.70710677
  %v1002 = vmul.f32 %v938, 0.70710677
  %v1003 = vmul.f32 %v939, 0.70710677
  %v1004 = vmul.f32 %v940, 0.70710677
  %v1005 = vmul.f32 %v941, 0.70710677
  %v1006 = vmul.f32 %v942, 0.70710677
  %v1007 = vmul.f32 %v943, 0.70710677
  %v1008 = vmul.f32 %v944, 0.70710677
  %v1009 = vmul.f32 %v945, 0.70710677
  %v1010 = vmul.f32 %v946, 0.70710677
  %v1011 = vmul.f32 %v947, 0.70710677
  %v1012 = vmul.f32 %v948, 0.70710677
  %v1013 = vmul.f32 %v949, 0.70710677
  %v1014 = vmul.f32 %v950, 0.70710677
  %v1015 = vmul.f32 %v951, 0.70710677
  %v1016 = vmul.f32 %v952, 0.70710677
  %v1017 = vmul.f32 %v953, 0.70710677
  %v1018 = vmul.f32 %v954, 0.70710677
  %v1019 = vmul.f32 %v955, 0.70710677
  %v1020 = verf.f32.pop %v988
  %v1021 = verf.f32.pop %v989
  %v1022 = verf.f32.pop %v990
  %v1023 = verf.f32.pop %v991
  %v1024 = verf.f32.pop %v992
  %v1025 = verf.f32.pop %v993
  %v1026 = verf.f32.pop %v994
  %v1027 = verf.f32.pop %v995
  %v1028 = verf.f32.pop %v996
  %v1029 = verf.f32.pop %v997
  %v1030 = verf.f32.pop %v998
  %v1031 = verf.f32.pop %v999
  %v1032 = verf.f32.pop %v1000
  %v1033 = verf.f32.pop %v1001
  %v1034 = verf.f32.pop %v1002
  %v1035 = verf.f32.pop %v1003
  %v1036 = verf.f32.pop %v1004
  %v1037 = verf.f32.pop %v1005
  %v1038 = verf.f32.pop %v1006
  %v1039 = verf.f32.pop %v1007
  %v1040 = verf.f32.pop %v1008
  %v1041 = verf.f32.pop %v1009
  %v1042 = verf.f32.pop %v1010
  %v1043 = verf.f32.pop %v1011
  %v1044 = verf.f32.pop %v1012
  %v1045 = verf.f32.pop %v1013
  %v1046 = verf.f32.pop %v1014
  %v1047 = verf.f32.pop %v1015
  %v1048 = verf.f32.pop %v1016
  %v1049 = verf.f32.pop %v1017
  %v1050 = verf.f32.pop %v1018
  %v1051 = verf.f32.pop %v1019
  %v1052 = vadd.f32 %v1020, 1.0
  %v1053 = vadd.f32 %v1021, 1.0
  %v1054 = vadd.f32 %v1022, 1.0
  %v1055 = vadd.f32 %v1023, 1.0
  %v1056 = vadd.f32 %v1024, 1.0
  %v1057 = vadd.f32 %v1025, 1.0
  %v1058 = vadd.f32 %v1026, 1.0
  %v1059 = vadd.f32 %v1027, 1.0
  %v1060 = vadd.f32 %v1028, 1.0
  %v1061 = vadd.f32 %v1029, 1.0
  %v1062 = vadd.f32 %v1030, 1.0
  %v1063 = vadd.f32 %v1031, 1.0
  %v1064 = vadd.f32 %v1032, 1.0
  %v1065 = vadd.f32 %v1033, 1.0
  %v1066 = vadd.f32 %v1034, 1.0
  %v1067 = vadd.f32 %v1035, 1.0
  %v1068 = vadd.f32 %v1036, 1.0
  %v1069 = vadd.f32 %v1037, 1.0
  %v1070 = vadd.f32 %v1038, 1.0
  %v1071 = vadd.f32 %v1039, 1.0
  %v1072 = vadd.f32 %v1040, 1.0
  %v1073 = vadd.f32 %v1041, 1.0
  %v1074 = vadd.f32 %v1042, 1.0
  %v1075 = vadd.f32 %v1043, 1.0
  %v1076 = vadd.f32 %v1044, 1.0
  %v1077 = vadd.f32 %v1045, 1.0
  %v1078 = vadd.f32 %v1046, 1.0
  %v1079 = vadd.f32 %v1047, 1.0
  %v1080 = vadd.f32 %v1048, 1.0
  %v1081 = vadd.f32 %v1049, 1.0
  %v1082 = vadd.f32 %v1050, 1.0
  %v1083 = vadd.f32 %v1051, 1.0
  %v1084 = vmul.f32 %v956, %v1052
  %v1085 = vmul.f32 %v957, %v1053
  %v1086 = vmul.f32 %v958, %v1054
  %v1087 = vmul.f32 %v959, %v1055
  %v1088 = vmul.f32 %v960, %v1056
  %v1089 = vmul.f32 %v961, %v1057
  %v1090 = vmul.f32 %v962, %v1058
  %v1091 = vmul.f32 %v963, %v1059
  %v1092 = vmul.f32 %v964, %v1060
  %v1093 = vmul.f32 %v965, %v1061
  %v1094 = vmul.f32 %v966, %v1062
  %v1095 = vmul.f32 %v967, %v1063
  %v1096 = vmul.f32 %v968, %v1064
  %v1097 = vmul.f32 %v969, %v1065
  %v1098 = vmul.f32 %v970, %v1066
  %v1099 = vmul.f32 %v971, %v1067
  %v1100 = vmul.f32 %v972, %v1068
  %v1101 = vmul.f32 %v973, %v1069
  %v1102 = vmul.f32 %v974, %v1070
  %v1103 = vmul.f32 %v975, %v1071
  %v1104 = vmul.f32 %v976, %v1072
  %v1105 = vmul.f32 %v977, %v1073
  %v1106 = vmul.f32 %v978, %v1074
  %v1107 = vmul.f32 %v979, %v1075
  %v1108 = vmul.f32 %v980, %v1076
  %v1109 = vmul.f32 %v981, %v1077
  %v1110 = vmul.f32 %v982, %v1078
  %v1111 = vmul.f32 %v983, %v1079
  %v1112 = vmul.f32 %v984, %v1080
  %v1113 = vmul.f32 %v985, %v1081
  %v1114 = vmul.f32 %v986, %v1082
  %v1115 = vmul.f32 %v987, %v1083
  %v1116 = vpack.c.bf16 %v1086, %v1084
  %v1117 = vpack.c.bf16 %v1087, %v1085
  %v1118 = vpack.c.bf16 %v1090, %v1088
  %v1119 = vpack.c.bf16 %v1091, %v1089
  %v1120 = vpack.c.bf16 %v1094, %v1092
  %v1121 = vpack.c.bf16 %v1095, %v1093
  %v1122 = vpack.c.bf16 %v1098, %v1096
  %v1123 = vpack.c.bf16 %v1099, %v1097
  %v1124 = vpack.c.bf16 %v1102, %v1100
  %v1125 = vpack.c.bf16 %v1103, %v1101
  %v1126 = vpack.c.bf16 %v1106, %v1104
  %v1127 = vpack.c.bf16 %v1107, %v1105
  %v1128 = vpack.c.bf16 %v1110, %v1108
  %v1129 = vpack.c.bf16 %v1111, %v1109
  %v1130 = vpack.c.bf16 %v1114, %v1112
  %v1131 = vpack.c.bf16 %v1115, %v1113
  %v1132 = vld [vmem:[%s3] sm:$0xf]
  %v1133 = vld [vmem:[%s3 + $0x4] sm:$0xf]
  %v1134 = vld [vmem:[%s3 + $0x8] sm:$0xf]
  %v1135 = vld [vmem:[%s3 + $0xc] sm:$0xf]
  %v1136 = vld [vmem:[%s3 + $0x10] sm:$0xf]
  %v1137 = vld [vmem:[%s3 + $0x14] sm:$0xf]
  %v1138 = vld [vmem:[%s3 + $0x18] sm:$0xf]
  %v1139 = vld [vmem:[%s3 + $0x1c] sm:$0xf]
  %v1140 = vld [vmem:[%s3 + $0x20] sm:$0xf]
  %v1141 = vld [vmem:[%s3 + $0x24] sm:$0xf]
  %v1142 = vld [vmem:[%s3 + $0x28] sm:$0xf]
  %v1143 = vld [vmem:[%s3 + $0x2c] sm:$0xf]
  %v1144 = vld [vmem:[%s3 + $0x30] sm:$0xf]
  %v1145 = vld [vmem:[%s3 + $0x34] sm:$0xf]
  %v1146 = vld [vmem:[%s3 + $0x38] sm:$0xf]
  %v1147 = vld [vmem:[%s3 + $0x3c] sm:$0xf]
  %v1148 = vld [vmem:[%s3 + $0x40] sm:$0xf]
  %v1149 = vld [vmem:[%s3 + $0x44] sm:$0xf]
  %v1150 = vld [vmem:[%s3 + $0x48] sm:$0xf]
  %v1151 = vld [vmem:[%s3 + $0x4c] sm:$0xf]
  %v1152 = vld [vmem:[%s3 + $0x50] sm:$0xf]
  %v1153 = vld [vmem:[%s3 + $0x54] sm:$0xf]
  %v1154 = vld [vmem:[%s3 + $0x58] sm:$0xf]
  %v1155 = vld [vmem:[%s3 + $0x5c] sm:$0xf]
  %v1156 = vld [vmem:[%s3 + $0x60] sm:$0xf]
  %v1157 = vld [vmem:[%s3 + $0x64] sm:$0xf]
  %v1158 = vld [vmem:[%s3 + $0x68] sm:$0xf]
  %v1159 = vld [vmem:[%s3 + $0x6c] sm:$0xf]
  %v1160 = vld [vmem:[%s3 + $0x70] sm:$0xf]
  %v1161 = vld [vmem:[%s3 + $0x74] sm:$0xf]
  %v1162 = vld [vmem:[%s3 + $0x78] sm:$0xf]
  %v1163 = vld [vmem:[%s3 + $0x7c] sm:$0xf]
  %v1164 = vld [vmem:[%s18 + $0x2] ss:$0 sm:$0xff]
  %v1197 = vunpack.c.l.b16 %v1132
  %v1198 = vunpack.c.l.b16 %v1133
  %v1199 = vunpack.c.l.b16 %v1134
  %v1200 = vunpack.c.l.b16 %v1135
  %v1201 = vunpack.c.l.b16 %v1136
  %v1202 = vunpack.c.l.b16 %v1137
  %v1203 = vunpack.c.l.b16 %v1138
  %v1204 = vunpack.c.l.b16 %v1139
  %v1205 = vunpack.c.l.b16 %v1140
  %v1206 = vunpack.c.l.b16 %v1141
  %v1207 = vunpack.c.l.b16 %v1142
  %v1208 = vunpack.c.l.b16 %v1143
  %v1209 = vunpack.c.l.b16 %v1144
  %v1210 = vunpack.c.l.b16 %v1145
  %v1211 = vunpack.c.l.b16 %v1146
  %v1212 = vunpack.c.l.b16 %v1147
  %v1213 = vunpack.c.l.b16 %v1148
  %v1214 = vunpack.c.l.b16 %v1149
  %v1215 = vunpack.c.l.b16 %v1150
  %v1216 = vunpack.c.l.b16 %v1151
  %v1217 = vunpack.c.l.b16 %v1152
  %v1218 = vunpack.c.l.b16 %v1153
  %v1219 = vunpack.c.l.b16 %v1154
  %v1220 = vunpack.c.l.b16 %v1155
  %v1221 = vunpack.c.l.b16 %v1156
  %v1222 = vunpack.c.l.b16 %v1157
  %v1223 = vunpack.c.l.b16 %v1158
  %v1224 = vunpack.c.l.b16 %v1159
  %v1225 = vunpack.c.l.b16 %v1160
  %v1226 = vunpack.c.l.b16 %v1161
  %v1227 = vunpack.c.l.b16 %v1162
  %v1228 = vunpack.c.l.b16 %v1163
  %v1229 = vpack.c.b16 %v1198, %v1197
  %v1230 = vpack.c.b16 %v1200, %v1199
  %v1231 = vpack.c.b16 %v1202, %v1201
  %v1232 = vpack.c.b16 %v1204, %v1203
  %v1233 = vpack.c.b16 %v1206, %v1205
  %v1234 = vpack.c.b16 %v1208, %v1207
  %v1235 = vpack.c.b16 %v1210, %v1209
  %v1236 = vpack.c.b16 %v1212, %v1211
  %v1237 = vpack.c.b16 %v1214, %v1213
  %v1238 = vpack.c.b16 %v1216, %v1215
  %v1239 = vpack.c.b16 %v1218, %v1217
  %v1240 = vpack.c.b16 %v1220, %v1219
  %v1241 = vpack.c.b16 %v1222, %v1221
  %v1242 = vpack.c.b16 %v1224, %v1223
  %v1243 = vpack.c.b16 %v1226, %v1225
  %v1244 = vpack.c.b16 %v1228, %v1227
  %1261 = vmatprep.subr.bf16.mxu0 0
  %1262 = vmatpush1.bf16.msra.mxu0 %v1229
  %1263 = vmatprep.subr.bf16.mxu0 0
  %1264 = vmatpush1.bf16.msra.mxu0 %v1230
  %1265 = vmatprep.subr.bf16.mxu0 0
  %1266 = vmatpush1.bf16.msra.mxu0 %v1231
  %1267 = vmatprep.subr.bf16.mxu0 0
  %1268 = vmatpush1.bf16.msra.mxu0 %v1232
  %1269 = vmatprep.subr.bf16.mxu0 0
  %1270 = vmatpush1.bf16.msra.mxu0 %v1233
  %1271 = vmatprep.subr.bf16.mxu0 0
  %1272 = vmatpush1.bf16.msra.mxu0 %v1234
  %1273 = vmatprep.subr.bf16.mxu0 0
  %1274 = vmatpush1.bf16.msra.mxu0 %v1235
  %1275 = vmatprep.subr.bf16.mxu0 0
  %1276 = vmatpush1.bf16.msra.mxu0 %v1236
  %1277 = vmatprep.subr.bf16.mxu0 0
  %1278 = vmatpush1.bf16.msra.mxu0 %v1237
  %1279 = vmatprep.subr.bf16.mxu0 0
  %1280 = vmatpush1.bf16.msra.mxu0 %v1238
  %1281 = vmatprep.subr.bf16.mxu0 0
  %1282 = vmatpush1.bf16.msra.mxu0 %v1239
  %1283 = vmatprep.subr.bf16.mxu0 0
  %1284 = vmatpush1.bf16.msra.mxu0 %v1240
  %1285 = vmatprep.subr.bf16.mxu0 0
  %1286 = vmatpush1.bf16.msra.mxu0 %v1241
  %1287 = vmatprep.subr.bf16.mxu0 0
  %1288 = vmatpush1.bf16.msra.mxu0 %v1242
  %1289 = vmatprep.subr.bf16.mxu0 0
  %1290 = vmatpush1.bf16.msra.mxu0 %v1243
  %1291 = vmatprep.subr.bf16.mxu0 0
  %1292 = vmatpush1.bf16.msra.mxu0 %v1244
  %1293 = vmatprep.mubr.bf16.mxu0 %v1117
  %1294 = vmatmul.mubr.bf16.gmra.mrb[0].mxu0 %v1116
  %v1295 = vpop.f32.mrb[0].mxu0
  %v1296 = vadd.f32 %v1164, %v1295
  %v1297 = vpop.f32.mrb[0].mxu0
  %v1298 = vpop.f32.mrb[0].mxu0
  %v1299 = vadd.f32 %v1164, %v1298
  %v1300 = vpop.f32.mrb[0].mxu0
  %1301 = vmatprep.mubr.bf16.mxu0 %v1119
  %1302 = vmatmul.mubr.bf16.gmra.mrb[0].mxu0 %v1118
  %v1303 = vpop.f32.mrb[0].mxu0
  %v1304 = vadd.f32 %v1164, %v1303
  %v1305 = vpop.f32.mrb[0].mxu0
  %v1306 = vpop.f32.mrb[0].mxu0
  %v1307 = vadd.f32 %v1164, %v1306
  %v1308 = vpop.f32.mrb[0].mxu0
  %1309 = vmatprep.mubr.bf16.mxu0 %v1121
  %1310 = vmatmul.mubr.bf16.gmra.mrb[0].mxu0 %v1120
  %v1311 = vpop.f32.mrb[0].mxu0
  %v1312 = vadd.f32 %v1164, %v1311
  %v1313 = vpop.f32.mrb[0].mxu0
  %v1314 = vpop.f32.mrb[0].mxu0
  %v1315 = vadd.f32 %v1164, %v1314
  %v1316 = vpop.f32.mrb[0].mxu0
  %1317 = vmatprep.mubr.bf16.mxu0 %v1123
  %1318 = vmatmul.mubr.bf16.gmra.mrb[0].mxu0 %v1122
  %v1319 = vpop.f32.mrb[0].mxu0
  %v1320 = vadd.f32 %v1164, %v1319
  %v1321 = vpop.f32.mrb[0].mxu0
  %v1322 = vpop.f32.mrb[0].mxu0
  %v1323 = vadd.f32 %v1164, %v1322
  %v1324 = vpop.f32.mrb[0].mxu0
  %1325 = vmatprep.mubr.bf16.mxu0 %v1125
  %1326 = vmatmul.mubr.bf16.gmra.mrb[0].mxu0 %v1124
  %v1327 = vpop.f32.mrb[0].mxu0
  %v1328 = vadd.f32 %v1164, %v1327
  %v1329 = vpop.f32.mrb[0].mxu0
  %v1330 = vpop.f32.mrb[0].mxu0
  %v1331 = vadd.f32 %v1164, %v1330
  %v1332 = vpop.f32.mrb[0].mxu0
  %1333 = vmatprep.mubr.bf16.mxu0 %v1127
  %1334 = vmatmul.mubr.bf16.gmra.mrb[0].mxu0 %v1126
  %v1335 = vpop.f32.mrb[0].mxu0
  %v1336 = vadd.f32 %v1164, %v1335
  %v1337 = vpop.f32.mrb[0].mxu0
  %v1338 = vpop.f32.mrb[0].mxu0
  %v1339 = vadd.f32 %v1164, %v1338
  %v1340 = vpop.f32.mrb[0].mxu0
  %1341 = vmatprep.mubr.bf16.mxu0 %v1129
  %1342 = vmatmul.mubr.bf16.gmra.mrb[0].mxu0 %v1128
  %v1343 = vpop.f32.mrb[0].mxu0
  %v1344 = vadd.f32 %v1164, %v1343
  %v1345 = vpop.f32.mrb[0].mxu0
  %v1346 = vpop.f32.mrb[0].mxu0
  %v1347 = vadd.f32 %v1164, %v1346
  %v1348 = vpop.f32.mrb[0].mxu0
  %1349 = vmatprep.mubr.bf16.mxu0 %v1131
  %1350 = vmatmul.mubr.bf16.gmra.mrb[0].mxu0 %v1130
  %v1351 = vpop.f32.mrb[0].mxu0
  %v1352 = vadd.f32 %v1164, %v1351
  %v1353 = vpop.f32.mrb[0].mxu0
  %v1354 = vpop.f32.mrb[0].mxu0
  %v1355 = vadd.f32 %v1164, %v1354
  %v1356 = vpop.f32.mrb[0].mxu0
  %1357 = vdwg.mxu0
  %v1358 = vpack.c.bf16 %v1299, %v1296
  %v1359 = vpack.c.bf16 %v1307, %v1304
  %v1360 = vpack.c.bf16 %v1315, %v1312
  %v1361 = vpack.c.bf16 %v1323, %v1320
  %v1362 = vpack.c.bf16 %v1331, %v1328
  %v1363 = vpack.c.bf16 %v1339, %v1336
  %v1364 = vpack.c.bf16 %v1347, %v1344
  %v1365 = vpack.c.bf16 %v1355, %v1352
  %v1366 = vld [vmem:[%s4] sm:$0xf]
  %v1367 = vld [vmem:[%s4 + $0x4] sm:$0xf]
  %v1368 = vld [vmem:[%s4 + $0x8] sm:$0xf]
  %v1369 = vld [vmem:[%s4 + $0xc] sm:$0xf]
  %v1370 = vld [vmem:[%s4 + $0x10] sm:$0xf]
  %v1371 = vld [vmem:[%s4 + $0x14] sm:$0xf]
  %v1372 = vld [vmem:[%s4 + $0x18] sm:$0xf]
  %v1373 = vld [vmem:[%s4 + $0x1c] sm:$0xf]
  %v1374 = vld [vmem:[%s18 + $0x3] ss:$0 sm:$0xff]
  %v1383 = vunpack.c.l.b16 %v1366
  %v1384 = vunpack.c.l.b16 %v1367
  %v1385 = vunpack.c.l.b16 %v1368
  %v1386 = vunpack.c.l.b16 %v1369
  %v1387 = vunpack.c.l.b16 %v1370
  %v1388 = vunpack.c.l.b16 %v1371
  %v1389 = vunpack.c.l.b16 %v1372
  %v1390 = vunpack.c.l.b16 %v1373
  %v1391 = vpack.c.b16 %v1384, %v1383
  %v1392 = vpack.c.b16 %v1386, %v1385
  %v1393 = vpack.c.b16 %v1388, %v1387
  %v1394 = vpack.c.b16 %v1390, %v1389
  %vm1399 = vcmask 523264
  %v1401 = vsel %vm1399, %v1358, 0
  %v1404 = vsel %vm1399, %v1359, 0
  %v1407 = vsel %vm1399, %v1360, 0
  %v1410 = vsel %vm1399, %v1361, 0
  %v1413 = vsel %vm1399, %v1362, 0
  %v1416 = vsel %vm1399, %v1363, 0
  %v1419 = vsel %vm1399, %v1364, 0
  %v1422 = vsel %vm1399, %v1365, 0
  %1424 = vmatprep.subr.bf16.mxu0 0
  %1425 = vmatpush1.bf16.msra.mxu0 %v1391
  %1426 = vmatprep.subr.bf16.mxu0 0
  %1427 = vmatpush1.bf16.msra.mxu0 %v1392
  %1428 = vmatprep.subr.bf16.mxu0 0
  %1429 = vmatpush1.bf16.msra.mxu0 %v1393
  %1430 = vmatprep.subr.bf16.mxu0 0
  %1431 = vmatpush1.bf16.msra.mxu0 %v1394
  %1432 = vmatprep.subr.bf16.mxu0 0
  %1433 = vmatpush1.bf16.msra.mxu0 0
  %1434 = vmatprep.subr.bf16.mxu0 0
  %1435 = vmatpush1.bf16.msra.mxu0 0
  %1436 = vmatprep.subr.bf16.mxu0 0
  %1437 = vmatpush1.bf16.msra.mxu0 0
  %1438 = vmatprep.subr.bf16.mxu0 0
  %1439 = vmatpush1.bf16.msra.mxu0 0
  %1440 = vmatprep.subr.bf16.mxu0 0
  %1441 = vmatpush1.bf16.msra.mxu0 0
  %1442 = vmatprep.subr.bf16.mxu0 0
  %1443 = vmatpush1.bf16.msra.mxu0 0
  %1444 = vmatprep.subr.bf16.mxu0 0
  %1445 = vmatpush1.bf16.msra.mxu0 0
  %1446 = vmatprep.subr.bf16.mxu0 0
  %1447 = vmatpush1.bf16.msra.mxu0 0
  %1448 = vmatprep.subr.bf16.mxu0 0
  %1449 = vmatpush1.bf16.msra.mxu0 0
  %1450 = vmatprep.subr.bf16.mxu0 0
  %1451 = vmatpush1.bf16.msra.mxu0 0
  %1452 = vmatprep.subr.bf16.mxu0 0
  %1453 = vmatpush1.bf16.msra.mxu0 0
  %1454 = vmatprep.subr.bf16.mxu0 0
  %1455 = vmatpush1.bf16.msra.mxu0 0
  %1456 = vmatprep.mubr.bf16.mxu0 0
  %1457 = vmatmul.mubr.bf16.gmra.mrb[0].mxu0 %v1401
  %v1458 = vpop.f32.mrb[0].mxu0
  %v1459 = vadd.f32 %v1374, %v1458
  %v1460 = vpop.f32.mrb[0].mxu0
  %v1461 = vpop.f32.mrb[0].mxu0
  %v1462 = vadd.f32 %v1374, %v1461
  %v1463 = vpop.f32.mrb[0].mxu0
  %1464 = vmatprep.mubr.bf16.mxu0 0
  %1465 = vmatmul.mubr.bf16.gmra.mrb[0].mxu0 %v1404
  %v1466 = vpop.f32.mrb[0].mxu0
  %v1467 = vadd.f32 %v1374, %v1466
  %v1468 = vpop.f32.mrb[0].mxu0
  %v1469 = vpop.f32.mrb[0].mxu0
  %v1470 = vadd.f32 %v1374, %v1469
  %v1471 = vpop.f32.mrb[0].mxu0
  %1472 = vmatprep.mubr.bf16.mxu0 0
  %1473 = vmatmul.mubr.bf16.gmra.mrb[0].mxu0 %v1407
  %v1474 = vpop.f32.mrb[0].mxu0
  %v1475 = vadd.f32 %v1374, %v1474
  %v1476 = vpop.f32.mrb[0].mxu0
  %v1477 = vpop.f32.mrb[0].mxu0
  %v1478 = vadd.f32 %v1374, %v1477
  %v1479 = vpop.f32.mrb[0].mxu0
  %1480 = vmatprep.mubr.bf16.mxu0 0
  %1481 = vmatmul.mubr.bf16.gmra.mrb[0].mxu0 %v1410
  %v1482 = vpop.f32.mrb[0].mxu0
  %v1483 = vadd.f32 %v1374, %v1482
  %v1484 = vpop.f32.mrb[0].mxu0
  %v1485 = vpop.f32.mrb[0].mxu0
  %v1486 = vadd.f32 %v1374, %v1485
  %v1487 = vpop.f32.mrb[0].mxu0
  %1488 = vmatprep.mubr.bf16.mxu0 0
  %1489 = vmatmul.mubr.bf16.gmra.mrb[0].mxu0 %v1413
  %v1490 = vpop.f32.mrb[0].mxu0
  %v1491 = vadd.f32 %v1374, %v1490
  %v1492 = vpop.f32.mrb[0].mxu0
  %v1493 = vpop.f32.mrb[0].mxu0
  %v1494 = vadd.f32 %v1374, %v1493
  %v1495 = vpop.f32.mrb[0].mxu0
  %1496 = vmatprep.mubr.bf16.mxu0 0
  %1497 = vmatmul.mubr.bf16.gmra.mrb[0].mxu0 %v1416
  %v1498 = vpop.f32.mrb[0].mxu0
  %v1499 = vadd.f32 %v1374, %v1498
  %v1500 = vpop.f32.mrb[0].mxu0
  %v1501 = vpop.f32.mrb[0].mxu0
  %v1502 = vadd.f32 %v1374, %v1501
  %v1503 = vpop.f32.mrb[0].mxu0
  %1504 = vmatprep.mubr.bf16.mxu0 0
  %1505 = vmatmul.mubr.bf16.gmra.mrb[0].mxu0 %v1419
  %v1506 = vpop.f32.mrb[0].mxu0
  %v1507 = vadd.f32 %v1374, %v1506
  %v1508 = vpop.f32.mrb[0].mxu0
  %v1509 = vpop.f32.mrb[0].mxu0
  %v1510 = vadd.f32 %v1374, %v1509
  %v1511 = vpop.f32.mrb[0].mxu0
  %1512 = vmatprep.mubr.bf16.mxu0 0
  %1513 = vmatmul.mubr.bf16.gmra.mrb[0].mxu0 %v1422
  %v1514 = vpop.f32.mrb[0].mxu0
  %v1515 = vadd.f32 %v1374, %v1514
  %v1516 = vpop.f32.mrb[0].mxu0
  %v1517 = vpop.f32.mrb[0].mxu0
  %v1518 = vadd.f32 %v1374, %v1517
  %v1519 = vpop.f32.mrb[0].mxu0
  %1520 = vdwg.mxu0
  %v1521 = vadd.f32 %v1459, %v1462
  %v1522 = vadd.f32 %v1521, %v1467
  %v1523 = vadd.f32 %v1522, %v1470
  %v1524 = vadd.f32 %v1523, %v1475
  %v1525 = vadd.f32 %v1524, %v1478
  %v1526 = vadd.f32 %v1525, %v1483
  %v1527 = vadd.f32 %v1526, %v1486
  %v1528 = vrot.slane %v1527, 4
  %v1529 = vadd.f32 %v1527, %v1528
  %v1530 = vrot.slane %v1529, 2
  %v1531 = vadd.f32 %v1529, %v1530
  %v1532 = vrot.slane %v1531, 1
  %v1533 = vadd.f32 %v1531, %v1532
  %v1534 = vadd.f32 %v1491, %v1494
  %v1535 = vadd.f32 %v1534, %v1499
  %v1536 = vadd.f32 %v1535, %v1502
  %v1537 = vadd.f32 %v1536, %v1507
  %v1538 = vadd.f32 %v1537, %v1510
  %v1539 = vadd.f32 %v1538, %v1515
  %v1540 = vadd.f32 %v1539, %v1518
  %v1541 = vrot.slane %v1540, 4
  %v1542 = vadd.f32 %v1540, %v1541
  %v1543 = vrot.slane %v1542, 2
  %v1544 = vadd.f32 %v1542, %v1543
  %v1545 = vrot.slane %v1544, 1
  %v1546 = vadd.f32 %v1544, %v1545
  %v1547 = vmul.f32 %v1533, 0.015625
  %v1548 = vmul.f32 %v1546, 0.015625
  %v1549 = vsub.f32 %v1459, %v1547
  %v1550 = vsub.f32 %v1462, %v1547
  %v1551 = vsub.f32 %v1467, %v1547
  %v1552 = vsub.f32 %v1470, %v1547
  %v1553 = vsub.f32 %v1475, %v1547
  %v1554 = vsub.f32 %v1478, %v1547
  %v1555 = vsub.f32 %v1483, %v1547
  %v1556 = vsub.f32 %v1486, %v1547
  %v1557 = vsub.f32 %v1491, %v1548
  %v1558 = vsub.f32 %v1494, %v1548
  %v1559 = vsub.f32 %v1499, %v1548
  %v1560 = vsub.f32 %v1502, %v1548
  %v1561 = vsub.f32 %v1507, %v1548
  %v1562 = vsub.f32 %v1510, %v1548
  %v1563 = vsub.f32 %v1515, %v1548
  %v1564 = vsub.f32 %v1518, %v1548
  %v1565 = vmul.f32 %v1549, %v1549
  %v1566 = vmul.f32 %v1550, %v1550
  %v1567 = vmul.f32 %v1551, %v1551
  %v1568 = vmul.f32 %v1552, %v1552
  %v1569 = vmul.f32 %v1553, %v1553
  %v1570 = vmul.f32 %v1554, %v1554
  %v1571 = vmul.f32 %v1555, %v1555
  %v1572 = vmul.f32 %v1556, %v1556
  %v1573 = vmul.f32 %v1557, %v1557
  %v1574 = vmul.f32 %v1558, %v1558
  %v1575 = vmul.f32 %v1559, %v1559
  %v1576 = vmul.f32 %v1560, %v1560
  %v1577 = vmul.f32 %v1561, %v1561
  %v1578 = vmul.f32 %v1562, %v1562
  %v1579 = vmul.f32 %v1563, %v1563
  %v1580 = vmul.f32 %v1564, %v1564
  %v1581 = vadd.f32 %v1565, %v1566
  %v1582 = vadd.f32 %v1581, %v1567
  %v1583 = vadd.f32 %v1582, %v1568
  %v1584 = vadd.f32 %v1583, %v1569
  %v1585 = vadd.f32 %v1584, %v1570
  %v1586 = vadd.f32 %v1585, %v1571
  %v1587 = vadd.f32 %v1586, %v1572
  %v1588 = vrot.slane %v1587, 4
  %v1589 = vadd.f32 %v1587, %v1588
  %v1590 = vrot.slane %v1589, 2
  %v1591 = vadd.f32 %v1589, %v1590
  %v1592 = vrot.slane %v1591, 1
  %v1593 = vadd.f32 %v1591, %v1592
  %v1594 = vadd.f32 %v1573, %v1574
  %v1595 = vadd.f32 %v1594, %v1575
  %v1596 = vadd.f32 %v1595, %v1576
  %v1597 = vadd.f32 %v1596, %v1577
  %v1598 = vadd.f32 %v1597, %v1578
  %v1599 = vadd.f32 %v1598, %v1579
  %v1600 = vadd.f32 %v1599, %v1580
  %v1601 = vrot.slane %v1600, 4
  %v1602 = vadd.f32 %v1600, %v1601
  %v1603 = vrot.slane %v1602, 2
  %v1604 = vadd.f32 %v1602, %v1603
  %v1605 = vrot.slane %v1604, 1
  %v1606 = vadd.f32 %v1604, %v1605
  %v1607 = vmul.f32 %v1593, 0.015625
  %v1608 = vmul.f32 %v1606, 0.015625
  %v1609 = vadd.f32 %v1607, 1e-05
  %v1610 = vadd.f32 %v1608, 1e-05
  %v1611 = vrsqrt.pop %v1609
  %v1612 = vrsqrt.pop %v1610
  %v1613 = vmul.f32 %v1549, %v1611
  %v1614 = vmul.f32 %v1550, %v1611
  %v1615 = vmul.f32 %v1551, %v1611
  %v1616 = vmul.f32 %v1552, %v1611
  %v1617 = vmul.f32 %v1553, %v1611
  %v1618 = vmul.f32 %v1554, %v1611
  %v1619 = vmul.f32 %v1555, %v1611
  %v1620 = vmul.f32 %v1556, %v1611
  %v1621 = vmul.f32 %v1557, %v1612
  %v1622 = vmul.f32 %v1558, %v1612
  %v1623 = vmul.f32 %v1559, %v1612
  %v1624 = vmul.f32 %v1560, %v1612
  %v1625 = vmul.f32 %v1561, %v1612
  %v1626 = vmul.f32 %v1562, %v1612
  %v1627 = vmul.f32 %v1563, %v1612
  %v1628 = vmul.f32 %v1564, %v1612
  %v1629 = vmul.f32 %v1613, 0.5
  %v1630 = vmul.f32 %v1614, 0.5
  %v1631 = vmul.f32 %v1615, 0.5
  %v1632 = vmul.f32 %v1616, 0.5
  %v1633 = vmul.f32 %v1617, 0.5
  %v1634 = vmul.f32 %v1618, 0.5
  %v1635 = vmul.f32 %v1619, 0.5
  %v1636 = vmul.f32 %v1620, 0.5
  %v1637 = vmul.f32 %v1621, 0.5
  %v1638 = vmul.f32 %v1622, 0.5
  %v1639 = vmul.f32 %v1623, 0.5
  %v1640 = vmul.f32 %v1624, 0.5
  %v1641 = vmul.f32 %v1625, 0.5
  %v1642 = vmul.f32 %v1626, 0.5
  %v1643 = vmul.f32 %v1627, 0.5
  %v1644 = vmul.f32 %v1628, 0.5
  %v1645 = vmul.f32 %v1613, 0.70710677
  %v1646 = vmul.f32 %v1614, 0.70710677
  %v1647 = vmul.f32 %v1615, 0.70710677
  %v1648 = vmul.f32 %v1616, 0.70710677
  %v1649 = vmul.f32 %v1617, 0.70710677
  %v1650 = vmul.f32 %v1618, 0.70710677
  %v1651 = vmul.f32 %v1619, 0.70710677
  %v1652 = vmul.f32 %v1620, 0.70710677
  %v1653 = vmul.f32 %v1621, 0.70710677
  %v1654 = vmul.f32 %v1622, 0.70710677
  %v1655 = vmul.f32 %v1623, 0.70710677
  %v1656 = vmul.f32 %v1624, 0.70710677
  %v1657 = vmul.f32 %v1625, 0.70710677
  %v1658 = vmul.f32 %v1626, 0.70710677
  %v1659 = vmul.f32 %v1627, 0.70710677
  %v1660 = vmul.f32 %v1628, 0.70710677
  %v1661 = verf.f32.pop %v1645
  %v1662 = verf.f32.pop %v1646
  %v1663 = verf.f32.pop %v1647
  %v1664 = verf.f32.pop %v1648
  %v1665 = verf.f32.pop %v1649
  %v1666 = verf.f32.pop %v1650
  %v1667 = verf.f32.pop %v1651
  %v1668 = verf.f32.pop %v1652
  %v1669 = verf.f32.pop %v1653
  %v1670 = verf.f32.pop %v1654
  %v1671 = verf.f32.pop %v1655
  %v1672 = verf.f32.pop %v1656
  %v1673 = verf.f32.pop %v1657
  %v1674 = verf.f32.pop %v1658
  %v1675 = verf.f32.pop %v1659
  %v1676 = verf.f32.pop %v1660
  %v1677 = vadd.f32 %v1661, 1.0
  %v1678 = vadd.f32 %v1662, 1.0
  %v1679 = vadd.f32 %v1663, 1.0
  %v1680 = vadd.f32 %v1664, 1.0
  %v1681 = vadd.f32 %v1665, 1.0
  %v1682 = vadd.f32 %v1666, 1.0
  %v1683 = vadd.f32 %v1667, 1.0
  %v1684 = vadd.f32 %v1668, 1.0
  %v1685 = vadd.f32 %v1669, 1.0
  %v1686 = vadd.f32 %v1670, 1.0
  %v1687 = vadd.f32 %v1671, 1.0
  %v1688 = vadd.f32 %v1672, 1.0
  %v1689 = vadd.f32 %v1673, 1.0
  %v1690 = vadd.f32 %v1674, 1.0
  %v1691 = vadd.f32 %v1675, 1.0
  %v1692 = vadd.f32 %v1676, 1.0
  %v1693 = vmul.f32 %v1629, %v1677
  %v1694 = vmul.f32 %v1630, %v1678
  %v1695 = vmul.f32 %v1631, %v1679
  %v1696 = vmul.f32 %v1632, %v1680
  %v1697 = vmul.f32 %v1633, %v1681
  %v1698 = vmul.f32 %v1634, %v1682
  %v1699 = vmul.f32 %v1635, %v1683
  %v1700 = vmul.f32 %v1636, %v1684
  %v1701 = vmul.f32 %v1637, %v1685
  %v1702 = vmul.f32 %v1638, %v1686
  %v1703 = vmul.f32 %v1639, %v1687
  %v1704 = vmul.f32 %v1640, %v1688
  %v1705 = vmul.f32 %v1641, %v1689
  %v1706 = vmul.f32 %v1642, %v1690
  %v1707 = vmul.f32 %v1643, %v1691
  %v1708 = vmul.f32 %v1644, %v1692
  %v1709 = vpack.c.bf16 %v1694, %v1693
  %v1710 = vpack.c.bf16 %v1696, %v1695
  %v1711 = vpack.c.bf16 %v1698, %v1697
  %v1712 = vpack.c.bf16 %v1700, %v1699
  %v1713 = vpack.c.bf16 %v1702, %v1701
  %v1714 = vpack.c.bf16 %v1704, %v1703
  %v1715 = vpack.c.bf16 %v1706, %v1705
  %v1716 = vpack.c.bf16 %v1708, %v1707
  %v1717 = vld [vmem:[%s5] sm:$0xf]
  %v1718 = vld [vmem:[%s5 + $0x4] sm:$0xf]
  %v1719 = vld [vmem:[%s5 + $0x8] sm:$0xf]
  %v1720 = vld [vmem:[%s5 + $0xc] sm:$0xf]
  %v1721 = vld [vmem:[%s5 + $0x10] sm:$0xf]
  %v1722 = vld [vmem:[%s5 + $0x14] sm:$0xf]
  %v1723 = vld [vmem:[%s5 + $0x18] sm:$0xf]
  %v1724 = vld [vmem:[%s5 + $0x1c] sm:$0xf]
  %v1725 = vld [vmem:[%s5 + $0x20] sm:$0xf]
  %v1726 = vld [vmem:[%s5 + $0x24] sm:$0xf]
  %v1727 = vld [vmem:[%s5 + $0x28] sm:$0xf]
  %v1728 = vld [vmem:[%s5 + $0x2c] sm:$0xf]
  %v1729 = vld [vmem:[%s5 + $0x30] sm:$0xf]
  %v1730 = vld [vmem:[%s5 + $0x34] sm:$0xf]
  %v1731 = vld [vmem:[%s5 + $0x38] sm:$0xf]
  %v1732 = vld [vmem:[%s5 + $0x3c] sm:$0xf]
  %v1733 = vld [vmem:[%s18 + $0x4] ss:$0 sm:$0xff]
  %v1750 = vunpack.c.l.b16 %v1717
  %v1751 = vunpack.c.l.b16 %v1718
  %v1752 = vunpack.c.l.b16 %v1719
  %v1753 = vunpack.c.l.b16 %v1720
  %v1754 = vunpack.c.l.b16 %v1721
  %v1755 = vunpack.c.l.b16 %v1722
  %v1756 = vunpack.c.l.b16 %v1723
  %v1757 = vunpack.c.l.b16 %v1724
  %v1758 = vunpack.c.l.b16 %v1725
  %v1759 = vunpack.c.l.b16 %v1726
  %v1760 = vunpack.c.l.b16 %v1727
  %v1761 = vunpack.c.l.b16 %v1728
  %v1762 = vunpack.c.l.b16 %v1729
  %v1763 = vunpack.c.l.b16 %v1730
  %v1764 = vunpack.c.l.b16 %v1731
  %v1765 = vunpack.c.l.b16 %v1732
  %v1766 = vpack.c.b16 %v1751, %v1750
  %v1767 = vpack.c.b16 %v1753, %v1752
  %v1768 = vpack.c.b16 %v1755, %v1754
  %v1769 = vpack.c.b16 %v1757, %v1756
  %v1770 = vpack.c.b16 %v1759, %v1758
  %v1771 = vpack.c.b16 %v1761, %v1760
  %v1772 = vpack.c.b16 %v1763, %v1762
  %v1773 = vpack.c.b16 %v1765, %v1764
  %1782 = vmatprep.subr.bf16.mxu0 0
  %1783 = vmatpush1.bf16.msra.mxu0 %v1766
  %1784 = vmatprep.subr.bf16.mxu0 0
  %1785 = vmatpush1.bf16.msra.mxu0 %v1767
  %1786 = vmatprep.subr.bf16.mxu0 0
  %1787 = vmatpush1.bf16.msra.mxu0 %v1768
  %1788 = vmatprep.subr.bf16.mxu0 0
  %1789 = vmatpush1.bf16.msra.mxu0 %v1769
  %1790 = vmatprep.subr.bf16.mxu0 0
  %1791 = vmatpush1.bf16.msra.mxu0 %v1770
  %1792 = vmatprep.subr.bf16.mxu0 0
  %1793 = vmatpush1.bf16.msra.mxu0 %v1771
  %1794 = vmatprep.subr.bf16.mxu0 0
  %1795 = vmatpush1.bf16.msra.mxu0 %v1772
  %1796 = vmatprep.subr.bf16.mxu0 0
  %1797 = vmatpush1.bf16.msra.mxu0 %v1773
  %1798 = vmatprep.subr.bf16.mxu0 0
  %1799 = vmatpush1.bf16.msra.mxu0 0
  %1800 = vmatprep.subr.bf16.mxu0 0
  %1801 = vmatpush1.bf16.msra.mxu0 0
  %1802 = vmatprep.subr.bf16.mxu0 0
  %1803 = vmatpush1.bf16.msra.mxu0 0
  %1804 = vmatprep.subr.bf16.mxu0 0
  %1805 = vmatpush1.bf16.msra.mxu0 0
  %1806 = vmatprep.subr.bf16.mxu0 0
  %1807 = vmatpush1.bf16.msra.mxu0 0
  %1808 = vmatprep.subr.bf16.mxu0 0
  %1809 = vmatpush1.bf16.msra.mxu0 0
  %1810 = vmatprep.subr.bf16.mxu0 0
  %1811 = vmatpush1.bf16.msra.mxu0 0
  %1812 = vmatprep.subr.bf16.mxu0 0
  %1813 = vmatpush1.bf16.msra.mxu0 0
  %1814 = vmatprep.mubr.bf16.mxu0 0
  %1815 = vmatmul.mubr.bf16.gmra.mrb[0].mxu0 %v1709
  %v1816 = vpop.f32.mrb[0].mxu0
  %v1817 = vadd.f32 %v1733, %v1816
  %v1818 = vpop.f32.mrb[0].mxu0
  %v1819 = vpop.f32.mrb[0].mxu0
  %v1820 = vadd.f32 %v1733, %v1819
  %v1821 = vpop.f32.mrb[0].mxu0
  %1822 = vmatprep.mubr.bf16.mxu0 0
  %1823 = vmatmul.mubr.bf16.gmra.mrb[0].mxu0 %v1710
  %v1824 = vpop.f32.mrb[0].mxu0
  %v1825 = vadd.f32 %v1733, %v1824
  %v1826 = vpop.f32.mrb[0].mxu0
  %v1827 = vpop.f32.mrb[0].mxu0
  %v1828 = vadd.f32 %v1733, %v1827
  %v1829 = vpop.f32.mrb[0].mxu0
  %1830 = vmatprep.mubr.bf16.mxu0 0
  %1831 = vmatmul.mubr.bf16.gmra.mrb[0].mxu0 %v1711
  %v1832 = vpop.f32.mrb[0].mxu0
  %v1833 = vadd.f32 %v1733, %v1832
  %v1834 = vpop.f32.mrb[0].mxu0
  %v1835 = vpop.f32.mrb[0].mxu0
  %v1836 = vadd.f32 %v1733, %v1835
  %v1837 = vpop.f32.mrb[0].mxu0
  %1838 = vmatprep.mubr.bf16.mxu0 0
  %1839 = vmatmul.mubr.bf16.gmra.mrb[0].mxu0 %v1712
  %v1840 = vpop.f32.mrb[0].mxu0
  %v1841 = vadd.f32 %v1733, %v1840
  %v1842 = vpop.f32.mrb[0].mxu0
  %v1843 = vpop.f32.mrb[0].mxu0
  %v1844 = vadd.f32 %v1733, %v1843
  %v1845 = vpop.f32.mrb[0].mxu0
  %1846 = vmatprep.mubr.bf16.mxu0 0
  %1847 = vmatmul.mubr.bf16.gmra.mrb[0].mxu0 %v1713
  %v1848 = vpop.f32.mrb[0].mxu0
  %v1849 = vadd.f32 %v1733, %v1848
  %v1850 = vpop.f32.mrb[0].mxu0
  %v1851 = vpop.f32.mrb[0].mxu0
  %v1852 = vadd.f32 %v1733, %v1851
  %v1853 = vpop.f32.mrb[0].mxu0
  %1854 = vmatprep.mubr.bf16.mxu0 0
  %1855 = vmatmul.mubr.bf16.gmra.mrb[0].mxu0 %v1714
  %v1856 = vpop.f32.mrb[0].mxu0
  %v1857 = vadd.f32 %v1733, %v1856
  %v1858 = vpop.f32.mrb[0].mxu0
  %v1859 = vpop.f32.mrb[0].mxu0
  %v1860 = vadd.f32 %v1733, %v1859
  %v1861 = vpop.f32.mrb[0].mxu0
  %1862 = vmatprep.mubr.bf16.mxu0 0
  %1863 = vmatmul.mubr.bf16.gmra.mrb[0].mxu0 %v1715
  %v1864 = vpop.f32.mrb[0].mxu0
  %v1865 = vadd.f32 %v1733, %v1864
  %v1866 = vpop.f32.mrb[0].mxu0
  %v1867 = vpop.f32.mrb[0].mxu0
  %v1868 = vadd.f32 %v1733, %v1867
  %v1869 = vpop.f32.mrb[0].mxu0
  %1870 = vmatprep.mubr.bf16.mxu0 0
  %1871 = vmatmul.mubr.bf16.gmra.mrb[0].mxu0 %v1716
  %v1872 = vpop.f32.mrb[0].mxu0
  %v1873 = vadd.f32 %v1733, %v1872
  %v1874 = vpop.f32.mrb[0].mxu0
  %v1875 = vpop.f32.mrb[0].mxu0
  %v1876 = vadd.f32 %v1733, %v1875
  %v1877 = vpop.f32.mrb[0].mxu0
  %1878 = vdwg.mxu0
  %v1879 = vadd.f32 %v1817, %v1820
  %v1880 = vadd.f32 %v1879, %v1825
  %v1881 = vadd.f32 %v1880, %v1828
  %v1882 = vadd.f32 %v1881, %v1833
  %v1883 = vadd.f32 %v1882, %v1836
  %v1884 = vadd.f32 %v1883, %v1841
  %v1885 = vadd.f32 %v1884, %v1844
  %v1886 = vrot.slane %v1885, 4
  %v1887 = vadd.f32 %v1885, %v1886
  %v1888 = vrot.slane %v1887, 2
  %v1889 = vadd.f32 %v1887, %v1888
  %v1890 = vrot.slane %v1889, 1
  %v1891 = vadd.f32 %v1889, %v1890
  %v1892 = vadd.f32 %v1849, %v1852
  %v1893 = vadd.f32 %v1892, %v1857
  %v1894 = vadd.f32 %v1893, %v1860
  %v1895 = vadd.f32 %v1894, %v1865
  %v1896 = vadd.f32 %v1895, %v1868
  %v1897 = vadd.f32 %v1896, %v1873
  %v1898 = vadd.f32 %v1897, %v1876
  %v1899 = vrot.slane %v1898, 4
  %v1900 = vadd.f32 %v1898, %v1899
  %v1901 = vrot.slane %v1900, 2
  %v1902 = vadd.f32 %v1900, %v1901
  %v1903 = vrot.slane %v1902, 1
  %v1904 = vadd.f32 %v1902, %v1903
  %v1905 = vmul.f32 %v1891, 0.015625
  %v1906 = vmul.f32 %v1904, 0.015625
  %v1907 = vsub.f32 %v1817, %v1905
  %v1908 = vsub.f32 %v1820, %v1905
  %v1909 = vsub.f32 %v1825, %v1905
  %v1910 = vsub.f32 %v1828, %v1905
  %v1911 = vsub.f32 %v1833, %v1905
  %v1912 = vsub.f32 %v1836, %v1905
  %v1913 = vsub.f32 %v1841, %v1905
  %v1914 = vsub.f32 %v1844, %v1905
  %v1915 = vsub.f32 %v1849, %v1906
  %v1916 = vsub.f32 %v1852, %v1906
  %v1917 = vsub.f32 %v1857, %v1906
  %v1918 = vsub.f32 %v1860, %v1906
  %v1919 = vsub.f32 %v1865, %v1906
  %v1920 = vsub.f32 %v1868, %v1906
  %v1921 = vsub.f32 %v1873, %v1906
  %v1922 = vsub.f32 %v1876, %v1906
  %v1923 = vmul.f32 %v1907, %v1907
  %v1924 = vmul.f32 %v1908, %v1908
  %v1925 = vmul.f32 %v1909, %v1909
  %v1926 = vmul.f32 %v1910, %v1910
  %v1927 = vmul.f32 %v1911, %v1911
  %v1928 = vmul.f32 %v1912, %v1912
  %v1929 = vmul.f32 %v1913, %v1913
  %v1930 = vmul.f32 %v1914, %v1914
  %v1931 = vmul.f32 %v1915, %v1915
  %v1932 = vmul.f32 %v1916, %v1916
  %v1933 = vmul.f32 %v1917, %v1917
  %v1934 = vmul.f32 %v1918, %v1918
  %v1935 = vmul.f32 %v1919, %v1919
  %v1936 = vmul.f32 %v1920, %v1920
  %v1937 = vmul.f32 %v1921, %v1921
  %v1938 = vmul.f32 %v1922, %v1922
  %v1939 = vadd.f32 %v1923, %v1924
  %v1940 = vadd.f32 %v1939, %v1925
  %v1941 = vadd.f32 %v1940, %v1926
  %v1942 = vadd.f32 %v1941, %v1927
  %v1943 = vadd.f32 %v1942, %v1928
  %v1944 = vadd.f32 %v1943, %v1929
  %v1945 = vadd.f32 %v1944, %v1930
  %v1946 = vrot.slane %v1945, 4
  %v1947 = vadd.f32 %v1945, %v1946
  %v1948 = vrot.slane %v1947, 2
  %v1949 = vadd.f32 %v1947, %v1948
  %v1950 = vrot.slane %v1949, 1
  %v1951 = vadd.f32 %v1949, %v1950
  %v1952 = vadd.f32 %v1931, %v1932
  %v1953 = vadd.f32 %v1952, %v1933
  %v1954 = vadd.f32 %v1953, %v1934
  %v1955 = vadd.f32 %v1954, %v1935
  %v1956 = vadd.f32 %v1955, %v1936
  %v1957 = vadd.f32 %v1956, %v1937
  %v1958 = vadd.f32 %v1957, %v1938
  %v1959 = vrot.slane %v1958, 4
  %v1960 = vadd.f32 %v1958, %v1959
  %v1961 = vrot.slane %v1960, 2
  %v1962 = vadd.f32 %v1960, %v1961
  %v1963 = vrot.slane %v1962, 1
  %v1964 = vadd.f32 %v1962, %v1963
  %v1965 = vmul.f32 %v1951, 0.015625
  %v1966 = vmul.f32 %v1964, 0.015625
  %v1967 = vadd.f32 %v1965, 1e-05
  %v1968 = vadd.f32 %v1966, 1e-05
  %v1969 = vrsqrt.pop %v1967
  %v1970 = vrsqrt.pop %v1968
  %v1971 = vmul.f32 %v1907, %v1969
  %v1972 = vmul.f32 %v1908, %v1969
  %v1973 = vmul.f32 %v1909, %v1969
  %v1974 = vmul.f32 %v1910, %v1969
  %v1975 = vmul.f32 %v1911, %v1969
  %v1976 = vmul.f32 %v1912, %v1969
  %v1977 = vmul.f32 %v1913, %v1969
  %v1978 = vmul.f32 %v1914, %v1969
  %v1979 = vmul.f32 %v1915, %v1970
  %v1980 = vmul.f32 %v1916, %v1970
  %v1981 = vmul.f32 %v1917, %v1970
  %v1982 = vmul.f32 %v1918, %v1970
  %v1983 = vmul.f32 %v1919, %v1970
  %v1984 = vmul.f32 %v1920, %v1970
  %v1985 = vmul.f32 %v1921, %v1970
  %v1986 = vmul.f32 %v1922, %v1970
  %v1987 = vmul.f32 %v1971, 0.5
  %v1988 = vmul.f32 %v1972, 0.5
  %v1989 = vmul.f32 %v1973, 0.5
  %v1990 = vmul.f32 %v1974, 0.5
  %v1991 = vmul.f32 %v1975, 0.5
  %v1992 = vmul.f32 %v1976, 0.5
  %v1993 = vmul.f32 %v1977, 0.5
  %v1994 = vmul.f32 %v1978, 0.5
  %v1995 = vmul.f32 %v1979, 0.5
  %v1996 = vmul.f32 %v1980, 0.5
  %v1997 = vmul.f32 %v1981, 0.5
  %v1998 = vmul.f32 %v1982, 0.5
  %v1999 = vmul.f32 %v1983, 0.5
  %v2000 = vmul.f32 %v1984, 0.5
  %v2001 = vmul.f32 %v1985, 0.5
  %v2002 = vmul.f32 %v1986, 0.5
  %v2003 = vmul.f32 %v1971, 0.70710677
  %v2004 = vmul.f32 %v1972, 0.70710677
  %v2005 = vmul.f32 %v1973, 0.70710677
  %v2006 = vmul.f32 %v1974, 0.70710677
  %v2007 = vmul.f32 %v1975, 0.70710677
  %v2008 = vmul.f32 %v1976, 0.70710677
  %v2009 = vmul.f32 %v1977, 0.70710677
  %v2010 = vmul.f32 %v1978, 0.70710677
  %v2011 = vmul.f32 %v1979, 0.70710677
  %v2012 = vmul.f32 %v1980, 0.70710677
  %v2013 = vmul.f32 %v1981, 0.70710677
  %v2014 = vmul.f32 %v1982, 0.70710677
  %v2015 = vmul.f32 %v1983, 0.70710677
  %v2016 = vmul.f32 %v1984, 0.70710677
  %v2017 = vmul.f32 %v1985, 0.70710677
  %v2018 = vmul.f32 %v1986, 0.70710677
  %v2019 = verf.f32.pop %v2003
  %v2020 = verf.f32.pop %v2004
  %v2021 = verf.f32.pop %v2005
  %v2022 = verf.f32.pop %v2006
  %v2023 = verf.f32.pop %v2007
  %v2024 = verf.f32.pop %v2008
  %v2025 = verf.f32.pop %v2009
  %v2026 = verf.f32.pop %v2010
  %v2027 = verf.f32.pop %v2011
  %v2028 = verf.f32.pop %v2012
  %v2029 = verf.f32.pop %v2013
  %v2030 = verf.f32.pop %v2014
  %v2031 = verf.f32.pop %v2015
  %v2032 = verf.f32.pop %v2016
  %v2033 = verf.f32.pop %v2017
  %v2034 = verf.f32.pop %v2018
  %v2035 = vadd.f32 %v2019, 1.0
  %v2036 = vadd.f32 %v2020, 1.0
  %v2037 = vadd.f32 %v2021, 1.0
  %v2038 = vadd.f32 %v2022, 1.0
  %v2039 = vadd.f32 %v2023, 1.0
  %v2040 = vadd.f32 %v2024, 1.0
  %v2041 = vadd.f32 %v2025, 1.0
  %v2042 = vadd.f32 %v2026, 1.0
  %v2043 = vadd.f32 %v2027, 1.0
  %v2044 = vadd.f32 %v2028, 1.0
  %v2045 = vadd.f32 %v2029, 1.0
  %v2046 = vadd.f32 %v2030, 1.0
  %v2047 = vadd.f32 %v2031, 1.0
  %v2048 = vadd.f32 %v2032, 1.0
  %v2049 = vadd.f32 %v2033, 1.0
  %v2050 = vadd.f32 %v2034, 1.0
  %v2051 = vmul.f32 %v1987, %v2035
  %v2052 = vmul.f32 %v1988, %v2036
  %v2053 = vmul.f32 %v1989, %v2037
  %v2054 = vmul.f32 %v1990, %v2038
  %v2055 = vmul.f32 %v1991, %v2039
  %v2056 = vmul.f32 %v1992, %v2040
  %v2057 = vmul.f32 %v1993, %v2041
  %v2058 = vmul.f32 %v1994, %v2042
  %v2059 = vmul.f32 %v1995, %v2043
  %v2060 = vmul.f32 %v1996, %v2044
  %v2061 = vmul.f32 %v1997, %v2045
  %v2062 = vmul.f32 %v1998, %v2046
  %v2063 = vmul.f32 %v1999, %v2047
  %v2064 = vmul.f32 %v2000, %v2048
  %v2065 = vmul.f32 %v2001, %v2049
  %v2066 = vmul.f32 %v2002, %v2050
  %v2067 = vpack.c.bf16 %v2052, %v2051
  %v2068 = vpack.c.bf16 %v2054, %v2053
  %v2069 = vpack.c.bf16 %v2056, %v2055
  %v2070 = vpack.c.bf16 %v2058, %v2057
  %v2071 = vpack.c.bf16 %v2060, %v2059
  %v2072 = vpack.c.bf16 %v2062, %v2061
  %v2073 = vpack.c.bf16 %v2064, %v2063
  %v2074 = vpack.c.bf16 %v2066, %v2065
  %v2075 = vld [vmem:[%s6] sm:$0xf]
  %v2076 = vld [vmem:[%s6 + $0x4] sm:$0xf]
  %v2077 = vld [vmem:[%s6 + $0x8] sm:$0xf]
  %v2078 = vld [vmem:[%s6 + $0xc] sm:$0xf]
  %v2079 = vld [vmem:[%s6 + $0x10] sm:$0xf]
  %v2080 = vld [vmem:[%s6 + $0x14] sm:$0xf]
  %v2081 = vld [vmem:[%s6 + $0x18] sm:$0xf]
  %v2082 = vld [vmem:[%s6 + $0x1c] sm:$0xf]
  %v2083 = vld [vmem:[%s6 + $0x20] sm:$0xf]
  %v2084 = vld [vmem:[%s6 + $0x24] sm:$0xf]
  %v2085 = vld [vmem:[%s6 + $0x28] sm:$0xf]
  %v2086 = vld [vmem:[%s6 + $0x2c] sm:$0xf]
  %v2087 = vld [vmem:[%s6 + $0x30] sm:$0xf]
  %v2088 = vld [vmem:[%s6 + $0x34] sm:$0xf]
  %v2089 = vld [vmem:[%s6 + $0x38] sm:$0xf]
  %v2090 = vld [vmem:[%s6 + $0x3c] sm:$0xf]
  %v2091 = vld [vmem:[%s18 + $0x5] ss:$0 sm:$0xff]
  %v2108 = vunpack.c.l.b16 %v2075
  %v2109 = vunpack.c.l.b16 %v2076
  %v2110 = vunpack.c.l.b16 %v2077
  %v2111 = vunpack.c.l.b16 %v2078
  %v2112 = vunpack.c.l.b16 %v2079
  %v2113 = vunpack.c.l.b16 %v2080
  %v2114 = vunpack.c.l.b16 %v2081
  %v2115 = vunpack.c.l.b16 %v2082
  %v2116 = vunpack.c.l.b16 %v2083
  %v2117 = vunpack.c.l.b16 %v2084
  %v2118 = vunpack.c.l.b16 %v2085
  %v2119 = vunpack.c.l.b16 %v2086
  %v2120 = vunpack.c.l.b16 %v2087
  %v2121 = vunpack.c.l.b16 %v2088
  %v2122 = vunpack.c.l.b16 %v2089
  %v2123 = vunpack.c.l.b16 %v2090
  %v2124 = vpack.c.b16 %v2109, %v2108
  %v2125 = vpack.c.b16 %v2111, %v2110
  %v2126 = vpack.c.b16 %v2113, %v2112
  %v2127 = vpack.c.b16 %v2115, %v2114
  %v2128 = vpack.c.b16 %v2117, %v2116
  %v2129 = vpack.c.b16 %v2119, %v2118
  %v2130 = vpack.c.b16 %v2121, %v2120
  %v2131 = vpack.c.b16 %v2123, %v2122
  %2140 = vmatprep.subr.bf16.mxu0 0
  %2141 = vmatpush1.bf16.msra.mxu0 %v2124
  %2142 = vmatprep.subr.bf16.mxu0 0
  %2143 = vmatpush1.bf16.msra.mxu0 %v2125
  %2144 = vmatprep.subr.bf16.mxu0 0
  %2145 = vmatpush1.bf16.msra.mxu0 %v2126
  %2146 = vmatprep.subr.bf16.mxu0 0
  %2147 = vmatpush1.bf16.msra.mxu0 %v2127
  %2148 = vmatprep.subr.bf16.mxu0 0
  %2149 = vmatpush1.bf16.msra.mxu0 %v2128
  %2150 = vmatprep.subr.bf16.mxu0 0
  %2151 = vmatpush1.bf16.msra.mxu0 %v2129
  %2152 = vmatprep.subr.bf16.mxu0 0
  %2153 = vmatpush1.bf16.msra.mxu0 %v2130
  %2154 = vmatprep.subr.bf16.mxu0 0
  %2155 = vmatpush1.bf16.msra.mxu0 %v2131
  %2156 = vmatprep.subr.bf16.mxu0 0
  %2157 = vmatpush1.bf16.msra.mxu0 0
  %2158 = vmatprep.subr.bf16.mxu0 0
  %2159 = vmatpush1.bf16.msra.mxu0 0
  %2160 = vmatprep.subr.bf16.mxu0 0
  %2161 = vmatpush1.bf16.msra.mxu0 0
  %2162 = vmatprep.subr.bf16.mxu0 0
  %2163 = vmatpush1.bf16.msra.mxu0 0
  %2164 = vmatprep.subr.bf16.mxu0 0
  %2165 = vmatpush1.bf16.msra.mxu0 0
  %2166 = vmatprep.subr.bf16.mxu0 0
  %2167 = vmatpush1.bf16.msra.mxu0 0
  %2168 = vmatprep.subr.bf16.mxu0 0
  %2169 = vmatpush1.bf16.msra.mxu0 0
  %2170 = vmatprep.subr.bf16.mxu0 0
  %2171 = vmatpush1.bf16.msra.mxu0 0
  %2172 = vmatprep.mubr.bf16.mxu0 0
  %2173 = vmatmul.mubr.bf16.gmra.mrb[0].mxu0 %v2067
  %v2174 = vpop.f32.mrb[0].mxu0
  %v2175 = vadd.f32 %v2091, %v2174
  %v2176 = vpop.f32.mrb[0].mxu0
  %v2177 = vpop.f32.mrb[0].mxu0
  %v2178 = vadd.f32 %v2091, %v2177
  %v2179 = vpop.f32.mrb[0].mxu0
  %2180 = vmatprep.mubr.bf16.mxu0 0
  %2181 = vmatmul.mubr.bf16.gmra.mrb[0].mxu0 %v2068
  %v2182 = vpop.f32.mrb[0].mxu0
  %v2183 = vadd.f32 %v2091, %v2182
  %v2184 = vpop.f32.mrb[0].mxu0
  %v2185 = vpop.f32.mrb[0].mxu0
  %v2186 = vadd.f32 %v2091, %v2185
  %v2187 = vpop.f32.mrb[0].mxu0
  %2188 = vmatprep.mubr.bf16.mxu0 0
  %2189 = vmatmul.mubr.bf16.gmra.mrb[0].mxu0 %v2069
  %v2190 = vpop.f32.mrb[0].mxu0
  %v2191 = vadd.f32 %v2091, %v2190
  %v2192 = vpop.f32.mrb[0].mxu0
  %v2193 = vpop.f32.mrb[0].mxu0
  %v2194 = vadd.f32 %v2091, %v2193
  %v2195 = vpop.f32.mrb[0].mxu0
  %2196 = vmatprep.mubr.bf16.mxu0 0
  %2197 = vmatmul.mubr.bf16.gmra.mrb[0].mxu0 %v2070
  %v2198 = vpop.f32.mrb[0].mxu0
  %v2199 = vadd.f32 %v2091, %v2198
  %v2200 = vpop.f32.mrb[0].mxu0
  %v2201 = vpop.f32.mrb[0].mxu0
  %v2202 = vadd.f32 %v2091, %v2201
  %v2203 = vpop.f32.mrb[0].mxu0
  %2204 = vmatprep.mubr.bf16.mxu0 0
  %2205 = vmatmul.mubr.bf16.gmra.mrb[0].mxu0 %v2071
  %v2206 = vpop.f32.mrb[0].mxu0
  %v2207 = vadd.f32 %v2091, %v2206
  %v2208 = vpop.f32.mrb[0].mxu0
  %v2209 = vpop.f32.mrb[0].mxu0
  %v2210 = vadd.f32 %v2091, %v2209
  %v2211 = vpop.f32.mrb[0].mxu0
  %2212 = vmatprep.mubr.bf16.mxu0 0
  %2213 = vmatmul.mubr.bf16.gmra.mrb[0].mxu0 %v2072
  %v2214 = vpop.f32.mrb[0].mxu0
  %v2215 = vadd.f32 %v2091, %v2214
  %v2216 = vpop.f32.mrb[0].mxu0
  %v2217 = vpop.f32.mrb[0].mxu0
  %v2218 = vadd.f32 %v2091, %v2217
  %v2219 = vpop.f32.mrb[0].mxu0
  %2220 = vmatprep.mubr.bf16.mxu0 0
  %2221 = vmatmul.mubr.bf16.gmra.mrb[0].mxu0 %v2073
  %v2222 = vpop.f32.mrb[0].mxu0
  %v2223 = vadd.f32 %v2091, %v2222
  %v2224 = vpop.f32.mrb[0].mxu0
  %v2225 = vpop.f32.mrb[0].mxu0
  %v2226 = vadd.f32 %v2091, %v2225
  %v2227 = vpop.f32.mrb[0].mxu0
  %2228 = vmatprep.mubr.bf16.mxu0 0
  %2229 = vmatmul.mubr.bf16.gmra.mrb[0].mxu0 %v2074
  %v2230 = vpop.f32.mrb[0].mxu0
  %v2231 = vadd.f32 %v2091, %v2230
  %v2232 = vpop.f32.mrb[0].mxu0
  %v2233 = vpop.f32.mrb[0].mxu0
  %v2234 = vadd.f32 %v2091, %v2233
  %v2235 = vpop.f32.mrb[0].mxu0
  %2236 = vdwg.mxu0
  %v2237 = vpack.c.bf16 %v2178, %v2175
  %v2238 = vpack.c.bf16 %v2186, %v2183
  %v2239 = vpack.c.bf16 %v2194, %v2191
  %v2240 = vpack.c.bf16 %v2202, %v2199
  %v2241 = vpack.c.bf16 %v2210, %v2207
  %v2242 = vpack.c.bf16 %v2218, %v2215
  %v2243 = vpack.c.bf16 %v2226, %v2223
  %v2244 = vpack.c.bf16 %v2234, %v2231
  %v2245 = vld [vmem:[%s7] sm:$0xf]
  %v2246 = vld [vmem:[%s7 + $0x4] sm:$0xf]
  %v2247 = vld [vmem:[%s7 + $0x8] sm:$0xf]
  %v2248 = vld [vmem:[%s7 + $0xc] sm:$0xf]
  %v2249 = vld [vmem:[%s18 + $0x6] ss:$0 sm:$0xff]
  %v2254 = vunpack.c.l.b16 %v2245
  %v2255 = vunpack.c.l.b16 %v2246
  %v2256 = vunpack.c.l.b16 %v2247
  %v2257 = vunpack.c.l.b16 %v2248
  %v2258 = vpack.c.b16 %v2255, %v2254
  %v2259 = vpack.c.b16 %v2257, %v2256
  %vm2262 = vcmask 261120
  %v2264 = vsel %vm2262, %v2237, 0
  %v2267 = vsel %vm2262, %v2238, 0
  %v2270 = vsel %vm2262, %v2239, 0
  %v2273 = vsel %vm2262, %v2240, 0
  %v2276 = vsel %vm2262, %v2241, 0
  %v2279 = vsel %vm2262, %v2242, 0
  %v2282 = vsel %vm2262, %v2243, 0
  %v2285 = vsel %vm2262, %v2244, 0
  %2287 = vmatprep.subr.bf16.mxu0 0
  %2288 = vmatpush1.bf16.msra.mxu0 %v2258
  %2289 = vmatprep.subr.bf16.mxu0 0
  %2290 = vmatpush1.bf16.msra.mxu0 %v2259
  %2291 = vmatprep.subr.bf16.mxu0 0
  %2292 = vmatpush1.bf16.msra.mxu0 0
  %2293 = vmatprep.subr.bf16.mxu0 0
  %2294 = vmatpush1.bf16.msra.mxu0 0
  %2295 = vmatprep.subr.bf16.mxu0 0
  %2296 = vmatpush1.bf16.msra.mxu0 0
  %2297 = vmatprep.subr.bf16.mxu0 0
  %2298 = vmatpush1.bf16.msra.mxu0 0
  %2299 = vmatprep.subr.bf16.mxu0 0
  %2300 = vmatpush1.bf16.msra.mxu0 0
  %2301 = vmatprep.subr.bf16.mxu0 0
  %2302 = vmatpush1.bf16.msra.mxu0 0
  %2303 = vmatprep.subr.bf16.mxu0 0
  %2304 = vmatpush1.bf16.msra.mxu0 0
  %2305 = vmatprep.subr.bf16.mxu0 0
  %2306 = vmatpush1.bf16.msra.mxu0 0
  %2307 = vmatprep.subr.bf16.mxu0 0
  %2308 = vmatpush1.bf16.msra.mxu0 0
  %2309 = vmatprep.subr.bf16.mxu0 0
  %2310 = vmatpush1.bf16.msra.mxu0 0
  %2311 = vmatprep.subr.bf16.mxu0 0
  %2312 = vmatpush1.bf16.msra.mxu0 0
  %2313 = vmatprep.subr.bf16.mxu0 0
  %2314 = vmatpush1.bf16.msra.mxu0 0
  %2315 = vmatprep.subr.bf16.mxu0 0
  %2316 = vmatpush1.bf16.msra.mxu0 0
  %2317 = vmatprep.subr.bf16.mxu0 0
  %2318 = vmatpush1.bf16.msra.mxu0 0
  %2319 = vmatprep.mubr.bf16.mxu0 0
  %2320 = vmatmul.mubr.bf16.gmra.mrb[0].mxu0 %v2264
  %v2321 = vpop.f32.mrb[0].mxu0
  %v2322 = vadd.f32 %v2249, %v2321
  %v2323 = vpop.f32.mrb[0].mxu0
  %v2324 = vpop.f32.mrb[0].mxu0
  %v2325 = vadd.f32 %v2249, %v2324
  %v2326 = vpop.f32.mrb[0].mxu0
  %2327 = vmatprep.mubr.bf16.mxu0 0
  %2328 = vmatmul.mubr.bf16.gmra.mrb[0].mxu0 %v2267
  %v2329 = vpop.f32.mrb[0].mxu0
  %v2330 = vadd.f32 %v2249, %v2329
  %v2331 = vpop.f32.mrb[0].mxu0
  %v2332 = vpop.f32.mrb[0].mxu0
  %v2333 = vadd.f32 %v2249, %v2332
  %v2334 = vpop.f32.mrb[0].mxu0
  %2335 = vmatprep.mubr.bf16.mxu0 0
  %2336 = vmatmul.mubr.bf16.gmra.mrb[0].mxu0 %v2270
  %v2337 = vpop.f32.mrb[0].mxu0
  %v2338 = vadd.f32 %v2249, %v2337
  %v2339 = vpop.f32.mrb[0].mxu0
  %v2340 = vpop.f32.mrb[0].mxu0
  %v2341 = vadd.f32 %v2249, %v2340
  %v2342 = vpop.f32.mrb[0].mxu0
  %2343 = vmatprep.mubr.bf16.mxu0 0
  %2344 = vmatmul.mubr.bf16.gmra.mrb[0].mxu0 %v2273
  %v2345 = vpop.f32.mrb[0].mxu0
  %v2346 = vadd.f32 %v2249, %v2345
  %v2347 = vpop.f32.mrb[0].mxu0
  %v2348 = vpop.f32.mrb[0].mxu0
  %v2349 = vadd.f32 %v2249, %v2348
  %v2350 = vpop.f32.mrb[0].mxu0
  %2351 = vmatprep.mubr.bf16.mxu0 0
  %2352 = vmatmul.mubr.bf16.gmra.mrb[0].mxu0 %v2276
  %v2353 = vpop.f32.mrb[0].mxu0
  %v2354 = vadd.f32 %v2249, %v2353
  %v2355 = vpop.f32.mrb[0].mxu0
  %v2356 = vpop.f32.mrb[0].mxu0
  %v2357 = vadd.f32 %v2249, %v2356
  %v2358 = vpop.f32.mrb[0].mxu0
  %2359 = vmatprep.mubr.bf16.mxu0 0
  %2360 = vmatmul.mubr.bf16.gmra.mrb[0].mxu0 %v2279
  %v2361 = vpop.f32.mrb[0].mxu0
  %v2362 = vadd.f32 %v2249, %v2361
  %v2363 = vpop.f32.mrb[0].mxu0
  %v2364 = vpop.f32.mrb[0].mxu0
  %v2365 = vadd.f32 %v2249, %v2364
  %v2366 = vpop.f32.mrb[0].mxu0
  %2367 = vmatprep.mubr.bf16.mxu0 0
  %2368 = vmatmul.mubr.bf16.gmra.mrb[0].mxu0 %v2282
  %v2369 = vpop.f32.mrb[0].mxu0
  %v2370 = vadd.f32 %v2249, %v2369
  %v2371 = vpop.f32.mrb[0].mxu0
  %v2372 = vpop.f32.mrb[0].mxu0
  %v2373 = vadd.f32 %v2249, %v2372
  %v2374 = vpop.f32.mrb[0].mxu0
  %2375 = vmatprep.mubr.bf16.mxu0 0
  %2376 = vmatmul.mubr.bf16.gmra.mrb[0].mxu0 %v2285
  %v2377 = vpop.f32.mrb[0].mxu0
  %v2378 = vadd.f32 %v2249, %v2377
  %v2379 = vpop.f32.mrb[0].mxu0
  %v2380 = vpop.f32.mrb[0].mxu0
  %v2381 = vadd.f32 %v2249, %v2380
  %v2382 = vpop.f32.mrb[0].mxu0
  %2383 = vdwg.mxu0
  %v2384 = vsel %vm1399, %v2322, 0.0
  %v2385 = vsel %vm1399, %v2325, 0.0
  %v2386 = vadd.f32 %v2384, %v2385
  %v2387 = vsel %vm1399, %v2330, 0.0
  %v2388 = vadd.f32 %v2386, %v2387
  %v2389 = vsel %vm1399, %v2333, 0.0
  %v2390 = vadd.f32 %v2388, %v2389
  %v2391 = vsel %vm1399, %v2338, 0.0
  %v2392 = vadd.f32 %v2390, %v2391
  %v2393 = vsel %vm1399, %v2341, 0.0
  %v2394 = vadd.f32 %v2392, %v2393
  %v2395 = vsel %vm1399, %v2346, 0.0
  %v2396 = vadd.f32 %v2394, %v2395
  %v2397 = vsel %vm1399, %v2349, 0.0
  %v2398 = vadd.f32 %v2396, %v2397
  %v2399 = vrot.slane %v2398, 4
  %v2400 = vadd.f32 %v2398, %v2399
  %v2401 = vrot.slane %v2400, 2
  %v2402 = vadd.f32 %v2400, %v2401
  %v2403 = vrot.slane %v2402, 1
  %v2404 = vadd.f32 %v2402, %v2403
  %v2405 = vsel %vm1399, %v2354, 0.0
  %v2406 = vsel %vm1399, %v2357, 0.0
  %v2407 = vadd.f32 %v2405, %v2406
  %v2408 = vsel %vm1399, %v2362, 0.0
  %v2409 = vadd.f32 %v2407, %v2408
  %v2410 = vsel %vm1399, %v2365, 0.0
  %v2411 = vadd.f32 %v2409, %v2410
  %v2412 = vsel %vm1399, %v2370, 0.0
  %v2413 = vadd.f32 %v2411, %v2412
  %v2414 = vsel %vm1399, %v2373, 0.0
  %v2415 = vadd.f32 %v2413, %v2414
  %v2416 = vsel %vm1399, %v2378, 0.0
  %v2417 = vadd.f32 %v2415, %v2416
  %v2418 = vsel %vm1399, %v2381, 0.0
  %v2419 = vadd.f32 %v2417, %v2418
  %v2420 = vrot.slane %v2419, 4
  %v2421 = vadd.f32 %v2419, %v2420
  %v2422 = vrot.slane %v2421, 2
  %v2423 = vadd.f32 %v2421, %v2422
  %v2424 = vrot.slane %v2423, 1
  %v2425 = vadd.f32 %v2423, %v2424
  %v2426 = vmul.f32 %v2404, 0.015625
  %v2427 = vmul.f32 %v2425, 0.015625
  %v2428 = vsub.f32 %v2322, %v2426
  %v2429 = vsub.f32 %v2325, %v2426
  %v2430 = vsub.f32 %v2330, %v2426
  %v2431 = vsub.f32 %v2333, %v2426
  %v2432 = vsub.f32 %v2338, %v2426
  %v2433 = vsub.f32 %v2341, %v2426
  %v2434 = vsub.f32 %v2346, %v2426
  %v2435 = vsub.f32 %v2349, %v2426
  %v2436 = vsub.f32 %v2354, %v2427
  %v2437 = vsub.f32 %v2357, %v2427
  %v2438 = vsub.f32 %v2362, %v2427
  %v2439 = vsub.f32 %v2365, %v2427
  %v2440 = vsub.f32 %v2370, %v2427
  %v2441 = vsub.f32 %v2373, %v2427
  %v2442 = vsub.f32 %v2378, %v2427
  %v2443 = vsub.f32 %v2381, %v2427
  %v2444 = vmul.f32 %v2428, %v2428
  %v2445 = vmul.f32 %v2429, %v2429
  %v2446 = vmul.f32 %v2430, %v2430
  %v2447 = vmul.f32 %v2431, %v2431
  %v2448 = vmul.f32 %v2432, %v2432
  %v2449 = vmul.f32 %v2433, %v2433
  %v2450 = vmul.f32 %v2434, %v2434
  %v2451 = vmul.f32 %v2435, %v2435
  %v2452 = vmul.f32 %v2436, %v2436
  %v2453 = vmul.f32 %v2437, %v2437
  %v2454 = vmul.f32 %v2438, %v2438
  %v2455 = vmul.f32 %v2439, %v2439
  %v2456 = vmul.f32 %v2440, %v2440
  %v2457 = vmul.f32 %v2441, %v2441
  %v2458 = vmul.f32 %v2442, %v2442
  %v2459 = vmul.f32 %v2443, %v2443
  %v2460 = vsel %vm1399, %v2444, 0.0
  %v2461 = vsel %vm1399, %v2445, 0.0
  %v2462 = vadd.f32 %v2460, %v2461
  %v2463 = vsel %vm1399, %v2446, 0.0
  %v2464 = vadd.f32 %v2462, %v2463
  %v2465 = vsel %vm1399, %v2447, 0.0
  %v2466 = vadd.f32 %v2464, %v2465
  %v2467 = vsel %vm1399, %v2448, 0.0
  %v2468 = vadd.f32 %v2466, %v2467
  %v2469 = vsel %vm1399, %v2449, 0.0
  %v2470 = vadd.f32 %v2468, %v2469
  %v2471 = vsel %vm1399, %v2450, 0.0
  %v2472 = vadd.f32 %v2470, %v2471
  %v2473 = vsel %vm1399, %v2451, 0.0
  %v2474 = vadd.f32 %v2472, %v2473
  %v2475 = vrot.slane %v2474, 4
  %v2476 = vadd.f32 %v2474, %v2475
  %v2477 = vrot.slane %v2476, 2
  %v2478 = vadd.f32 %v2476, %v2477
  %v2479 = vrot.slane %v2478, 1
  %v2480 = vadd.f32 %v2478, %v2479
  %v2481 = vsel %vm1399, %v2452, 0.0
  %v2482 = vsel %vm1399, %v2453, 0.0
  %v2483 = vadd.f32 %v2481, %v2482
  %v2484 = vsel %vm1399, %v2454, 0.0
  %v2485 = vadd.f32 %v2483, %v2484
  %v2486 = vsel %vm1399, %v2455, 0.0
  %v2487 = vadd.f32 %v2485, %v2486
  %v2488 = vsel %vm1399, %v2456, 0.0
  %v2489 = vadd.f32 %v2487, %v2488
  %v2490 = vsel %vm1399, %v2457, 0.0
  %v2491 = vadd.f32 %v2489, %v2490
  %v2492 = vsel %vm1399, %v2458, 0.0
  %v2493 = vadd.f32 %v2491, %v2492
  %v2494 = vsel %vm1399, %v2459, 0.0
  %v2495 = vadd.f32 %v2493, %v2494
  %v2496 = vrot.slane %v2495, 4
  %v2497 = vadd.f32 %v2495, %v2496
  %v2498 = vrot.slane %v2497, 2
  %v2499 = vadd.f32 %v2497, %v2498
  %v2500 = vrot.slane %v2499, 1
  %v2501 = vadd.f32 %v2499, %v2500
  %v2502 = vmul.f32 %v2480, 0.015625
  %v2503 = vmul.f32 %v2501, 0.015625
  %v2504 = vadd.f32 %v2502, 1e-05
  %v2505 = vadd.f32 %v2503, 1e-05
  %v2506 = vrsqrt.pop %v2504
  %v2507 = vrsqrt.pop %v2505
  %v2508 = vmul.f32 %v2428, %v2506
  %v2509 = vmul.f32 %v2429, %v2506
  %v2510 = vmul.f32 %v2430, %v2506
  %v2511 = vmul.f32 %v2431, %v2506
  %v2512 = vmul.f32 %v2432, %v2506
  %v2513 = vmul.f32 %v2433, %v2506
  %v2514 = vmul.f32 %v2434, %v2506
  %v2515 = vmul.f32 %v2435, %v2506
  %v2516 = vmul.f32 %v2436, %v2507
  %v2517 = vmul.f32 %v2437, %v2507
  %v2518 = vmul.f32 %v2438, %v2507
  %v2519 = vmul.f32 %v2439, %v2507
  %v2520 = vmul.f32 %v2440, %v2507
  %v2521 = vmul.f32 %v2441, %v2507
  %v2522 = vmul.f32 %v2442, %v2507
  %v2523 = vmul.f32 %v2443, %v2507
  %v2524 = vmul.f32 %v2508, 0.5
  %v2525 = vmul.f32 %v2509, 0.5
  %v2526 = vmul.f32 %v2510, 0.5
  %v2527 = vmul.f32 %v2511, 0.5
  %v2528 = vmul.f32 %v2512, 0.5
  %v2529 = vmul.f32 %v2513, 0.5
  %v2530 = vmul.f32 %v2514, 0.5
  %v2531 = vmul.f32 %v2515, 0.5
  %v2532 = vmul.f32 %v2516, 0.5
  %v2533 = vmul.f32 %v2517, 0.5
  %v2534 = vmul.f32 %v2518, 0.5
  %v2535 = vmul.f32 %v2519, 0.5
  %v2536 = vmul.f32 %v2520, 0.5
  %v2537 = vmul.f32 %v2521, 0.5
  %v2538 = vmul.f32 %v2522, 0.5
  %v2539 = vmul.f32 %v2523, 0.5
  %v2540 = vmul.f32 %v2508, 0.70710677
  %v2541 = vmul.f32 %v2509, 0.70710677
  %v2542 = vmul.f32 %v2510, 0.70710677
  %v2543 = vmul.f32 %v2511, 0.70710677
  %v2544 = vmul.f32 %v2512, 0.70710677
  %v2545 = vmul.f32 %v2513, 0.70710677
  %v2546 = vmul.f32 %v2514, 0.70710677
  %v2547 = vmul.f32 %v2515, 0.70710677
  %v2548 = vmul.f32 %v2516, 0.70710677
  %v2549 = vmul.f32 %v2517, 0.70710677
  %v2550 = vmul.f32 %v2518, 0.70710677
  %v2551 = vmul.f32 %v2519, 0.70710677
  %v2552 = vmul.f32 %v2520, 0.70710677
  %v2553 = vmul.f32 %v2521, 0.70710677
  %v2554 = vmul.f32 %v2522, 0.70710677
  %v2555 = vmul.f32 %v2523, 0.70710677
  %v2556 = verf.f32.pop %v2540
  %v2557 = verf.f32.pop %v2541
  %v2558 = verf.f32.pop %v2542
  %v2559 = verf.f32.pop %v2543
  %v2560 = verf.f32.pop %v2544
  %v2561 = verf.f32.pop %v2545
  %v2562 = verf.f32.pop %v2546
  %v2563 = verf.f32.pop %v2547
  %v2564 = verf.f32.pop %v2548
  %v2565 = verf.f32.pop %v2549
  %v2566 = verf.f32.pop %v2550
  %v2567 = verf.f32.pop %v2551
  %v2568 = verf.f32.pop %v2552
  %v2569 = verf.f32.pop %v2553
  %v2570 = verf.f32.pop %v2554
  %v2571 = verf.f32.pop %v2555
  %v2572 = vadd.f32 %v2556, 1.0
  %v2573 = vadd.f32 %v2557, 1.0
  %v2574 = vadd.f32 %v2558, 1.0
  %v2575 = vadd.f32 %v2559, 1.0
  %v2576 = vadd.f32 %v2560, 1.0
  %v2577 = vadd.f32 %v2561, 1.0
  %v2578 = vadd.f32 %v2562, 1.0
  %v2579 = vadd.f32 %v2563, 1.0
  %v2580 = vadd.f32 %v2564, 1.0
  %v2581 = vadd.f32 %v2565, 1.0
  %v2582 = vadd.f32 %v2566, 1.0
  %v2583 = vadd.f32 %v2567, 1.0
  %v2584 = vadd.f32 %v2568, 1.0
  %v2585 = vadd.f32 %v2569, 1.0
  %v2586 = vadd.f32 %v2570, 1.0
  %v2587 = vadd.f32 %v2571, 1.0
  %v2588 = vmul.f32 %v2524, %v2572
  %v2589 = vmul.f32 %v2525, %v2573
  %v2590 = vmul.f32 %v2526, %v2574
  %v2591 = vmul.f32 %v2527, %v2575
  %v2592 = vmul.f32 %v2528, %v2576
  %v2593 = vmul.f32 %v2529, %v2577
  %v2594 = vmul.f32 %v2530, %v2578
  %v2595 = vmul.f32 %v2531, %v2579
  %v2596 = vmul.f32 %v2532, %v2580
  %v2597 = vmul.f32 %v2533, %v2581
  %v2598 = vmul.f32 %v2534, %v2582
  %v2599 = vmul.f32 %v2535, %v2583
  %v2600 = vmul.f32 %v2536, %v2584
  %v2601 = vmul.f32 %v2537, %v2585
  %v2602 = vmul.f32 %v2538, %v2586
  %v2603 = vmul.f32 %v2539, %v2587
  %v2604 = vpack.c.bf16 %v2589, %v2588
  %v2605 = vpack.c.bf16 %v2591, %v2590
  %v2606 = vpack.c.bf16 %v2593, %v2592
  %v2607 = vpack.c.bf16 %v2595, %v2594
  %v2608 = vpack.c.bf16 %v2597, %v2596
  %v2609 = vpack.c.bf16 %v2599, %v2598
  %v2610 = vpack.c.bf16 %v2601, %v2600
  %v2611 = vpack.c.bf16 %v2603, %v2602
  %v2612 = vld [vmem:[%s8] sm:$0xf]
  %v2613 = vld [vmem:[%s8 + $0x4] sm:$0xf]
  %v2614 = vld [vmem:[%s8 + $0x8] sm:$0xf]
  %v2615 = vld [vmem:[%s8 + $0xc] sm:$0xf]
  %v2616 = vld [vmem:[%s8 + $0x10] sm:$0xf]
  %v2617 = vld [vmem:[%s8 + $0x14] sm:$0xf]
  %v2618 = vld [vmem:[%s8 + $0x18] sm:$0xf]
  %v2619 = vld [vmem:[%s8 + $0x1c] sm:$0xf]
  %v2620 = vld [vmem:[%s18 + $0x7] ss:$0 sm:$0xff]
  %v2629 = vunpack.c.l.b16 %v2612
  %v2630 = vunpack.c.l.b16 %v2613
  %v2631 = vunpack.c.l.b16 %v2614
  %v2632 = vunpack.c.l.b16 %v2615
  %v2633 = vunpack.c.l.b16 %v2616
  %v2634 = vunpack.c.l.b16 %v2617
  %v2635 = vunpack.c.l.b16 %v2618
  %v2636 = vunpack.c.l.b16 %v2619
  %v2637 = vpack.c.b16 %v2630, %v2629
  %v2638 = vpack.c.b16 %v2632, %v2631
  %v2639 = vpack.c.b16 %v2634, %v2633
  %v2640 = vpack.c.b16 %v2636, %v2635
  %v2646 = vsel %vm1399, %v2604, 0
  %v2649 = vsel %vm1399, %v2605, 0
  %v2652 = vsel %vm1399, %v2606, 0
  %v2655 = vsel %vm1399, %v2607, 0
  %v2658 = vsel %vm1399, %v2608, 0
  %v2661 = vsel %vm1399, %v2609, 0
  %v2664 = vsel %vm1399, %v2610, 0
  %v2667 = vsel %vm1399, %v2611, 0
  %2669 = vmatprep.subr.bf16.mxu0 0
  %2670 = vmatpush1.bf16.msra.mxu0 %v2637
  %2671 = vmatprep.subr.bf16.mxu0 0
  %2672 = vmatpush1.bf16.msra.mxu0 %v2638
  %2673 = vmatprep.subr.bf16.mxu0 0
  %2674 = vmatpush1.bf16.msra.mxu0 %v2639
  %2675 = vmatprep.subr.bf16.mxu0 0
  %2676 = vmatpush1.bf16.msra.mxu0 %v2640
  %2677 = vmatprep.subr.bf16.mxu0 0
  %2678 = vmatpush1.bf16.msra.mxu0 0
  %2679 = vmatprep.subr.bf16.mxu0 0
  %2680 = vmatpush1.bf16.msra.mxu0 0
  %2681 = vmatprep.subr.bf16.mxu0 0
  %2682 = vmatpush1.bf16.msra.mxu0 0
  %2683 = vmatprep.subr.bf16.mxu0 0
  %2684 = vmatpush1.bf16.msra.mxu0 0
  %2685 = vmatprep.subr.bf16.mxu0 0
  %2686 = vmatpush1.bf16.msra.mxu0 0
  %2687 = vmatprep.subr.bf16.mxu0 0
  %2688 = vmatpush1.bf16.msra.mxu0 0
  %2689 = vmatprep.subr.bf16.mxu0 0
  %2690 = vmatpush1.bf16.msra.mxu0 0
  %2691 = vmatprep.subr.bf16.mxu0 0
  %2692 = vmatpush1.bf16.msra.mxu0 0
  %2693 = vmatprep.subr.bf16.mxu0 0
  %2694 = vmatpush1.bf16.msra.mxu0 0
  %2695 = vmatprep.subr.bf16.mxu0 0
  %2696 = vmatpush1.bf16.msra.mxu0 0
  %2697 = vmatprep.subr.bf16.mxu0 0
  %2698 = vmatpush1.bf16.msra.mxu0 0
  %2699 = vmatprep.subr.bf16.mxu0 0
  %2700 = vmatpush1.bf16.msra.mxu0 0
  %2701 = vmatprep.mubr.bf16.mxu0 0
  %2702 = vmatmul.mubr.bf16.gmra.mrb[0].mxu0 %v2646
  %v2703 = vpop.f32.mrb[0].mxu0
  %v2704 = vadd.f32 %v2620, %v2703
  %v2705 = vpop.f32.mrb[0].mxu0
  %v2706 = vpop.f32.mrb[0].mxu0
  %v2707 = vadd.f32 %v2620, %v2706
  %v2708 = vpop.f32.mrb[0].mxu0
  %2709 = vmatprep.mubr.bf16.mxu0 0
  %2710 = vmatmul.mubr.bf16.gmra.mrb[0].mxu0 %v2649
  %v2711 = vpop.f32.mrb[0].mxu0
  %v2712 = vadd.f32 %v2620, %v2711
  %v2713 = vpop.f32.mrb[0].mxu0
  %v2714 = vpop.f32.mrb[0].mxu0
  %v2715 = vadd.f32 %v2620, %v2714
  %v2716 = vpop.f32.mrb[0].mxu0
  %2717 = vmatprep.mubr.bf16.mxu0 0
  %2718 = vmatmul.mubr.bf16.gmra.mrb[0].mxu0 %v2652
  %v2719 = vpop.f32.mrb[0].mxu0
  %v2720 = vadd.f32 %v2620, %v2719
  %v2721 = vpop.f32.mrb[0].mxu0
  %v2722 = vpop.f32.mrb[0].mxu0
  %v2723 = vadd.f32 %v2620, %v2722
  %v2724 = vpop.f32.mrb[0].mxu0
  %2725 = vmatprep.mubr.bf16.mxu0 0
  %2726 = vmatmul.mubr.bf16.gmra.mrb[0].mxu0 %v2655
  %v2727 = vpop.f32.mrb[0].mxu0
  %v2728 = vadd.f32 %v2620, %v2727
  %v2729 = vpop.f32.mrb[0].mxu0
  %v2730 = vpop.f32.mrb[0].mxu0
  %v2731 = vadd.f32 %v2620, %v2730
  %v2732 = vpop.f32.mrb[0].mxu0
  %2733 = vmatprep.mubr.bf16.mxu0 0
  %2734 = vmatmul.mubr.bf16.gmra.mrb[0].mxu0 %v2658
  %v2735 = vpop.f32.mrb[0].mxu0
  %v2736 = vadd.f32 %v2620, %v2735
  %v2737 = vpop.f32.mrb[0].mxu0
  %v2738 = vpop.f32.mrb[0].mxu0
  %v2739 = vadd.f32 %v2620, %v2738
  %v2740 = vpop.f32.mrb[0].mxu0
  %2741 = vmatprep.mubr.bf16.mxu0 0
  %2742 = vmatmul.mubr.bf16.gmra.mrb[0].mxu0 %v2661
  %v2743 = vpop.f32.mrb[0].mxu0
  %v2744 = vadd.f32 %v2620, %v2743
  %v2745 = vpop.f32.mrb[0].mxu0
  %v2746 = vpop.f32.mrb[0].mxu0
  %v2747 = vadd.f32 %v2620, %v2746
  %v2748 = vpop.f32.mrb[0].mxu0
  %2749 = vmatprep.mubr.bf16.mxu0 0
  %2750 = vmatmul.mubr.bf16.gmra.mrb[0].mxu0 %v2664
  %v2751 = vpop.f32.mrb[0].mxu0
  %v2752 = vadd.f32 %v2620, %v2751
  %v2753 = vpop.f32.mrb[0].mxu0
  %v2754 = vpop.f32.mrb[0].mxu0
  %v2755 = vadd.f32 %v2620, %v2754
  %v2756 = vpop.f32.mrb[0].mxu0
  %2757 = vmatprep.mubr.bf16.mxu0 0
  %2758 = vmatmul.mubr.bf16.gmra.mrb[0].mxu0 %v2667
  %v2759 = vpop.f32.mrb[0].mxu0
  %v2760 = vadd.f32 %v2620, %v2759
  %v2761 = vpop.f32.mrb[0].mxu0
  %v2762 = vpop.f32.mrb[0].mxu0
  %v2763 = vadd.f32 %v2620, %v2762
  %v2764 = vpop.f32.mrb[0].mxu0
  %2765 = vdwg.mxu0
  %v2766 = vsel %vm1399, %v2704, 0.0
  %v2767 = vsel %vm1399, %v2707, 0.0
  %v2768 = vadd.f32 %v2766, %v2767
  %v2769 = vsel %vm1399, %v2712, 0.0
  %v2770 = vadd.f32 %v2768, %v2769
  %v2771 = vsel %vm1399, %v2715, 0.0
  %v2772 = vadd.f32 %v2770, %v2771
  %v2773 = vsel %vm1399, %v2720, 0.0
  %v2774 = vadd.f32 %v2772, %v2773
  %v2775 = vsel %vm1399, %v2723, 0.0
  %v2776 = vadd.f32 %v2774, %v2775
  %v2777 = vsel %vm1399, %v2728, 0.0
  %v2778 = vadd.f32 %v2776, %v2777
  %v2779 = vsel %vm1399, %v2731, 0.0
  %v2780 = vadd.f32 %v2778, %v2779
  %v2781 = vrot.slane %v2780, 4
  %v2782 = vadd.f32 %v2780, %v2781
  %v2783 = vrot.slane %v2782, 2
  %v2784 = vadd.f32 %v2782, %v2783
  %v2785 = vrot.slane %v2784, 1
  %v2786 = vadd.f32 %v2784, %v2785
  %v2787 = vsel %vm1399, %v2736, 0.0
  %v2788 = vsel %vm1399, %v2739, 0.0
  %v2789 = vadd.f32 %v2787, %v2788
  %v2790 = vsel %vm1399, %v2744, 0.0
  %v2791 = vadd.f32 %v2789, %v2790
  %v2792 = vsel %vm1399, %v2747, 0.0
  %v2793 = vadd.f32 %v2791, %v2792
  %v2794 = vsel %vm1399, %v2752, 0.0
  %v2795 = vadd.f32 %v2793, %v2794
  %v2796 = vsel %vm1399, %v2755, 0.0
  %v2797 = vadd.f32 %v2795, %v2796
  %v2798 = vsel %vm1399, %v2760, 0.0
  %v2799 = vadd.f32 %v2797, %v2798
  %v2800 = vsel %vm1399, %v2763, 0.0
  %v2801 = vadd.f32 %v2799, %v2800
  %v2802 = vrot.slane %v2801, 4
  %v2803 = vadd.f32 %v2801, %v2802
  %v2804 = vrot.slane %v2803, 2
  %v2805 = vadd.f32 %v2803, %v2804
  %v2806 = vrot.slane %v2805, 1
  %v2807 = vadd.f32 %v2805, %v2806
  %v2808 = vmul.f32 %v2786, 0.015625
  %v2809 = vmul.f32 %v2807, 0.015625
  %v2810 = vsub.f32 %v2704, %v2808
  %v2811 = vsub.f32 %v2707, %v2808
  %v2812 = vsub.f32 %v2712, %v2808
  %v2813 = vsub.f32 %v2715, %v2808
  %v2814 = vsub.f32 %v2720, %v2808
  %v2815 = vsub.f32 %v2723, %v2808
  %v2816 = vsub.f32 %v2728, %v2808
  %v2817 = vsub.f32 %v2731, %v2808
  %v2818 = vsub.f32 %v2736, %v2809
  %v2819 = vsub.f32 %v2739, %v2809
  %v2820 = vsub.f32 %v2744, %v2809
  %v2821 = vsub.f32 %v2747, %v2809
  %v2822 = vsub.f32 %v2752, %v2809
  %v2823 = vsub.f32 %v2755, %v2809
  %v2824 = vsub.f32 %v2760, %v2809
  %v2825 = vsub.f32 %v2763, %v2809
  %v2826 = vmul.f32 %v2810, %v2810
  %v2827 = vmul.f32 %v2811, %v2811
  %v2828 = vmul.f32 %v2812, %v2812
  %v2829 = vmul.f32 %v2813, %v2813
  %v2830 = vmul.f32 %v2814, %v2814
  %v2831 = vmul.f32 %v2815, %v2815
  %v2832 = vmul.f32 %v2816, %v2816
  %v2833 = vmul.f32 %v2817, %v2817
  %v2834 = vmul.f32 %v2818, %v2818
  %v2835 = vmul.f32 %v2819, %v2819
  %v2836 = vmul.f32 %v2820, %v2820
  %v2837 = vmul.f32 %v2821, %v2821
  %v2838 = vmul.f32 %v2822, %v2822
  %v2839 = vmul.f32 %v2823, %v2823
  %v2840 = vmul.f32 %v2824, %v2824
  %v2841 = vmul.f32 %v2825, %v2825
  %v2842 = vsel %vm1399, %v2826, 0.0
  %v2843 = vsel %vm1399, %v2827, 0.0
  %v2844 = vadd.f32 %v2842, %v2843
  %v2845 = vsel %vm1399, %v2828, 0.0
  %v2846 = vadd.f32 %v2844, %v2845
  %v2847 = vsel %vm1399, %v2829, 0.0
  %v2848 = vadd.f32 %v2846, %v2847
  %v2849 = vsel %vm1399, %v2830, 0.0
  %v2850 = vadd.f32 %v2848, %v2849
  %v2851 = vsel %vm1399, %v2831, 0.0
  %v2852 = vadd.f32 %v2850, %v2851
  %v2853 = vsel %vm1399, %v2832, 0.0
  %v2854 = vadd.f32 %v2852, %v2853
  %v2855 = vsel %vm1399, %v2833, 0.0
  %v2856 = vadd.f32 %v2854, %v2855
  %v2857 = vrot.slane %v2856, 4
  %v2858 = vadd.f32 %v2856, %v2857
  %v2859 = vrot.slane %v2858, 2
  %v2860 = vadd.f32 %v2858, %v2859
  %v2861 = vrot.slane %v2860, 1
  %v2862 = vadd.f32 %v2860, %v2861
  %v2863 = vsel %vm1399, %v2834, 0.0
  %v2864 = vsel %vm1399, %v2835, 0.0
  %v2865 = vadd.f32 %v2863, %v2864
  %v2866 = vsel %vm1399, %v2836, 0.0
  %v2867 = vadd.f32 %v2865, %v2866
  %v2868 = vsel %vm1399, %v2837, 0.0
  %v2869 = vadd.f32 %v2867, %v2868
  %v2870 = vsel %vm1399, %v2838, 0.0
  %v2871 = vadd.f32 %v2869, %v2870
  %v2872 = vsel %vm1399, %v2839, 0.0
  %v2873 = vadd.f32 %v2871, %v2872
  %v2874 = vsel %vm1399, %v2840, 0.0
  %v2875 = vadd.f32 %v2873, %v2874
  %v2876 = vsel %vm1399, %v2841, 0.0
  %v2877 = vadd.f32 %v2875, %v2876
  %v2878 = vrot.slane %v2877, 4
  %v2879 = vadd.f32 %v2877, %v2878
  %v2880 = vrot.slane %v2879, 2
  %v2881 = vadd.f32 %v2879, %v2880
  %v2882 = vrot.slane %v2881, 1
  %v2883 = vadd.f32 %v2881, %v2882
  %v2884 = vmul.f32 %v2862, 0.015625
  %v2885 = vmul.f32 %v2883, 0.015625
  %v2886 = vadd.f32 %v2884, 1e-05
  %v2887 = vadd.f32 %v2885, 1e-05
  %v2888 = vrsqrt.pop %v2886
  %v2889 = vrsqrt.pop %v2887
  %v2890 = vmul.f32 %v2810, %v2888
  %v2891 = vmul.f32 %v2811, %v2888
  %v2892 = vmul.f32 %v2812, %v2888
  %v2893 = vmul.f32 %v2813, %v2888
  %v2894 = vmul.f32 %v2814, %v2888
  %v2895 = vmul.f32 %v2815, %v2888
  %v2896 = vmul.f32 %v2816, %v2888
  %v2897 = vmul.f32 %v2817, %v2888
  %v2898 = vmul.f32 %v2818, %v2889
  %v2899 = vmul.f32 %v2819, %v2889
  %v2900 = vmul.f32 %v2820, %v2889
  %v2901 = vmul.f32 %v2821, %v2889
  %v2902 = vmul.f32 %v2822, %v2889
  %v2903 = vmul.f32 %v2823, %v2889
  %v2904 = vmul.f32 %v2824, %v2889
  %v2905 = vmul.f32 %v2825, %v2889
  %v2906 = vmul.f32 %v2890, 0.5
  %v2907 = vmul.f32 %v2891, 0.5
  %v2908 = vmul.f32 %v2892, 0.5
  %v2909 = vmul.f32 %v2893, 0.5
  %v2910 = vmul.f32 %v2894, 0.5
  %v2911 = vmul.f32 %v2895, 0.5
  %v2912 = vmul.f32 %v2896, 0.5
  %v2913 = vmul.f32 %v2897, 0.5
  %v2914 = vmul.f32 %v2898, 0.5
  %v2915 = vmul.f32 %v2899, 0.5
  %v2916 = vmul.f32 %v2900, 0.5
  %v2917 = vmul.f32 %v2901, 0.5
  %v2918 = vmul.f32 %v2902, 0.5
  %v2919 = vmul.f32 %v2903, 0.5
  %v2920 = vmul.f32 %v2904, 0.5
  %v2921 = vmul.f32 %v2905, 0.5
  %v2922 = vmul.f32 %v2890, 0.70710677
  %v2923 = vmul.f32 %v2891, 0.70710677
  %v2924 = vmul.f32 %v2892, 0.70710677
  %v2925 = vmul.f32 %v2893, 0.70710677
  %v2926 = vmul.f32 %v2894, 0.70710677
  %v2927 = vmul.f32 %v2895, 0.70710677
  %v2928 = vmul.f32 %v2896, 0.70710677
  %v2929 = vmul.f32 %v2897, 0.70710677
  %v2930 = vmul.f32 %v2898, 0.70710677
  %v2931 = vmul.f32 %v2899, 0.70710677
  %v2932 = vmul.f32 %v2900, 0.70710677
  %v2933 = vmul.f32 %v2901, 0.70710677
  %v2934 = vmul.f32 %v2902, 0.70710677
  %v2935 = vmul.f32 %v2903, 0.70710677
  %v2936 = vmul.f32 %v2904, 0.70710677
  %v2937 = vmul.f32 %v2905, 0.70710677
  %v2938 = verf.f32.pop %v2922
  %v2939 = verf.f32.pop %v2923
  %v2940 = verf.f32.pop %v2924
  %v2941 = verf.f32.pop %v2925
  %v2942 = verf.f32.pop %v2926
  %v2943 = verf.f32.pop %v2927
  %v2944 = verf.f32.pop %v2928
  %v2945 = verf.f32.pop %v2929
  %v2946 = verf.f32.pop %v2930
  %v2947 = verf.f32.pop %v2931
  %v2948 = verf.f32.pop %v2932
  %v2949 = verf.f32.pop %v2933
  %v2950 = verf.f32.pop %v2934
  %v2951 = verf.f32.pop %v2935
  %v2952 = verf.f32.pop %v2936
  %v2953 = verf.f32.pop %v2937
  %v2954 = vadd.f32 %v2938, 1.0
  %v2955 = vadd.f32 %v2939, 1.0
  %v2956 = vadd.f32 %v2940, 1.0
  %v2957 = vadd.f32 %v2941, 1.0
  %v2958 = vadd.f32 %v2942, 1.0
  %v2959 = vadd.f32 %v2943, 1.0
  %v2960 = vadd.f32 %v2944, 1.0
  %v2961 = vadd.f32 %v2945, 1.0
  %v2962 = vadd.f32 %v2946, 1.0
  %v2963 = vadd.f32 %v2947, 1.0
  %v2964 = vadd.f32 %v2948, 1.0
  %v2965 = vadd.f32 %v2949, 1.0
  %v2966 = vadd.f32 %v2950, 1.0
  %v2967 = vadd.f32 %v2951, 1.0
  %v2968 = vadd.f32 %v2952, 1.0
  %v2969 = vadd.f32 %v2953, 1.0
  %v2970 = vmul.f32 %v2906, %v2954
  %v2971 = vmul.f32 %v2907, %v2955
  %v2972 = vmul.f32 %v2908, %v2956
  %v2973 = vmul.f32 %v2909, %v2957
  %v2974 = vmul.f32 %v2910, %v2958
  %v2975 = vmul.f32 %v2911, %v2959
  %v2976 = vmul.f32 %v2912, %v2960
  %v2977 = vmul.f32 %v2913, %v2961
  %v2978 = vmul.f32 %v2914, %v2962
  %v2979 = vmul.f32 %v2915, %v2963
  %v2980 = vmul.f32 %v2916, %v2964
  %v2981 = vmul.f32 %v2917, %v2965
  %v2982 = vmul.f32 %v2918, %v2966
  %v2983 = vmul.f32 %v2919, %v2967
  %v2984 = vmul.f32 %v2920, %v2968
  %v2985 = vmul.f32 %v2921, %v2969
  %v2986 = vpack.c.bf16 %v2971, %v2970
  %v2987 = vpack.c.bf16 %v2973, %v2972
  %v2988 = vpack.c.bf16 %v2975, %v2974
  %v2989 = vpack.c.bf16 %v2977, %v2976
  %v2990 = vpack.c.bf16 %v2979, %v2978
  %v2991 = vpack.c.bf16 %v2981, %v2980
  %v2992 = vpack.c.bf16 %v2983, %v2982
  %v2993 = vpack.c.bf16 %v2985, %v2984
  %v2994 = vld [vmem:[%s9] sm:$0xf]
  %v2995 = vld [vmem:[%s9 + $0x4] sm:$0xf]
  %v2996 = vld [vmem:[%s9 + $0x8] sm:$0xf]
  %v2997 = vld [vmem:[%s9 + $0xc] sm:$0xf]
  %v2998 = vld [vmem:[%s9 + $0x10] sm:$0xf]
  %v2999 = vld [vmem:[%s9 + $0x14] sm:$0xf]
  %v3000 = vld [vmem:[%s9 + $0x18] sm:$0xf]
  %v3001 = vld [vmem:[%s9 + $0x1c] sm:$0xf]
  %v3002 = vld [vmem:[%s18 + $0x10] ss:$0 sm:$0xff]
  %v3011 = vunpack.c.l.b16 %v2994
  %v3012 = vunpack.c.l.b16 %v2995
  %v3013 = vunpack.c.l.b16 %v2996
  %v3014 = vunpack.c.l.b16 %v2997
  %v3015 = vunpack.c.l.b16 %v2998
  %v3016 = vunpack.c.l.b16 %v2999
  %v3017 = vunpack.c.l.b16 %v3000
  %v3018 = vunpack.c.l.b16 %v3001
  %v3019 = vpack.c.b16 %v3012, %v3011
  %v3020 = vpack.c.b16 %v3014, %v3013
  %v3021 = vpack.c.b16 %v3016, %v3015
  %v3022 = vpack.c.b16 %v3018, %v3017
  %v3028 = vsel %vm1399, %v2986, 0
  %v3031 = vsel %vm1399, %v2987, 0
  %v3034 = vsel %vm1399, %v2988, 0
  %v3037 = vsel %vm1399, %v2989, 0
  %v3040 = vsel %vm1399, %v2990, 0
  %v3043 = vsel %vm1399, %v2991, 0
  %v3046 = vsel %vm1399, %v2992, 0
  %v3049 = vsel %vm1399, %v2993, 0
  %3051 = vmatprep.subr.bf16.mxu0 0
  %3052 = vmatpush1.bf16.msra.mxu0 %v3019
  %3053 = vmatprep.subr.bf16.mxu0 0
  %3054 = vmatpush1.bf16.msra.mxu0 %v3020
  %3055 = vmatprep.subr.bf16.mxu0 0
  %3056 = vmatpush1.bf16.msra.mxu0 %v3021
  %3057 = vmatprep.subr.bf16.mxu0 0
  %3058 = vmatpush1.bf16.msra.mxu0 %v3022
  %3059 = vmatprep.subr.bf16.mxu0 0
  %3060 = vmatpush1.bf16.msra.mxu0 0
  %3061 = vmatprep.subr.bf16.mxu0 0
  %3062 = vmatpush1.bf16.msra.mxu0 0
  %3063 = vmatprep.subr.bf16.mxu0 0
  %3064 = vmatpush1.bf16.msra.mxu0 0
  %3065 = vmatprep.subr.bf16.mxu0 0
  %3066 = vmatpush1.bf16.msra.mxu0 0
  %3067 = vmatprep.subr.bf16.mxu0 0
  %3068 = vmatpush1.bf16.msra.mxu0 0
  %3069 = vmatprep.subr.bf16.mxu0 0
  %3070 = vmatpush1.bf16.msra.mxu0 0
  %3071 = vmatprep.subr.bf16.mxu0 0
  %3072 = vmatpush1.bf16.msra.mxu0 0
  %3073 = vmatprep.subr.bf16.mxu0 0
  %3074 = vmatpush1.bf16.msra.mxu0 0
  %3075 = vmatprep.subr.bf16.mxu0 0
  %3076 = vmatpush1.bf16.msra.mxu0 0
  %3077 = vmatprep.subr.bf16.mxu0 0
  %3078 = vmatpush1.bf16.msra.mxu0 0
  %3079 = vmatprep.subr.bf16.mxu0 0
  %3080 = vmatpush1.bf16.msra.mxu0 0
  %3081 = vmatprep.subr.bf16.mxu0 0
  %3082 = vmatpush1.bf16.msra.mxu0 0
  %3083 = vmatprep.mubr.bf16.mxu0 0
  %3084 = vmatmul.mubr.bf16.gmra.mrb[0].mxu0 %v3028
  %v3085 = vpop.f32.mrb[0].mxu0
  %v3086 = vadd.f32 %v3002, %v3085
  %v3087 = vpop.f32.mrb[0].mxu0
  %v3088 = vpop.f32.mrb[0].mxu0
  %v3089 = vadd.f32 %v3002, %v3088
  %v3090 = vpop.f32.mrb[0].mxu0
  %3091 = vmatprep.mubr.bf16.mxu0 0
  %3092 = vmatmul.mubr.bf16.gmra.mrb[0].mxu0 %v3031
  %v3093 = vpop.f32.mrb[0].mxu0
  %v3094 = vadd.f32 %v3002, %v3093
  %v3095 = vpop.f32.mrb[0].mxu0
  %v3096 = vpop.f32.mrb[0].mxu0
  %v3097 = vadd.f32 %v3002, %v3096
  %v3098 = vpop.f32.mrb[0].mxu0
  %3099 = vmatprep.mubr.bf16.mxu0 0
  %3100 = vmatmul.mubr.bf16.gmra.mrb[0].mxu0 %v3034
  %v3101 = vpop.f32.mrb[0].mxu0
  %v3102 = vadd.f32 %v3002, %v3101
  %v3103 = vpop.f32.mrb[0].mxu0
  %v3104 = vpop.f32.mrb[0].mxu0
  %v3105 = vadd.f32 %v3002, %v3104
  %v3106 = vpop.f32.mrb[0].mxu0
  %3107 = vmatprep.mubr.bf16.mxu0 0
  %3108 = vmatmul.mubr.bf16.gmra.mrb[0].mxu0 %v3037
  %v3109 = vpop.f32.mrb[0].mxu0
  %v3110 = vadd.f32 %v3002, %v3109
  %v3111 = vpop.f32.mrb[0].mxu0
  %v3112 = vpop.f32.mrb[0].mxu0
  %v3113 = vadd.f32 %v3002, %v3112
  %v3114 = vpop.f32.mrb[0].mxu0
  %3115 = vmatprep.mubr.bf16.mxu0 0
  %3116 = vmatmul.mubr.bf16.gmra.mrb[0].mxu0 %v3040
  %v3117 = vpop.f32.mrb[0].mxu0
  %v3118 = vadd.f32 %v3002, %v3117
  %v3119 = vpop.f32.mrb[0].mxu0
  %v3120 = vpop.f32.mrb[0].mxu0
  %v3121 = vadd.f32 %v3002, %v3120
  %v3122 = vpop.f32.mrb[0].mxu0
  %3123 = vmatprep.mubr.bf16.mxu0 0
  %3124 = vmatmul.mubr.bf16.gmra.mrb[0].mxu0 %v3043
  %v3125 = vpop.f32.mrb[0].mxu0
  %v3126 = vadd.f32 %v3002, %v3125
  %v3127 = vpop.f32.mrb[0].mxu0
  %v3128 = vpop.f32.mrb[0].mxu0
  %v3129 = vadd.f32 %v3002, %v3128
  %v3130 = vpop.f32.mrb[0].mxu0
  %3131 = vmatprep.mubr.bf16.mxu0 0
  %3132 = vmatmul.mubr.bf16.gmra.mrb[0].mxu0 %v3046
  %v3133 = vpop.f32.mrb[0].mxu0
  %v3134 = vadd.f32 %v3002, %v3133
  %v3135 = vpop.f32.mrb[0].mxu0
  %v3136 = vpop.f32.mrb[0].mxu0
  %v3137 = vadd.f32 %v3002, %v3136
  %v3138 = vpop.f32.mrb[0].mxu0
  %3139 = vmatprep.mubr.bf16.mxu0 0
  %3140 = vmatmul.mubr.bf16.gmra.mrb[0].mxu0 %v3049
  %v3141 = vpop.f32.mrb[0].mxu0
  %v3142 = vadd.f32 %v3002, %v3141
  %v3143 = vpop.f32.mrb[0].mxu0
  %v3144 = vpop.f32.mrb[0].mxu0
  %v3145 = vadd.f32 %v3002, %v3144
  %v3146 = vpop.f32.mrb[0].mxu0
  %3147 = vdwg.mxu0
  %v3148 = vpack.c.bf16 %v3089, %v3086
  %v3149 = vpack.c.bf16 %v3097, %v3094
  %v3150 = vpack.c.bf16 %v3105, %v3102
  %v3151 = vpack.c.bf16 %v3113, %v3110
  %v3152 = vpack.c.bf16 %v3121, %v3118
  %v3153 = vpack.c.bf16 %v3129, %v3126
  %v3154 = vpack.c.bf16 %v3137, %v3134
  %v3155 = vpack.c.bf16 %v3145, %v3142
  %v3156 = vld [vmem:[%s10] sm:$0xf]
  %v3157 = vld [vmem:[%s10 + $0x4] sm:$0xf]
  %v3158 = vld [vmem:[%s18 + $0x11] ss:$0 sm:$0xff]
  %v3161 = vunpack.c.l.b16 %v3156
  %v3162 = vunpack.c.l.b16 %v3157
  %v3163 = vpack.c.b16 %v3162, %v3161
  %vm3165 = vcmask 130048
  %v3167 = vsel %vm3165, %v3148, 0
  %v3170 = vsel %vm3165, %v3149, 0
  %v3173 = vsel %vm3165, %v3150, 0
  %v3176 = vsel %vm3165, %v3151, 0
  %v3179 = vsel %vm3165, %v3152, 0
  %v3182 = vsel %vm3165, %v3153, 0
  %v3185 = vsel %vm3165, %v3154, 0
  %v3188 = vsel %vm3165, %v3155, 0
  %3190 = vmatprep.subr.bf16.mxu0 0
  %3191 = vmatpush1.bf16.msra.mxu0 %v3163
  %3192 = vmatprep.subr.bf16.mxu0 0
  %3193 = vmatpush1.bf16.msra.mxu0 0
  %3194 = vmatprep.subr.bf16.mxu0 0
  %3195 = vmatpush1.bf16.msra.mxu0 0
  %3196 = vmatprep.subr.bf16.mxu0 0
  %3197 = vmatpush1.bf16.msra.mxu0 0
  %3198 = vmatprep.subr.bf16.mxu0 0
  %3199 = vmatpush1.bf16.msra.mxu0 0
  %3200 = vmatprep.subr.bf16.mxu0 0
  %3201 = vmatpush1.bf16.msra.mxu0 0
  %3202 = vmatprep.subr.bf16.mxu0 0
  %3203 = vmatpush1.bf16.msra.mxu0 0
  %3204 = vmatprep.subr.bf16.mxu0 0
  %3205 = vmatpush1.bf16.msra.mxu0 0
  %3206 = vmatprep.subr.bf16.mxu0 0
  %3207 = vmatpush1.bf16.msra.mxu0 0
  %3208 = vmatprep.subr.bf16.mxu0 0
  %3209 = vmatpush1.bf16.msra.mxu0 0
  %3210 = vmatprep.subr.bf16.mxu0 0
  %3211 = vmatpush1.bf16.msra.mxu0 0
  %3212 = vmatprep.subr.bf16.mxu0 0
  %3213 = vmatpush1.bf16.msra.mxu0 0
  %3214 = vmatprep.subr.bf16.mxu0 0
  %3215 = vmatpush1.bf16.msra.mxu0 0
  %3216 = vmatprep.subr.bf16.mxu0 0
  %3217 = vmatpush1.bf16.msra.mxu0 0
  %3218 = vmatprep.subr.bf16.mxu0 0
  %3219 = vmatpush1.bf16.msra.mxu0 0
  %3220 = vmatprep.subr.bf16.mxu0 0
  %3221 = vmatpush1.bf16.msra.mxu0 0
  %3222 = vmatprep.mubr.bf16.mxu0 0
  %3223 = vmatmul.mubr.bf16.gmra.mrb[0].mxu0 %v3167
  %v3224 = vpop.f32.mrb[0].mxu0
  %v3225 = vadd.f32 %v3158, %v3224
  %v3226 = vpop.f32.mrb[0].mxu0
  %v3227 = vpop.f32.mrb[0].mxu0
  %v3228 = vadd.f32 %v3158, %v3227
  %v3229 = vpop.f32.mrb[0].mxu0
  %3230 = vmatprep.mubr.bf16.mxu0 0
  %3231 = vmatmul.mubr.bf16.gmra.mrb[0].mxu0 %v3170
  %v3232 = vpop.f32.mrb[0].mxu0
  %v3233 = vadd.f32 %v3158, %v3232
  %v3234 = vpop.f32.mrb[0].mxu0
  %v3235 = vpop.f32.mrb[0].mxu0
  %v3236 = vadd.f32 %v3158, %v3235
  %v3237 = vpop.f32.mrb[0].mxu0
  %3238 = vmatprep.mubr.bf16.mxu0 0
  %3239 = vmatmul.mubr.bf16.gmra.mrb[0].mxu0 %v3173
  %v3240 = vpop.f32.mrb[0].mxu0
  %v3241 = vadd.f32 %v3158, %v3240
  %v3242 = vpop.f32.mrb[0].mxu0
  %v3243 = vpop.f32.mrb[0].mxu0
  %v3244 = vadd.f32 %v3158, %v3243
  %v3245 = vpop.f32.mrb[0].mxu0
  %3246 = vmatprep.mubr.bf16.mxu0 0
  %3247 = vmatmul.mubr.bf16.gmra.mrb[0].mxu0 %v3176
  %v3248 = vpop.f32.mrb[0].mxu0
  %v3249 = vadd.f32 %v3158, %v3248
  %v3250 = vpop.f32.mrb[0].mxu0
  %v3251 = vpop.f32.mrb[0].mxu0
  %v3252 = vadd.f32 %v3158, %v3251
  %v3253 = vpop.f32.mrb[0].mxu0
  %3254 = vmatprep.mubr.bf16.mxu0 0
  %3255 = vmatmul.mubr.bf16.gmra.mrb[0].mxu0 %v3179
  %v3256 = vpop.f32.mrb[0].mxu0
  %v3257 = vadd.f32 %v3158, %v3256
  %v3258 = vpop.f32.mrb[0].mxu0
  %v3259 = vpop.f32.mrb[0].mxu0
  %v3260 = vadd.f32 %v3158, %v3259
  %v3261 = vpop.f32.mrb[0].mxu0
  %3262 = vmatprep.mubr.bf16.mxu0 0
  %3263 = vmatmul.mubr.bf16.gmra.mrb[0].mxu0 %v3182
  %v3264 = vpop.f32.mrb[0].mxu0
  %v3265 = vadd.f32 %v3158, %v3264
  %v3266 = vpop.f32.mrb[0].mxu0
  %v3267 = vpop.f32.mrb[0].mxu0
  %v3268 = vadd.f32 %v3158, %v3267
  %v3269 = vpop.f32.mrb[0].mxu0
  %3270 = vmatprep.mubr.bf16.mxu0 0
  %3271 = vmatmul.mubr.bf16.gmra.mrb[0].mxu0 %v3185
  %v3272 = vpop.f32.mrb[0].mxu0
  %v3273 = vadd.f32 %v3158, %v3272
  %v3274 = vpop.f32.mrb[0].mxu0
  %v3275 = vpop.f32.mrb[0].mxu0
  %v3276 = vadd.f32 %v3158, %v3275
  %v3277 = vpop.f32.mrb[0].mxu0
  %3278 = vmatprep.mubr.bf16.mxu0 0
  %3279 = vmatmul.mubr.bf16.gmra.mrb[0].mxu0 %v3188
  %v3280 = vpop.f32.mrb[0].mxu0
  %v3281 = vadd.f32 %v3158, %v3280
  %v3282 = vpop.f32.mrb[0].mxu0
  %v3283 = vpop.f32.mrb[0].mxu0
  %v3284 = vadd.f32 %v3158, %v3283
  %v3285 = vpop.f32.mrb[0].mxu0
  %3286 = vdwg.mxu0
  %v3287 = vsel %vm2262, %v3225, 0.0
  %v3288 = vsel %vm2262, %v3228, 0.0
  %v3289 = vadd.f32 %v3287, %v3288
  %v3290 = vsel %vm2262, %v3233, 0.0
  %v3291 = vadd.f32 %v3289, %v3290
  %v3292 = vsel %vm2262, %v3236, 0.0
  %v3293 = vadd.f32 %v3291, %v3292
  %v3294 = vsel %vm2262, %v3241, 0.0
  %v3295 = vadd.f32 %v3293, %v3294
  %v3296 = vsel %vm2262, %v3244, 0.0
  %v3297 = vadd.f32 %v3295, %v3296
  %v3298 = vsel %vm2262, %v3249, 0.0
  %v3299 = vadd.f32 %v3297, %v3298
  %v3300 = vsel %vm2262, %v3252, 0.0
  %v3301 = vadd.f32 %v3299, %v3300
  %v3302 = vrot.slane %v3301, 4
  %v3303 = vadd.f32 %v3301, %v3302
  %v3304 = vrot.slane %v3303, 2
  %v3305 = vadd.f32 %v3303, %v3304
  %v3306 = vrot.slane %v3305, 1
  %v3307 = vadd.f32 %v3305, %v3306
  %v3308 = vsel %vm2262, %v3257, 0.0
  %v3309 = vsel %vm2262, %v3260, 0.0
  %v3310 = vadd.f32 %v3308, %v3309
  %v3311 = vsel %vm2262, %v3265, 0.0
  %v3312 = vadd.f32 %v3310, %v3311
  %v3313 = vsel %vm2262, %v3268, 0.0
  %v3314 = vadd.f32 %v3312, %v3313
  %v3315 = vsel %vm2262, %v3273, 0.0
  %v3316 = vadd.f32 %v3314, %v3315
  %v3317 = vsel %vm2262, %v3276, 0.0
  %v3318 = vadd.f32 %v3316, %v3317
  %v3319 = vsel %vm2262, %v3281, 0.0
  %v3320 = vadd.f32 %v3318, %v3319
  %v3321 = vsel %vm2262, %v3284, 0.0
  %v3322 = vadd.f32 %v3320, %v3321
  %v3323 = vrot.slane %v3322, 4
  %v3324 = vadd.f32 %v3322, %v3323
  %v3325 = vrot.slane %v3324, 2
  %v3326 = vadd.f32 %v3324, %v3325
  %v3327 = vrot.slane %v3326, 1
  %v3328 = vadd.f32 %v3326, %v3327
  %v3329 = vmul.f32 %v3307, 0.015625
  %v3330 = vmul.f32 %v3328, 0.015625
  %v3331 = vsub.f32 %v3225, %v3329
  %v3332 = vsub.f32 %v3228, %v3329
  %v3333 = vsub.f32 %v3233, %v3329
  %v3334 = vsub.f32 %v3236, %v3329
  %v3335 = vsub.f32 %v3241, %v3329
  %v3336 = vsub.f32 %v3244, %v3329
  %v3337 = vsub.f32 %v3249, %v3329
  %v3338 = vsub.f32 %v3252, %v3329
  %v3339 = vsub.f32 %v3257, %v3330
  %v3340 = vsub.f32 %v3260, %v3330
  %v3341 = vsub.f32 %v3265, %v3330
  %v3342 = vsub.f32 %v3268, %v3330
  %v3343 = vsub.f32 %v3273, %v3330
  %v3344 = vsub.f32 %v3276, %v3330
  %v3345 = vsub.f32 %v3281, %v3330
  %v3346 = vsub.f32 %v3284, %v3330
  %v3347 = vmul.f32 %v3331, %v3331
  %v3348 = vmul.f32 %v3332, %v3332
  %v3349 = vmul.f32 %v3333, %v3333
  %v3350 = vmul.f32 %v3334, %v3334
  %v3351 = vmul.f32 %v3335, %v3335
  %v3352 = vmul.f32 %v3336, %v3336
  %v3353 = vmul.f32 %v3337, %v3337
  %v3354 = vmul.f32 %v3338, %v3338
  %v3355 = vmul.f32 %v3339, %v3339
  %v3356 = vmul.f32 %v3340, %v3340
  %v3357 = vmul.f32 %v3341, %v3341
  %v3358 = vmul.f32 %v3342, %v3342
  %v3359 = vmul.f32 %v3343, %v3343
  %v3360 = vmul.f32 %v3344, %v3344
  %v3361 = vmul.f32 %v3345, %v3345
  %v3362 = vmul.f32 %v3346, %v3346
  %v3363 = vsel %vm2262, %v3347, 0.0
  %v3364 = vsel %vm2262, %v3348, 0.0
  %v3365 = vadd.f32 %v3363, %v3364
  %v3366 = vsel %vm2262, %v3349, 0.0
  %v3367 = vadd.f32 %v3365, %v3366
  %v3368 = vsel %vm2262, %v3350, 0.0
  %v3369 = vadd.f32 %v3367, %v3368
  %v3370 = vsel %vm2262, %v3351, 0.0
  %v3371 = vadd.f32 %v3369, %v3370
  %v3372 = vsel %vm2262, %v3352, 0.0
  %v3373 = vadd.f32 %v3371, %v3372
  %v3374 = vsel %vm2262, %v3353, 0.0
  %v3375 = vadd.f32 %v3373, %v3374
  %v3376 = vsel %vm2262, %v3354, 0.0
  %v3377 = vadd.f32 %v3375, %v3376
  %v3378 = vrot.slane %v3377, 4
  %v3379 = vadd.f32 %v3377, %v3378
  %v3380 = vrot.slane %v3379, 2
  %v3381 = vadd.f32 %v3379, %v3380
  %v3382 = vrot.slane %v3381, 1
  %v3383 = vadd.f32 %v3381, %v3382
  %v3384 = vsel %vm2262, %v3355, 0.0
  %v3385 = vsel %vm2262, %v3356, 0.0
  %v3386 = vadd.f32 %v3384, %v3385
  %v3387 = vsel %vm2262, %v3357, 0.0
  %v3388 = vadd.f32 %v3386, %v3387
  %v3389 = vsel %vm2262, %v3358, 0.0
  %v3390 = vadd.f32 %v3388, %v3389
  %v3391 = vsel %vm2262, %v3359, 0.0
  %v3392 = vadd.f32 %v3390, %v3391
  %v3393 = vsel %vm2262, %v3360, 0.0
  %v3394 = vadd.f32 %v3392, %v3393
  %v3395 = vsel %vm2262, %v3361, 0.0
  %v3396 = vadd.f32 %v3394, %v3395
  %v3397 = vsel %vm2262, %v3362, 0.0
  %v3398 = vadd.f32 %v3396, %v3397
  %v3399 = vrot.slane %v3398, 4
  %v3400 = vadd.f32 %v3398, %v3399
  %v3401 = vrot.slane %v3400, 2
  %v3402 = vadd.f32 %v3400, %v3401
  %v3403 = vrot.slane %v3402, 1
  %v3404 = vadd.f32 %v3402, %v3403
  %v3405 = vmul.f32 %v3383, 0.015625
  %v3406 = vmul.f32 %v3404, 0.015625
  %v3407 = vadd.f32 %v3405, 1e-05
  %v3408 = vadd.f32 %v3406, 1e-05
  %v3409 = vrsqrt.pop %v3407
  %v3410 = vrsqrt.pop %v3408
  %v3411 = vmul.f32 %v3331, %v3409
  %v3412 = vmul.f32 %v3332, %v3409
  %v3413 = vmul.f32 %v3333, %v3409
  %v3414 = vmul.f32 %v3334, %v3409
  %v3415 = vmul.f32 %v3335, %v3409
  %v3416 = vmul.f32 %v3336, %v3409
  %v3417 = vmul.f32 %v3337, %v3409
  %v3418 = vmul.f32 %v3338, %v3409
  %v3419 = vmul.f32 %v3339, %v3410
  %v3420 = vmul.f32 %v3340, %v3410
  %v3421 = vmul.f32 %v3341, %v3410
  %v3422 = vmul.f32 %v3342, %v3410
  %v3423 = vmul.f32 %v3343, %v3410
  %v3424 = vmul.f32 %v3344, %v3410
  %v3425 = vmul.f32 %v3345, %v3410
  %v3426 = vmul.f32 %v3346, %v3410
  %v3427 = vmul.f32 %v3411, 0.5
  %v3428 = vmul.f32 %v3412, 0.5
  %v3429 = vmul.f32 %v3413, 0.5
  %v3430 = vmul.f32 %v3414, 0.5
  %v3431 = vmul.f32 %v3415, 0.5
  %v3432 = vmul.f32 %v3416, 0.5
  %v3433 = vmul.f32 %v3417, 0.5
  %v3434 = vmul.f32 %v3418, 0.5
  %v3435 = vmul.f32 %v3419, 0.5
  %v3436 = vmul.f32 %v3420, 0.5
  %v3437 = vmul.f32 %v3421, 0.5
  %v3438 = vmul.f32 %v3422, 0.5
  %v3439 = vmul.f32 %v3423, 0.5
  %v3440 = vmul.f32 %v3424, 0.5
  %v3441 = vmul.f32 %v3425, 0.5
  %v3442 = vmul.f32 %v3426, 0.5
  %v3443 = vmul.f32 %v3411, 0.70710677
  %v3444 = vmul.f32 %v3412, 0.70710677
  %v3445 = vmul.f32 %v3413, 0.70710677
  %v3446 = vmul.f32 %v3414, 0.70710677
  %v3447 = vmul.f32 %v3415, 0.70710677
  %v3448 = vmul.f32 %v3416, 0.70710677
  %v3449 = vmul.f32 %v3417, 0.70710677
  %v3450 = vmul.f32 %v3418, 0.70710677
  %v3451 = vmul.f32 %v3419, 0.70710677
  %v3452 = vmul.f32 %v3420, 0.70710677
  %v3453 = vmul.f32 %v3421, 0.70710677
  %v3454 = vmul.f32 %v3422, 0.70710677
  %v3455 = vmul.f32 %v3423, 0.70710677
  %v3456 = vmul.f32 %v3424, 0.70710677
  %v3457 = vmul.f32 %v3425, 0.70710677
  %v3458 = vmul.f32 %v3426, 0.70710677
  %v3459 = verf.f32.pop %v3443
  %v3460 = verf.f32.pop %v3444
  %v3461 = verf.f32.pop %v3445
  %v3462 = verf.f32.pop %v3446
  %v3463 = verf.f32.pop %v3447
  %v3464 = verf.f32.pop %v3448
  %v3465 = verf.f32.pop %v3449
  %v3466 = verf.f32.pop %v3450
  %v3467 = verf.f32.pop %v3451
  %v3468 = verf.f32.pop %v3452
  %v3469 = verf.f32.pop %v3453
  %v3470 = verf.f32.pop %v3454
  %v3471 = verf.f32.pop %v3455
  %v3472 = verf.f32.pop %v3456
  %v3473 = verf.f32.pop %v3457
  %v3474 = verf.f32.pop %v3458
  %v3475 = vadd.f32 %v3459, 1.0
  %v3476 = vadd.f32 %v3460, 1.0
  %v3477 = vadd.f32 %v3461, 1.0
  %v3478 = vadd.f32 %v3462, 1.0
  %v3479 = vadd.f32 %v3463, 1.0
  %v3480 = vadd.f32 %v3464, 1.0
  %v3481 = vadd.f32 %v3465, 1.0
  %v3482 = vadd.f32 %v3466, 1.0
  %v3483 = vadd.f32 %v3467, 1.0
  %v3484 = vadd.f32 %v3468, 1.0
  %v3485 = vadd.f32 %v3469, 1.0
  %v3486 = vadd.f32 %v3470, 1.0
  %v3487 = vadd.f32 %v3471, 1.0
  %v3488 = vadd.f32 %v3472, 1.0
  %v3489 = vadd.f32 %v3473, 1.0
  %v3490 = vadd.f32 %v3474, 1.0
  %v3491 = vmul.f32 %v3427, %v3475
  %v3492 = vmul.f32 %v3428, %v3476
  %v3493 = vmul.f32 %v3429, %v3477
  %v3494 = vmul.f32 %v3430, %v3478
  %v3495 = vmul.f32 %v3431, %v3479
  %v3496 = vmul.f32 %v3432, %v3480
  %v3497 = vmul.f32 %v3433, %v3481
  %v3498 = vmul.f32 %v3434, %v3482
  %v3499 = vmul.f32 %v3435, %v3483
  %v3500 = vmul.f32 %v3436, %v3484
  %v3501 = vmul.f32 %v3437, %v3485
  %v3502 = vmul.f32 %v3438, %v3486
  %v3503 = vmul.f32 %v3439, %v3487
  %v3504 = vmul.f32 %v3440, %v3488
  %v3505 = vmul.f32 %v3441, %v3489
  %v3506 = vmul.f32 %v3442, %v3490
  %v3507 = vpack.c.bf16 %v3492, %v3491
  %v3508 = vpack.c.bf16 %v3494, %v3493
  %v3509 = vpack.c.bf16 %v3496, %v3495
  %v3510 = vpack.c.bf16 %v3498, %v3497
  %v3511 = vpack.c.bf16 %v3500, %v3499
  %v3512 = vpack.c.bf16 %v3502, %v3501
  %v3513 = vpack.c.bf16 %v3504, %v3503
  %v3514 = vpack.c.bf16 %v3506, %v3505
  %v3515 = vld [vmem:[%s11] sm:$0xf]
  %v3516 = vld [vmem:[%s11 + $0x4] sm:$0xf]
  %v3517 = vld [vmem:[%s11 + $0x8] sm:$0xf]
  %v3518 = vld [vmem:[%s11 + $0xc] sm:$0xf]
  %v3519 = vld [vmem:[%s18 + $0x12] ss:$0 sm:$0xff]
  %v3524 = vunpack.c.l.b16 %v3515
  %v3525 = vunpack.c.l.b16 %v3516
  %v3526 = vunpack.c.l.b16 %v3517
  %v3527 = vunpack.c.l.b16 %v3518
  %v3528 = vpack.c.b16 %v3525, %v3524
  %v3529 = vpack.c.b16 %v3527, %v3526
  %v3533 = vsel %vm2262, %v3507, 0
  %v3536 = vsel %vm2262, %v3508, 0
  %v3539 = vsel %vm2262, %v3509, 0
  %v3542 = vsel %vm2262, %v3510, 0
  %v3545 = vsel %vm2262, %v3511, 0
  %v3548 = vsel %vm2262, %v3512, 0
  %v3551 = vsel %vm2262, %v3513, 0
  %v3554 = vsel %vm2262, %v3514, 0
  %3556 = vmatprep.subr.bf16.mxu0 0
  %3557 = vmatpush1.bf16.msra.mxu0 %v3528
  %3558 = vmatprep.subr.bf16.mxu0 0
  %3559 = vmatpush1.bf16.msra.mxu0 %v3529
  %3560 = vmatprep.subr.bf16.mxu0 0
  %3561 = vmatpush1.bf16.msra.mxu0 0
  %3562 = vmatprep.subr.bf16.mxu0 0
  %3563 = vmatpush1.bf16.msra.mxu0 0
  %3564 = vmatprep.subr.bf16.mxu0 0
  %3565 = vmatpush1.bf16.msra.mxu0 0
  %3566 = vmatprep.subr.bf16.mxu0 0
  %3567 = vmatpush1.bf16.msra.mxu0 0
  %3568 = vmatprep.subr.bf16.mxu0 0
  %3569 = vmatpush1.bf16.msra.mxu0 0
  %3570 = vmatprep.subr.bf16.mxu0 0
  %3571 = vmatpush1.bf16.msra.mxu0 0
  %3572 = vmatprep.subr.bf16.mxu0 0
  %3573 = vmatpush1.bf16.msra.mxu0 0
  %3574 = vmatprep.subr.bf16.mxu0 0
  %3575 = vmatpush1.bf16.msra.mxu0 0
  %3576 = vmatprep.subr.bf16.mxu0 0
  %3577 = vmatpush1.bf16.msra.mxu0 0
  %3578 = vmatprep.subr.bf16.mxu0 0
  %3579 = vmatpush1.bf16.msra.mxu0 0
  %3580 = vmatprep.subr.bf16.mxu0 0
  %3581 = vmatpush1.bf16.msra.mxu0 0
  %3582 = vmatprep.subr.bf16.mxu0 0
  %3583 = vmatpush1.bf16.msra.mxu0 0
  %3584 = vmatprep.subr.bf16.mxu0 0
  %3585 = vmatpush1.bf16.msra.mxu0 0
  %3586 = vmatprep.subr.bf16.mxu0 0
  %3587 = vmatpush1.bf16.msra.mxu0 0
  %3588 = vmatprep.mubr.bf16.mxu0 0
  %3589 = vmatmul.mubr.bf16.gmra.mrb[0].mxu0 %v3533
  %v3590 = vpop.f32.mrb[0].mxu0
  %v3591 = vadd.f32 %v3519, %v3590
  %v3592 = vpop.f32.mrb[0].mxu0
  %v3593 = vpop.f32.mrb[0].mxu0
  %v3594 = vadd.f32 %v3519, %v3593
  %v3595 = vpop.f32.mrb[0].mxu0
  %3596 = vmatprep.mubr.bf16.mxu0 0
  %3597 = vmatmul.mubr.bf16.gmra.mrb[0].mxu0 %v3536
  %v3598 = vpop.f32.mrb[0].mxu0
  %v3599 = vadd.f32 %v3519, %v3598
  %v3600 = vpop.f32.mrb[0].mxu0
  %v3601 = vpop.f32.mrb[0].mxu0
  %v3602 = vadd.f32 %v3519, %v3601
  %v3603 = vpop.f32.mrb[0].mxu0
  %3604 = vmatprep.mubr.bf16.mxu0 0
  %3605 = vmatmul.mubr.bf16.gmra.mrb[0].mxu0 %v3539
  %v3606 = vpop.f32.mrb[0].mxu0
  %v3607 = vadd.f32 %v3519, %v3606
  %v3608 = vpop.f32.mrb[0].mxu0
  %v3609 = vpop.f32.mrb[0].mxu0
  %v3610 = vadd.f32 %v3519, %v3609
  %v3611 = vpop.f32.mrb[0].mxu0
  %3612 = vmatprep.mubr.bf16.mxu0 0
  %3613 = vmatmul.mubr.bf16.gmra.mrb[0].mxu0 %v3542
  %v3614 = vpop.f32.mrb[0].mxu0
  %v3615 = vadd.f32 %v3519, %v3614
  %v3616 = vpop.f32.mrb[0].mxu0
  %v3617 = vpop.f32.mrb[0].mxu0
  %v3618 = vadd.f32 %v3519, %v3617
  %v3619 = vpop.f32.mrb[0].mxu0
  %3620 = vmatprep.mubr.bf16.mxu0 0
  %3621 = vmatmul.mubr.bf16.gmra.mrb[0].mxu0 %v3545
  %v3622 = vpop.f32.mrb[0].mxu0
  %v3623 = vadd.f32 %v3519, %v3622
  %v3624 = vpop.f32.mrb[0].mxu0
  %v3625 = vpop.f32.mrb[0].mxu0
  %v3626 = vadd.f32 %v3519, %v3625
  %v3627 = vpop.f32.mrb[0].mxu0
  %3628 = vmatprep.mubr.bf16.mxu0 0
  %3629 = vmatmul.mubr.bf16.gmra.mrb[0].mxu0 %v3548
  %v3630 = vpop.f32.mrb[0].mxu0
  %v3631 = vadd.f32 %v3519, %v3630
  %v3632 = vpop.f32.mrb[0].mxu0
  %v3633 = vpop.f32.mrb[0].mxu0
  %v3634 = vadd.f32 %v3519, %v3633
  %v3635 = vpop.f32.mrb[0].mxu0
  %3636 = vmatprep.mubr.bf16.mxu0 0
  %3637 = vmatmul.mubr.bf16.gmra.mrb[0].mxu0 %v3551
  %v3638 = vpop.f32.mrb[0].mxu0
  %v3639 = vadd.f32 %v3519, %v3638
  %v3640 = vpop.f32.mrb[0].mxu0
  %v3641 = vpop.f32.mrb[0].mxu0
  %v3642 = vadd.f32 %v3519, %v3641
  %v3643 = vpop.f32.mrb[0].mxu0
  %3644 = vmatprep.mubr.bf16.mxu0 0
  %3645 = vmatmul.mubr.bf16.gmra.mrb[0].mxu0 %v3554
  %v3646 = vpop.f32.mrb[0].mxu0
  %v3647 = vadd.f32 %v3519, %v3646
  %v3648 = vpop.f32.mrb[0].mxu0
  %v3649 = vpop.f32.mrb[0].mxu0
  %v3650 = vadd.f32 %v3519, %v3649
  %v3651 = vpop.f32.mrb[0].mxu0
  %3652 = vdwg.mxu0
  %v3653 = vpack.c.bf16 %v3594, %v3591
  %v3654 = vpack.c.bf16 %v3602, %v3599
  %v3655 = vpack.c.bf16 %v3610, %v3607
  %v3656 = vpack.c.bf16 %v3618, %v3615
  %v3657 = vpack.c.bf16 %v3626, %v3623
  %v3658 = vpack.c.bf16 %v3634, %v3631
  %v3659 = vpack.c.bf16 %v3642, %v3639
  %v3660 = vpack.c.bf16 %v3650, %v3647
  %v3661 = vld [vmem:[%s12] sm:$0xf]
  %v3662 = vld [vmem:[%s12 + $0x4] sm:$0xf]
  %v3663 = vld [vmem:[%s12 + $0x8] sm:$0xf]
  %v3664 = vld [vmem:[%s12 + $0xc] sm:$0xf]
  %v3665 = vld [vmem:[%s18 + $0x13] ss:$0 sm:$0xff]
  %v3670 = vunpack.c.l.b16 %v3661
  %v3671 = vunpack.c.l.b16 %v3662
  %v3672 = vunpack.c.l.b16 %v3663
  %v3673 = vunpack.c.l.b16 %v3664
  %v3674 = vpack.c.b16 %v3671, %v3670
  %v3675 = vpack.c.b16 %v3673, %v3672
  %v3679 = vsel %vm2262, %v3653, 0
  %v3682 = vsel %vm2262, %v3654, 0
  %v3685 = vsel %vm2262, %v3655, 0
  %v3688 = vsel %vm2262, %v3656, 0
  %v3691 = vsel %vm2262, %v3657, 0
  %v3694 = vsel %vm2262, %v3658, 0
  %v3697 = vsel %vm2262, %v3659, 0
  %v3700 = vsel %vm2262, %v3660, 0
  %3702 = vmatprep.subr.bf16.mxu0 0
  %3703 = vmatpush1.bf16.msra.mxu0 %v3674
  %3704 = vmatprep.subr.bf16.mxu0 0
  %3705 = vmatpush1.bf16.msra.mxu0 %v3675
  %3706 = vmatprep.subr.bf16.mxu0 0
  %3707 = vmatpush1.bf16.msra.mxu0 0
  %3708 = vmatprep.subr.bf16.mxu0 0
  %3709 = vmatpush1.bf16.msra.mxu0 0
  %3710 = vmatprep.subr.bf16.mxu0 0
  %3711 = vmatpush1.bf16.msra.mxu0 0
  %3712 = vmatprep.subr.bf16.mxu0 0
  %3713 = vmatpush1.bf16.msra.mxu0 0
  %3714 = vmatprep.subr.bf16.mxu0 0
  %3715 = vmatpush1.bf16.msra.mxu0 0
  %3716 = vmatprep.subr.bf16.mxu0 0
  %3717 = vmatpush1.bf16.msra.mxu0 0
  %3718 = vmatprep.subr.bf16.mxu0 0
  %3719 = vmatpush1.bf16.msra.mxu0 0
  %3720 = vmatprep.subr.bf16.mxu0 0
  %3721 = vmatpush1.bf16.msra.mxu0 0
  %3722 = vmatprep.subr.bf16.mxu0 0
  %3723 = vmatpush1.bf16.msra.mxu0 0
  %3724 = vmatprep.subr.bf16.mxu0 0
  %3725 = vmatpush1.bf16.msra.mxu0 0
  %3726 = vmatprep.subr.bf16.mxu0 0
  %3727 = vmatpush1.bf16.msra.mxu0 0
  %3728 = vmatprep.subr.bf16.mxu0 0
  %3729 = vmatpush1.bf16.msra.mxu0 0
  %3730 = vmatprep.subr.bf16.mxu0 0
  %3731 = vmatpush1.bf16.msra.mxu0 0
  %3732 = vmatprep.subr.bf16.mxu0 0
  %3733 = vmatpush1.bf16.msra.mxu0 0
  %3734 = vmatprep.mubr.bf16.mxu0 0
  %3735 = vmatmul.mubr.bf16.gmra.mrb[0].mxu0 %v3679
  %v3736 = vpop.f32.mrb[0].mxu0
  %v3737 = vadd.f32 %v3665, %v3736
  %v3738 = vpop.f32.mrb[0].mxu0
  %v3739 = vpop.f32.mrb[0].mxu0
  %v3740 = vadd.f32 %v3665, %v3739
  %v3741 = vpop.f32.mrb[0].mxu0
  %3742 = vmatprep.mubr.bf16.mxu0 0
  %3743 = vmatmul.mubr.bf16.gmra.mrb[0].mxu0 %v3682
  %v3744 = vpop.f32.mrb[0].mxu0
  %v3745 = vadd.f32 %v3665, %v3744
  %v3746 = vpop.f32.mrb[0].mxu0
  %v3747 = vpop.f32.mrb[0].mxu0
  %v3748 = vadd.f32 %v3665, %v3747
  %v3749 = vpop.f32.mrb[0].mxu0
  %3750 = vmatprep.mubr.bf16.mxu0 0
  %3751 = vmatmul.mubr.bf16.gmra.mrb[0].mxu0 %v3685
  %v3752 = vpop.f32.mrb[0].mxu0
  %v3753 = vadd.f32 %v3665, %v3752
  %v3754 = vpop.f32.mrb[0].mxu0
  %v3755 = vpop.f32.mrb[0].mxu0
  %v3756 = vadd.f32 %v3665, %v3755
  %v3757 = vpop.f32.mrb[0].mxu0
  %3758 = vmatprep.mubr.bf16.mxu0 0
  %3759 = vmatmul.mubr.bf16.gmra.mrb[0].mxu0 %v3688
  %v3760 = vpop.f32.mrb[0].mxu0
  %v3761 = vadd.f32 %v3665, %v3760
  %v3762 = vpop.f32.mrb[0].mxu0
  %v3763 = vpop.f32.mrb[0].mxu0
  %v3764 = vadd.f32 %v3665, %v3763
  %v3765 = vpop.f32.mrb[0].mxu0
  %3766 = vmatprep.mubr.bf16.mxu0 0
  %3767 = vmatmul.mubr.bf16.gmra.mrb[0].mxu0 %v3691
  %v3768 = vpop.f32.mrb[0].mxu0
  %v3769 = vadd.f32 %v3665, %v3768
  %v3770 = vpop.f32.mrb[0].mxu0
  %v3771 = vpop.f32.mrb[0].mxu0
  %v3772 = vadd.f32 %v3665, %v3771
  %v3773 = vpop.f32.mrb[0].mxu0
  %3774 = vmatprep.mubr.bf16.mxu0 0
  %3775 = vmatmul.mubr.bf16.gmra.mrb[0].mxu0 %v3694
  %v3776 = vpop.f32.mrb[0].mxu0
  %v3777 = vadd.f32 %v3665, %v3776
  %v3778 = vpop.f32.mrb[0].mxu0
  %v3779 = vpop.f32.mrb[0].mxu0
  %v3780 = vadd.f32 %v3665, %v3779
  %v3781 = vpop.f32.mrb[0].mxu0
  %3782 = vmatprep.mubr.bf16.mxu0 0
  %3783 = vmatmul.mubr.bf16.gmra.mrb[0].mxu0 %v3697
  %v3784 = vpop.f32.mrb[0].mxu0
  %v3785 = vadd.f32 %v3665, %v3784
  %v3786 = vpop.f32.mrb[0].mxu0
  %v3787 = vpop.f32.mrb[0].mxu0
  %v3788 = vadd.f32 %v3665, %v3787
  %v3789 = vpop.f32.mrb[0].mxu0
  %3790 = vmatprep.mubr.bf16.mxu0 0
  %3791 = vmatmul.mubr.bf16.gmra.mrb[0].mxu0 %v3700
  %v3792 = vpop.f32.mrb[0].mxu0
  %v3793 = vadd.f32 %v3665, %v3792
  %v3794 = vpop.f32.mrb[0].mxu0
  %v3795 = vpop.f32.mrb[0].mxu0
  %v3796 = vadd.f32 %v3665, %v3795
  %v3797 = vpop.f32.mrb[0].mxu0
  %3798 = vdwg.mxu0
  %v3799 = vpack.c.bf16 %v3740, %v3737
  %v3800 = vpack.c.bf16 %v3748, %v3745
  %v3801 = vpack.c.bf16 %v3756, %v3753
  %v3802 = vpack.c.bf16 %v3764, %v3761
  %v3803 = vpack.c.bf16 %v3772, %v3769
  %v3804 = vpack.c.bf16 %v3780, %v3777
  %v3805 = vpack.c.bf16 %v3788, %v3785
  %v3806 = vpack.c.bf16 %v3796, %v3793
  %v3807 = vld [vmem:[%s13] sm:$0xf]
  %v3808 = vld [vmem:[%s13 + $0x4] sm:$0xf]
  %v3809 = vld [vmem:[%s13 + $0x8] sm:$0xf]
  %v3810 = vld [vmem:[%s13 + $0xc] sm:$0xf]
  %v3811 = vld [vmem:[%s13 + $0x10] sm:$0xf]
  %v3812 = vld [vmem:[%s13 + $0x14] sm:$0xf]
  %v3813 = vld [vmem:[%s13 + $0x18] sm:$0xf]
  %v3814 = vld [vmem:[%s13 + $0x1c] sm:$0xf]
  %v3815 = vld [vmem:[%s18 + $0x14] ss:$0 sm:$0xff]
  %v3824 = vunpack.c.l.b16 %v3807
  %v3825 = vunpack.c.l.b16 %v3808
  %v3826 = vunpack.c.l.b16 %v3809
  %v3827 = vunpack.c.l.b16 %v3810
  %v3828 = vunpack.c.l.b16 %v3811
  %v3829 = vunpack.c.l.b16 %v3812
  %v3830 = vunpack.c.l.b16 %v3813
  %v3831 = vunpack.c.l.b16 %v3814
  %v3832 = vpack.c.b16 %v3825, %v3824
  %v3833 = vpack.c.b16 %v3827, %v3826
  %v3834 = vpack.c.b16 %v3829, %v3828
  %v3835 = vpack.c.b16 %v3831, %v3830
  %v3841 = vsel %vm1399, %v3799, 0
  %v3844 = vsel %vm1399, %v3800, 0
  %v3847 = vsel %vm1399, %v3801, 0
  %v3850 = vsel %vm1399, %v3802, 0
  %v3853 = vsel %vm1399, %v3803, 0
  %v3856 = vsel %vm1399, %v3804, 0
  %v3859 = vsel %vm1399, %v3805, 0
  %v3862 = vsel %vm1399, %v3806, 0
  %3864 = vmatprep.subr.bf16.mxu0 0
  %3865 = vmatpush1.bf16.msra.mxu0 %v3832
  %3866 = vmatprep.subr.bf16.mxu0 0
  %3867 = vmatpush1.bf16.msra.mxu0 %v3833
  %3868 = vmatprep.subr.bf16.mxu0 0
  %3869 = vmatpush1.bf16.msra.mxu0 %v3834
  %3870 = vmatprep.subr.bf16.mxu0 0
  %3871 = vmatpush1.bf16.msra.mxu0 %v3835
  %3872 = vmatprep.subr.bf16.mxu0 0
  %3873 = vmatpush1.bf16.msra.mxu0 0
  %3874 = vmatprep.subr.bf16.mxu0 0
  %3875 = vmatpush1.bf16.msra.mxu0 0
  %3876 = vmatprep.subr.bf16.mxu0 0
  %3877 = vmatpush1.bf16.msra.mxu0 0
  %3878 = vmatprep.subr.bf16.mxu0 0
  %3879 = vmatpush1.bf16.msra.mxu0 0
  %3880 = vmatprep.subr.bf16.mxu0 0
  %3881 = vmatpush1.bf16.msra.mxu0 0
  %3882 = vmatprep.subr.bf16.mxu0 0
  %3883 = vmatpush1.bf16.msra.mxu0 0
  %3884 = vmatprep.subr.bf16.mxu0 0
  %3885 = vmatpush1.bf16.msra.mxu0 0
  %3886 = vmatprep.subr.bf16.mxu0 0
  %3887 = vmatpush1.bf16.msra.mxu0 0
  %3888 = vmatprep.subr.bf16.mxu0 0
  %3889 = vmatpush1.bf16.msra.mxu0 0
  %3890 = vmatprep.subr.bf16.mxu0 0
  %3891 = vmatpush1.bf16.msra.mxu0 0
  %3892 = vmatprep.subr.bf16.mxu0 0
  %3893 = vmatpush1.bf16.msra.mxu0 0
  %3894 = vmatprep.subr.bf16.mxu0 0
  %3895 = vmatpush1.bf16.msra.mxu0 0
  %3896 = vmatprep.mubr.bf16.mxu0 0
  %3897 = vmatmul.mubr.bf16.gmra.mrb[0].mxu0 %v3841
  %v3898 = vpop.f32.mrb[0].mxu0
  %v3899 = vadd.f32 %v3815, %v3898
  %v3900 = vpop.f32.mrb[0].mxu0
  %v3901 = vpop.f32.mrb[0].mxu0
  %v3902 = vadd.f32 %v3815, %v3901
  %v3903 = vpop.f32.mrb[0].mxu0
  %3904 = vmatprep.mubr.bf16.mxu0 0
  %3905 = vmatmul.mubr.bf16.gmra.mrb[0].mxu0 %v3844
  %v3906 = vpop.f32.mrb[0].mxu0
  %v3907 = vadd.f32 %v3815, %v3906
  %v3908 = vpop.f32.mrb[0].mxu0
  %v3909 = vpop.f32.mrb[0].mxu0
  %v3910 = vadd.f32 %v3815, %v3909
  %v3911 = vpop.f32.mrb[0].mxu0
  %3912 = vmatprep.mubr.bf16.mxu0 0
  %3913 = vmatmul.mubr.bf16.gmra.mrb[0].mxu0 %v3847
  %v3914 = vpop.f32.mrb[0].mxu0
  %v3915 = vadd.f32 %v3815, %v3914
  %v3916 = vpop.f32.mrb[0].mxu0
  %v3917 = vpop.f32.mrb[0].mxu0
  %v3918 = vadd.f32 %v3815, %v3917
  %v3919 = vpop.f32.mrb[0].mxu0
  %3920 = vmatprep.mubr.bf16.mxu0 0
  %3921 = vmatmul.mubr.bf16.gmra.mrb[0].mxu0 %v3850
  %v3922 = vpop.f32.mrb[0].mxu0
  %v3923 = vadd.f32 %v3815, %v3922
  %v3924 = vpop.f32.mrb[0].mxu0
  %v3925 = vpop.f32.mrb[0].mxu0
  %v3926 = vadd.f32 %v3815, %v3925
  %v3927 = vpop.f32.mrb[0].mxu0
  %3928 = vmatprep.mubr.bf16.mxu0 0
  %3929 = vmatmul.mubr.bf16.gmra.mrb[0].mxu0 %v3853
  %v3930 = vpop.f32.mrb[0].mxu0
  %v3931 = vadd.f32 %v3815, %v3930
  %v3932 = vpop.f32.mrb[0].mxu0
  %v3933 = vpop.f32.mrb[0].mxu0
  %v3934 = vadd.f32 %v3815, %v3933
  %v3935 = vpop.f32.mrb[0].mxu0
  %3936 = vmatprep.mubr.bf16.mxu0 0
  %3937 = vmatmul.mubr.bf16.gmra.mrb[0].mxu0 %v3856
  %v3938 = vpop.f32.mrb[0].mxu0
  %v3939 = vadd.f32 %v3815, %v3938
  %v3940 = vpop.f32.mrb[0].mxu0
  %v3941 = vpop.f32.mrb[0].mxu0
  %v3942 = vadd.f32 %v3815, %v3941
  %v3943 = vpop.f32.mrb[0].mxu0
  %3944 = vmatprep.mubr.bf16.mxu0 0
  %3945 = vmatmul.mubr.bf16.gmra.mrb[0].mxu0 %v3859
  %v3946 = vpop.f32.mrb[0].mxu0
  %v3947 = vadd.f32 %v3815, %v3946
  %v3948 = vpop.f32.mrb[0].mxu0
  %v3949 = vpop.f32.mrb[0].mxu0
  %v3950 = vadd.f32 %v3815, %v3949
  %v3951 = vpop.f32.mrb[0].mxu0
  %3952 = vmatprep.mubr.bf16.mxu0 0
  %3953 = vmatmul.mubr.bf16.gmra.mrb[0].mxu0 %v3862
  %v3954 = vpop.f32.mrb[0].mxu0
  %v3955 = vadd.f32 %v3815, %v3954
  %v3956 = vpop.f32.mrb[0].mxu0
  %v3957 = vpop.f32.mrb[0].mxu0
  %v3958 = vadd.f32 %v3815, %v3957
  %v3959 = vpop.f32.mrb[0].mxu0
  %3960 = vdwg.mxu0
  %v3961 = vsel %vm1399, %v3899, 0.0
  %v3962 = vsel %vm1399, %v3902, 0.0
  %v3963 = vadd.f32 %v3961, %v3962
  %v3964 = vsel %vm1399, %v3907, 0.0
  %v3965 = vadd.f32 %v3963, %v3964
  %v3966 = vsel %vm1399, %v3910, 0.0
  %v3967 = vadd.f32 %v3965, %v3966
  %v3968 = vsel %vm1399, %v3915, 0.0
  %v3969 = vadd.f32 %v3967, %v3968
  %v3970 = vsel %vm1399, %v3918, 0.0
  %v3971 = vadd.f32 %v3969, %v3970
  %v3972 = vsel %vm1399, %v3923, 0.0
  %v3973 = vadd.f32 %v3971, %v3972
  %v3974 = vsel %vm1399, %v3926, 0.0
  %v3975 = vadd.f32 %v3973, %v3974
  %v3976 = vrot.slane %v3975, 4
  %v3977 = vadd.f32 %v3975, %v3976
  %v3978 = vrot.slane %v3977, 2
  %v3979 = vadd.f32 %v3977, %v3978
  %v3980 = vrot.slane %v3979, 1
  %v3981 = vadd.f32 %v3979, %v3980
  %v3982 = vsel %vm1399, %v3931, 0.0
  %v3983 = vsel %vm1399, %v3934, 0.0
  %v3984 = vadd.f32 %v3982, %v3983
  %v3985 = vsel %vm1399, %v3939, 0.0
  %v3986 = vadd.f32 %v3984, %v3985
  %v3987 = vsel %vm1399, %v3942, 0.0
  %v3988 = vadd.f32 %v3986, %v3987
  %v3989 = vsel %vm1399, %v3947, 0.0
  %v3990 = vadd.f32 %v3988, %v3989
  %v3991 = vsel %vm1399, %v3950, 0.0
  %v3992 = vadd.f32 %v3990, %v3991
  %v3993 = vsel %vm1399, %v3955, 0.0
  %v3994 = vadd.f32 %v3992, %v3993
  %v3995 = vsel %vm1399, %v3958, 0.0
  %v3996 = vadd.f32 %v3994, %v3995
  %v3997 = vrot.slane %v3996, 4
  %v3998 = vadd.f32 %v3996, %v3997
  %v3999 = vrot.slane %v3998, 2
  %v4000 = vadd.f32 %v3998, %v3999
  %v4001 = vrot.slane %v4000, 1
  %v4002 = vadd.f32 %v4000, %v4001
  %v4003 = vmul.f32 %v3981, 0.015625
  %v4004 = vmul.f32 %v4002, 0.015625
  %v4005 = vsub.f32 %v3899, %v4003
  %v4006 = vsub.f32 %v3902, %v4003
  %v4007 = vsub.f32 %v3907, %v4003
  %v4008 = vsub.f32 %v3910, %v4003
  %v4009 = vsub.f32 %v3915, %v4003
  %v4010 = vsub.f32 %v3918, %v4003
  %v4011 = vsub.f32 %v3923, %v4003
  %v4012 = vsub.f32 %v3926, %v4003
  %v4013 = vsub.f32 %v3931, %v4004
  %v4014 = vsub.f32 %v3934, %v4004
  %v4015 = vsub.f32 %v3939, %v4004
  %v4016 = vsub.f32 %v3942, %v4004
  %v4017 = vsub.f32 %v3947, %v4004
  %v4018 = vsub.f32 %v3950, %v4004
  %v4019 = vsub.f32 %v3955, %v4004
  %v4020 = vsub.f32 %v3958, %v4004
  %v4021 = vmul.f32 %v4005, %v4005
  %v4022 = vmul.f32 %v4006, %v4006
  %v4023 = vmul.f32 %v4007, %v4007
  %v4024 = vmul.f32 %v4008, %v4008
  %v4025 = vmul.f32 %v4009, %v4009
  %v4026 = vmul.f32 %v4010, %v4010
  %v4027 = vmul.f32 %v4011, %v4011
  %v4028 = vmul.f32 %v4012, %v4012
  %v4029 = vmul.f32 %v4013, %v4013
  %v4030 = vmul.f32 %v4014, %v4014
  %v4031 = vmul.f32 %v4015, %v4015
  %v4032 = vmul.f32 %v4016, %v4016
  %v4033 = vmul.f32 %v4017, %v4017
  %v4034 = vmul.f32 %v4018, %v4018
  %v4035 = vmul.f32 %v4019, %v4019
  %v4036 = vmul.f32 %v4020, %v4020
  %v4037 = vsel %vm1399, %v4021, 0.0
  %v4038 = vsel %vm1399, %v4022, 0.0
  %v4039 = vadd.f32 %v4037, %v4038
  %v4040 = vsel %vm1399, %v4023, 0.0
  %v4041 = vadd.f32 %v4039, %v4040
  %v4042 = vsel %vm1399, %v4024, 0.0
  %v4043 = vadd.f32 %v4041, %v4042
  %v4044 = vsel %vm1399, %v4025, 0.0
  %v4045 = vadd.f32 %v4043, %v4044
  %v4046 = vsel %vm1399, %v4026, 0.0
  %v4047 = vadd.f32 %v4045, %v4046
  %v4048 = vsel %vm1399, %v4027, 0.0
  %v4049 = vadd.f32 %v4047, %v4048
  %v4050 = vsel %vm1399, %v4028, 0.0
  %v4051 = vadd.f32 %v4049, %v4050
  %v4052 = vrot.slane %v4051, 4
  %v4053 = vadd.f32 %v4051, %v4052
  %v4054 = vrot.slane %v4053, 2
  %v4055 = vadd.f32 %v4053, %v4054
  %v4056 = vrot.slane %v4055, 1
  %v4057 = vadd.f32 %v4055, %v4056
  %v4058 = vsel %vm1399, %v4029, 0.0
  %v4059 = vsel %vm1399, %v4030, 0.0
  %v4060 = vadd.f32 %v4058, %v4059
  %v4061 = vsel %vm1399, %v4031, 0.0
  %v4062 = vadd.f32 %v4060, %v4061
  %v4063 = vsel %vm1399, %v4032, 0.0
  %v4064 = vadd.f32 %v4062, %v4063
  %v4065 = vsel %vm1399, %v4033, 0.0
  %v4066 = vadd.f32 %v4064, %v4065
  %v4067 = vsel %vm1399, %v4034, 0.0
  %v4068 = vadd.f32 %v4066, %v4067
  %v4069 = vsel %vm1399, %v4035, 0.0
  %v4070 = vadd.f32 %v4068, %v4069
  %v4071 = vsel %vm1399, %v4036, 0.0
  %v4072 = vadd.f32 %v4070, %v4071
  %v4073 = vrot.slane %v4072, 4
  %v4074 = vadd.f32 %v4072, %v4073
  %v4075 = vrot.slane %v4074, 2
  %v4076 = vadd.f32 %v4074, %v4075
  %v4077 = vrot.slane %v4076, 1
  %v4078 = vadd.f32 %v4076, %v4077
  %v4079 = vmul.f32 %v4057, 0.015625
  %v4080 = vmul.f32 %v4078, 0.015625
  %v4081 = vadd.f32 %v4079, 1e-05
  %v4082 = vadd.f32 %v4080, 1e-05
  %v4083 = vrsqrt.pop %v4081
  %v4084 = vrsqrt.pop %v4082
  %v4085 = vmul.f32 %v4005, %v4083
  %v4086 = vmul.f32 %v4006, %v4083
  %v4087 = vmul.f32 %v4007, %v4083
  %v4088 = vmul.f32 %v4008, %v4083
  %v4089 = vmul.f32 %v4009, %v4083
  %v4090 = vmul.f32 %v4010, %v4083
  %v4091 = vmul.f32 %v4011, %v4083
  %v4092 = vmul.f32 %v4012, %v4083
  %v4093 = vmul.f32 %v4013, %v4084
  %v4094 = vmul.f32 %v4014, %v4084
  %v4095 = vmul.f32 %v4015, %v4084
  %v4096 = vmul.f32 %v4016, %v4084
  %v4097 = vmul.f32 %v4017, %v4084
  %v4098 = vmul.f32 %v4018, %v4084
  %v4099 = vmul.f32 %v4019, %v4084
  %v4100 = vmul.f32 %v4020, %v4084
  %v4101 = vmul.f32 %v4085, 0.5
  %v4102 = vmul.f32 %v4086, 0.5
  %v4103 = vmul.f32 %v4087, 0.5
  %v4104 = vmul.f32 %v4088, 0.5
  %v4105 = vmul.f32 %v4089, 0.5
  %v4106 = vmul.f32 %v4090, 0.5
  %v4107 = vmul.f32 %v4091, 0.5
  %v4108 = vmul.f32 %v4092, 0.5
  %v4109 = vmul.f32 %v4093, 0.5
  %v4110 = vmul.f32 %v4094, 0.5
  %v4111 = vmul.f32 %v4095, 0.5
  %v4112 = vmul.f32 %v4096, 0.5
  %v4113 = vmul.f32 %v4097, 0.5
  %v4114 = vmul.f32 %v4098, 0.5
  %v4115 = vmul.f32 %v4099, 0.5
  %v4116 = vmul.f32 %v4100, 0.5
  %v4117 = vmul.f32 %v4085, 0.70710677
  %v4118 = vmul.f32 %v4086, 0.70710677
  %v4119 = vmul.f32 %v4087, 0.70710677
  %v4120 = vmul.f32 %v4088, 0.70710677
  %v4121 = vmul.f32 %v4089, 0.70710677
  %v4122 = vmul.f32 %v4090, 0.70710677
  %v4123 = vmul.f32 %v4091, 0.70710677
  %v4124 = vmul.f32 %v4092, 0.70710677
  %v4125 = vmul.f32 %v4093, 0.70710677
  %v4126 = vmul.f32 %v4094, 0.70710677
  %v4127 = vmul.f32 %v4095, 0.70710677
  %v4128 = vmul.f32 %v4096, 0.70710677
  %v4129 = vmul.f32 %v4097, 0.70710677
  %v4130 = vmul.f32 %v4098, 0.70710677
  %v4131 = vmul.f32 %v4099, 0.70710677
  %v4132 = vmul.f32 %v4100, 0.70710677
  %v4133 = verf.f32.pop %v4117
  %v4134 = verf.f32.pop %v4118
  %v4135 = verf.f32.pop %v4119
  %v4136 = verf.f32.pop %v4120
  %v4137 = verf.f32.pop %v4121
  %v4138 = verf.f32.pop %v4122
  %v4139 = verf.f32.pop %v4123
  %v4140 = verf.f32.pop %v4124
  %v4141 = verf.f32.pop %v4125
  %v4142 = verf.f32.pop %v4126
  %v4143 = verf.f32.pop %v4127
  %v4144 = verf.f32.pop %v4128
  %v4145 = verf.f32.pop %v4129
  %v4146 = verf.f32.pop %v4130
  %v4147 = verf.f32.pop %v4131
  %v4148 = verf.f32.pop %v4132
  %v4149 = vadd.f32 %v4133, 1.0
  %v4150 = vadd.f32 %v4134, 1.0
  %v4151 = vadd.f32 %v4135, 1.0
  %v4152 = vadd.f32 %v4136, 1.0
  %v4153 = vadd.f32 %v4137, 1.0
  %v4154 = vadd.f32 %v4138, 1.0
  %v4155 = vadd.f32 %v4139, 1.0
  %v4156 = vadd.f32 %v4140, 1.0
  %v4157 = vadd.f32 %v4141, 1.0
  %v4158 = vadd.f32 %v4142, 1.0
  %v4159 = vadd.f32 %v4143, 1.0
  %v4160 = vadd.f32 %v4144, 1.0
  %v4161 = vadd.f32 %v4145, 1.0
  %v4162 = vadd.f32 %v4146, 1.0
  %v4163 = vadd.f32 %v4147, 1.0
  %v4164 = vadd.f32 %v4148, 1.0
  %v4165 = vmul.f32 %v4101, %v4149
  %v4166 = vmul.f32 %v4102, %v4150
  %v4167 = vmul.f32 %v4103, %v4151
  %v4168 = vmul.f32 %v4104, %v4152
  %v4169 = vmul.f32 %v4105, %v4153
  %v4170 = vmul.f32 %v4106, %v4154
  %v4171 = vmul.f32 %v4107, %v4155
  %v4172 = vmul.f32 %v4108, %v4156
  %v4173 = vmul.f32 %v4109, %v4157
  %v4174 = vmul.f32 %v4110, %v4158
  %v4175 = vmul.f32 %v4111, %v4159
  %v4176 = vmul.f32 %v4112, %v4160
  %v4177 = vmul.f32 %v4113, %v4161
  %v4178 = vmul.f32 %v4114, %v4162
  %v4179 = vmul.f32 %v4115, %v4163
  %v4180 = vmul.f32 %v4116, %v4164
  %v4181 = vpack.c.bf16 %v4166, %v4165
  %v4182 = vpack.c.bf16 %v4168, %v4167
  %v4183 = vpack.c.bf16 %v4170, %v4169
  %v4184 = vpack.c.bf16 %v4172, %v4171
  %v4185 = vpack.c.bf16 %v4174, %v4173
  %v4186 = vpack.c.bf16 %v4176, %v4175
  %v4187 = vpack.c.bf16 %v4178, %v4177
  %v4188 = vpack.c.bf16 %v4180, %v4179
  %v4189 = vld [vmem:[%s14] sm:$0xf]
  %v4190 = vld [vmem:[%s14 + $0x4] sm:$0xf]
  %v4191 = vld [vmem:[%s14 + $0x8] sm:$0xf]
  %v4192 = vld [vmem:[%s14 + $0xc] sm:$0xf]
  %v4193 = vld [vmem:[%s14 + $0x10] sm:$0xf]
  %v4194 = vld [vmem:[%s14 + $0x14] sm:$0xf]
  %v4195 = vld [vmem:[%s14 + $0x18] sm:$0xf]
  %v4196 = vld [vmem:[%s14 + $0x1c] sm:$0xf]
  %v4197 = vld [vmem:[%s18 + $0x15] ss:$0 sm:$0xff]
  %v4206 = vunpack.c.l.b16 %v4189
  %v4207 = vunpack.c.l.b16 %v4190
  %v4208 = vunpack.c.l.b16 %v4191
  %v4209 = vunpack.c.l.b16 %v4192
  %v4210 = vunpack.c.l.b16 %v4193
  %v4211 = vunpack.c.l.b16 %v4194
  %v4212 = vunpack.c.l.b16 %v4195
  %v4213 = vunpack.c.l.b16 %v4196
  %v4214 = vpack.c.b16 %v4207, %v4206
  %v4215 = vpack.c.b16 %v4209, %v4208
  %v4216 = vpack.c.b16 %v4211, %v4210
  %v4217 = vpack.c.b16 %v4213, %v4212
  %v4223 = vsel %vm1399, %v4181, 0
  %v4226 = vsel %vm1399, %v4182, 0
  %v4229 = vsel %vm1399, %v4183, 0
  %v4232 = vsel %vm1399, %v4184, 0
  %v4235 = vsel %vm1399, %v4185, 0
  %v4238 = vsel %vm1399, %v4186, 0
  %v4241 = vsel %vm1399, %v4187, 0
  %v4244 = vsel %vm1399, %v4188, 0
  %4246 = vmatprep.subr.bf16.mxu0 0
  %4247 = vmatpush1.bf16.msra.mxu0 %v4214
  %4248 = vmatprep.subr.bf16.mxu0 0
  %4249 = vmatpush1.bf16.msra.mxu0 %v4215
  %4250 = vmatprep.subr.bf16.mxu0 0
  %4251 = vmatpush1.bf16.msra.mxu0 %v4216
  %4252 = vmatprep.subr.bf16.mxu0 0
  %4253 = vmatpush1.bf16.msra.mxu0 %v4217
  %4254 = vmatprep.subr.bf16.mxu0 0
  %4255 = vmatpush1.bf16.msra.mxu0 0
  %4256 = vmatprep.subr.bf16.mxu0 0
  %4257 = vmatpush1.bf16.msra.mxu0 0
  %4258 = vmatprep.subr.bf16.mxu0 0
  %4259 = vmatpush1.bf16.msra.mxu0 0
  %4260 = vmatprep.subr.bf16.mxu0 0
  %4261 = vmatpush1.bf16.msra.mxu0 0
  %4262 = vmatprep.subr.bf16.mxu0 0
  %4263 = vmatpush1.bf16.msra.mxu0 0
  %4264 = vmatprep.subr.bf16.mxu0 0
  %4265 = vmatpush1.bf16.msra.mxu0 0
  %4266 = vmatprep.subr.bf16.mxu0 0
  %4267 = vmatpush1.bf16.msra.mxu0 0
  %4268 = vmatprep.subr.bf16.mxu0 0
  %4269 = vmatpush1.bf16.msra.mxu0 0
  %4270 = vmatprep.subr.bf16.mxu0 0
  %4271 = vmatpush1.bf16.msra.mxu0 0
  %4272 = vmatprep.subr.bf16.mxu0 0
  %4273 = vmatpush1.bf16.msra.mxu0 0
  %4274 = vmatprep.subr.bf16.mxu0 0
  %4275 = vmatpush1.bf16.msra.mxu0 0
  %4276 = vmatprep.subr.bf16.mxu0 0
  %4277 = vmatpush1.bf16.msra.mxu0 0
  %4278 = vmatprep.mubr.bf16.mxu0 0
  %4279 = vmatmul.mubr.bf16.gmra.mrb[0].mxu0 %v4223
  %v4280 = vpop.f32.mrb[0].mxu0
  %v4281 = vadd.f32 %v4197, %v4280
  %v4282 = vpop.f32.mrb[0].mxu0
  %v4283 = vpop.f32.mrb[0].mxu0
  %v4284 = vadd.f32 %v4197, %v4283
  %v4285 = vpop.f32.mrb[0].mxu0
  %4286 = vmatprep.mubr.bf16.mxu0 0
  %4287 = vmatmul.mubr.bf16.gmra.mrb[0].mxu0 %v4226
  %v4288 = vpop.f32.mrb[0].mxu0
  %v4289 = vadd.f32 %v4197, %v4288
  %v4290 = vpop.f32.mrb[0].mxu0
  %v4291 = vpop.f32.mrb[0].mxu0
  %v4292 = vadd.f32 %v4197, %v4291
  %v4293 = vpop.f32.mrb[0].mxu0
  %4294 = vmatprep.mubr.bf16.mxu0 0
  %4295 = vmatmul.mubr.bf16.gmra.mrb[0].mxu0 %v4229
  %v4296 = vpop.f32.mrb[0].mxu0
  %v4297 = vadd.f32 %v4197, %v4296
  %v4298 = vpop.f32.mrb[0].mxu0
  %v4299 = vpop.f32.mrb[0].mxu0
  %v4300 = vadd.f32 %v4197, %v4299
  %v4301 = vpop.f32.mrb[0].mxu0
  %4302 = vmatprep.mubr.bf16.mxu0 0
  %4303 = vmatmul.mubr.bf16.gmra.mrb[0].mxu0 %v4232
  %v4304 = vpop.f32.mrb[0].mxu0
  %v4305 = vadd.f32 %v4197, %v4304
  %v4306 = vpop.f32.mrb[0].mxu0
  %v4307 = vpop.f32.mrb[0].mxu0
  %v4308 = vadd.f32 %v4197, %v4307
  %v4309 = vpop.f32.mrb[0].mxu0
  %4310 = vmatprep.mubr.bf16.mxu0 0
  %4311 = vmatmul.mubr.bf16.gmra.mrb[0].mxu0 %v4235
  %v4312 = vpop.f32.mrb[0].mxu0
  %v4313 = vadd.f32 %v4197, %v4312
  %v4314 = vpop.f32.mrb[0].mxu0
  %v4315 = vpop.f32.mrb[0].mxu0
  %v4316 = vadd.f32 %v4197, %v4315
  %v4317 = vpop.f32.mrb[0].mxu0
  %4318 = vmatprep.mubr.bf16.mxu0 0
  %4319 = vmatmul.mubr.bf16.gmra.mrb[0].mxu0 %v4238
  %v4320 = vpop.f32.mrb[0].mxu0
  %v4321 = vadd.f32 %v4197, %v4320
  %v4322 = vpop.f32.mrb[0].mxu0
  %v4323 = vpop.f32.mrb[0].mxu0
  %v4324 = vadd.f32 %v4197, %v4323
  %v4325 = vpop.f32.mrb[0].mxu0
  %4326 = vmatprep.mubr.bf16.mxu0 0
  %4327 = vmatmul.mubr.bf16.gmra.mrb[0].mxu0 %v4241
  %v4328 = vpop.f32.mrb[0].mxu0
  %v4329 = vadd.f32 %v4197, %v4328
  %v4330 = vpop.f32.mrb[0].mxu0
  %v4331 = vpop.f32.mrb[0].mxu0
  %v4332 = vadd.f32 %v4197, %v4331
  %v4333 = vpop.f32.mrb[0].mxu0
  %4334 = vmatprep.mubr.bf16.mxu0 0
  %4335 = vmatmul.mubr.bf16.gmra.mrb[0].mxu0 %v4244
  %v4336 = vpop.f32.mrb[0].mxu0
  %v4337 = vadd.f32 %v4197, %v4336
  %v4338 = vpop.f32.mrb[0].mxu0
  %v4339 = vpop.f32.mrb[0].mxu0
  %v4340 = vadd.f32 %v4197, %v4339
  %v4341 = vpop.f32.mrb[0].mxu0
  %4342 = vdwg.mxu0
  %v4343 = vpack.c.bf16 %v4284, %v4281
  %v4344 = vpack.c.bf16 %v4292, %v4289
  %v4345 = vpack.c.bf16 %v4300, %v4297
  %v4346 = vpack.c.bf16 %v4308, %v4305
  %v4347 = vpack.c.bf16 %v4316, %v4313
  %v4348 = vpack.c.bf16 %v4324, %v4321
  %v4349 = vpack.c.bf16 %v4332, %v4329
  %v4350 = vpack.c.bf16 %v4340, %v4337
  %v4351 = vld [vmem:[%s15] sm:$0xf]
  %v4352 = vld [vmem:[%s15 + $0x4] sm:$0xf]
  %v4353 = vld [vmem:[%s15 + $0x8] sm:$0xf]
  %v4354 = vld [vmem:[%s15 + $0xc] sm:$0xf]
  %v4355 = vld [vmem:[%s15 + $0x10] sm:$0xf]
  %v4356 = vld [vmem:[%s15 + $0x14] sm:$0xf]
  %v4357 = vld [vmem:[%s15 + $0x18] sm:$0xf]
  %v4358 = vld [vmem:[%s15 + $0x1c] sm:$0xf]
  %v4359 = vld [vmem:[%s15 + $0x20] sm:$0xf]
  %v4360 = vld [vmem:[%s15 + $0x24] sm:$0xf]
  %v4361 = vld [vmem:[%s15 + $0x28] sm:$0xf]
  %v4362 = vld [vmem:[%s15 + $0x2c] sm:$0xf]
  %v4363 = vld [vmem:[%s15 + $0x30] sm:$0xf]
  %v4364 = vld [vmem:[%s15 + $0x34] sm:$0xf]
  %v4365 = vld [vmem:[%s15 + $0x38] sm:$0xf]
  %v4366 = vld [vmem:[%s15 + $0x3c] sm:$0xf]
  %v4367 = vld [vmem:[%s18 + $0x16] ss:$0 sm:$0xff]
  %v4384 = vunpack.c.l.b16 %v4351
  %v4385 = vunpack.c.l.b16 %v4352
  %v4386 = vunpack.c.l.b16 %v4353
  %v4387 = vunpack.c.l.b16 %v4354
  %v4388 = vunpack.c.l.b16 %v4355
  %v4389 = vunpack.c.l.b16 %v4356
  %v4390 = vunpack.c.l.b16 %v4357
  %v4391 = vunpack.c.l.b16 %v4358
  %v4392 = vunpack.c.l.b16 %v4359
  %v4393 = vunpack.c.l.b16 %v4360
  %v4394 = vunpack.c.l.b16 %v4361
  %v4395 = vunpack.c.l.b16 %v4362
  %v4396 = vunpack.c.l.b16 %v4363
  %v4397 = vunpack.c.l.b16 %v4364
  %v4398 = vunpack.c.l.b16 %v4365
  %v4399 = vunpack.c.l.b16 %v4366
  %v4400 = vpack.c.b16 %v4385, %v4384
  %v4401 = vpack.c.b16 %v4387, %v4386
  %v4402 = vpack.c.b16 %v4389, %v4388
  %v4403 = vpack.c.b16 %v4391, %v4390
  %v4404 = vpack.c.b16 %v4393, %v4392
  %v4405 = vpack.c.b16 %v4395, %v4394
  %v4406 = vpack.c.b16 %v4397, %v4396
  %v4407 = vpack.c.b16 %v4399, %v4398
  %4416 = vmatprep.subr.bf16.mxu0 0
  %4417 = vmatpush1.bf16.msra.mxu0 %v4400
  %4418 = vmatprep.subr.bf16.mxu0 0
  %4419 = vmatpush1.bf16.msra.mxu0 %v4401
  %4420 = vmatprep.subr.bf16.mxu0 0
  %4421 = vmatpush1.bf16.msra.mxu0 %v4402
  %4422 = vmatprep.subr.bf16.mxu0 0
  %4423 = vmatpush1.bf16.msra.mxu0 %v4403
  %4424 = vmatprep.subr.bf16.mxu0 0
  %4425 = vmatpush1.bf16.msra.mxu0 %v4404
  %4426 = vmatprep.subr.bf16.mxu0 0
  %4427 = vmatpush1.bf16.msra.mxu0 %v4405
  %4428 = vmatprep.subr.bf16.mxu0 0
  %4429 = vmatpush1.bf16.msra.mxu0 %v4406
  %4430 = vmatprep.subr.bf16.mxu0 0
  %4431 = vmatpush1.bf16.msra.mxu0 %v4407
  %4432 = vmatprep.subr.bf16.mxu0 0
  %4433 = vmatpush1.bf16.msra.mxu0 0
  %4434 = vmatprep.subr.bf16.mxu0 0
  %4435 = vmatpush1.bf16.msra.mxu0 0
  %4436 = vmatprep.subr.bf16.mxu0 0
  %4437 = vmatpush1.bf16.msra.mxu0 0
  %4438 = vmatprep.subr.bf16.mxu0 0
  %4439 = vmatpush1.bf16.msra.mxu0 0
  %4440 = vmatprep.subr.bf16.mxu0 0
  %4441 = vmatpush1.bf16.msra.mxu0 0
  %4442 = vmatprep.subr.bf16.mxu0 0
  %4443 = vmatpush1.bf16.msra.mxu0 0
  %4444 = vmatprep.subr.bf16.mxu0 0
  %4445 = vmatpush1.bf16.msra.mxu0 0
  %4446 = vmatprep.subr.bf16.mxu0 0
  %4447 = vmatpush1.bf16.msra.mxu0 0
  %4448 = vmatprep.mubr.bf16.mxu0 0
  %4449 = vmatmul.mubr.bf16.gmra.mrb[0].mxu0 %v4343
  %v4450 = vpop.f32.mrb[0].mxu0
  %v4451 = vadd.f32 %v4367, %v4450
  %v4452 = vpop.f32.mrb[0].mxu0
  %v4453 = vpop.f32.mrb[0].mxu0
  %v4454 = vadd.f32 %v4367, %v4453
  %v4455 = vpop.f32.mrb[0].mxu0
  %4456 = vmatprep.mubr.bf16.mxu0 0
  %4457 = vmatmul.mubr.bf16.gmra.mrb[0].mxu0 %v4344
  %v4458 = vpop.f32.mrb[0].mxu0
  %v4459 = vadd.f32 %v4367, %v4458
  %v4460 = vpop.f32.mrb[0].mxu0
  %v4461 = vpop.f32.mrb[0].mxu0
  %v4462 = vadd.f32 %v4367, %v4461
  %v4463 = vpop.f32.mrb[0].mxu0
  %4464 = vmatprep.mubr.bf16.mxu0 0
  %4465 = vmatmul.mubr.bf16.gmra.mrb[0].mxu0 %v4345
  %v4466 = vpop.f32.mrb[0].mxu0
  %v4467 = vadd.f32 %v4367, %v4466
  %v4468 = vpop.f32.mrb[0].mxu0
  %v4469 = vpop.f32.mrb[0].mxu0
  %v4470 = vadd.f32 %v4367, %v4469
  %v4471 = vpop.f32.mrb[0].mxu0
  %4472 = vmatprep.mubr.bf16.mxu0 0
  %4473 = vmatmul.mubr.bf16.gmra.mrb[0].mxu0 %v4346
  %v4474 = vpop.f32.mrb[0].mxu0
  %v4475 = vadd.f32 %v4367, %v4474
  %v4476 = vpop.f32.mrb[0].mxu0
  %v4477 = vpop.f32.mrb[0].mxu0
  %v4478 = vadd.f32 %v4367, %v4477
  %v4479 = vpop.f32.mrb[0].mxu0
  %4480 = vmatprep.mubr.bf16.mxu0 0
  %4481 = vmatmul.mubr.bf16.gmra.mrb[0].mxu0 %v4347
  %v4482 = vpop.f32.mrb[0].mxu0
  %v4483 = vadd.f32 %v4367, %v4482
  %v4484 = vpop.f32.mrb[0].mxu0
  %v4485 = vpop.f32.mrb[0].mxu0
  %v4486 = vadd.f32 %v4367, %v4485
  %v4487 = vpop.f32.mrb[0].mxu0
  %4488 = vmatprep.mubr.bf16.mxu0 0
  %4489 = vmatmul.mubr.bf16.gmra.mrb[0].mxu0 %v4348
  %v4490 = vpop.f32.mrb[0].mxu0
  %v4491 = vadd.f32 %v4367, %v4490
  %v4492 = vpop.f32.mrb[0].mxu0
  %v4493 = vpop.f32.mrb[0].mxu0
  %v4494 = vadd.f32 %v4367, %v4493
  %v4495 = vpop.f32.mrb[0].mxu0
  %4496 = vmatprep.mubr.bf16.mxu0 0
  %4497 = vmatmul.mubr.bf16.gmra.mrb[0].mxu0 %v4349
  %v4498 = vpop.f32.mrb[0].mxu0
  %v4499 = vadd.f32 %v4367, %v4498
  %v4500 = vpop.f32.mrb[0].mxu0
  %v4501 = vpop.f32.mrb[0].mxu0
  %v4502 = vadd.f32 %v4367, %v4501
  %v4503 = vpop.f32.mrb[0].mxu0
  %4504 = vmatprep.mubr.bf16.mxu0 0
  %4505 = vmatmul.mubr.bf16.gmra.mrb[0].mxu0 %v4350
  %v4506 = vpop.f32.mrb[0].mxu0
  %v4507 = vadd.f32 %v4367, %v4506
  %v4508 = vpop.f32.mrb[0].mxu0
  %v4509 = vpop.f32.mrb[0].mxu0
  %v4510 = vadd.f32 %v4367, %v4509
  %v4511 = vpop.f32.mrb[0].mxu0
  %4512 = vdwg.mxu0
  %v4513 = vadd.f32 %v4451, %v4454
  %v4514 = vadd.f32 %v4513, %v4459
  %v4515 = vadd.f32 %v4514, %v4462
  %v4516 = vadd.f32 %v4515, %v4467
  %v4517 = vadd.f32 %v4516, %v4470
  %v4518 = vadd.f32 %v4517, %v4475
  %v4519 = vadd.f32 %v4518, %v4478
  %v4520 = vrot.slane %v4519, 4
  %v4521 = vadd.f32 %v4519, %v4520
  %v4522 = vrot.slane %v4521, 2
  %v4523 = vadd.f32 %v4521, %v4522
  %v4524 = vrot.slane %v4523, 1
  %v4525 = vadd.f32 %v4523, %v4524
  %v4526 = vadd.f32 %v4483, %v4486
  %v4527 = vadd.f32 %v4526, %v4491
  %v4528 = vadd.f32 %v4527, %v4494
  %v4529 = vadd.f32 %v4528, %v4499
  %v4530 = vadd.f32 %v4529, %v4502
  %v4531 = vadd.f32 %v4530, %v4507
  %v4532 = vadd.f32 %v4531, %v4510
  %v4533 = vrot.slane %v4532, 4
  %v4534 = vadd.f32 %v4532, %v4533
  %v4535 = vrot.slane %v4534, 2
  %v4536 = vadd.f32 %v4534, %v4535
  %v4537 = vrot.slane %v4536, 1
  %v4538 = vadd.f32 %v4536, %v4537
  %v4539 = vmul.f32 %v4525, 0.015625
  %v4540 = vmul.f32 %v4538, 0.015625
  %v4541 = vsub.f32 %v4451, %v4539
  %v4542 = vsub.f32 %v4454, %v4539
  %v4543 = vsub.f32 %v4459, %v4539
  %v4544 = vsub.f32 %v4462, %v4539
  %v4545 = vsub.f32 %v4467, %v4539
  %v4546 = vsub.f32 %v4470, %v4539
  %v4547 = vsub.f32 %v4475, %v4539
  %v4548 = vsub.f32 %v4478, %v4539
  %v4549 = vsub.f32 %v4483, %v4540
  %v4550 = vsub.f32 %v4486, %v4540
  %v4551 = vsub.f32 %v4491, %v4540
  %v4552 = vsub.f32 %v4494, %v4540
  %v4553 = vsub.f32 %v4499, %v4540
  %v4554 = vsub.f32 %v4502, %v4540
  %v4555 = vsub.f32 %v4507, %v4540
  %v4556 = vsub.f32 %v4510, %v4540
  %v4557 = vmul.f32 %v4541, %v4541
  %v4558 = vmul.f32 %v4542, %v4542
  %v4559 = vmul.f32 %v4543, %v4543
  %v4560 = vmul.f32 %v4544, %v4544
  %v4561 = vmul.f32 %v4545, %v4545
  %v4562 = vmul.f32 %v4546, %v4546
  %v4563 = vmul.f32 %v4547, %v4547
  %v4564 = vmul.f32 %v4548, %v4548
  %v4565 = vmul.f32 %v4549, %v4549
  %v4566 = vmul.f32 %v4550, %v4550
  %v4567 = vmul.f32 %v4551, %v4551
  %v4568 = vmul.f32 %v4552, %v4552
  %v4569 = vmul.f32 %v4553, %v4553
  %v4570 = vmul.f32 %v4554, %v4554
  %v4571 = vmul.f32 %v4555, %v4555
  %v4572 = vmul.f32 %v4556, %v4556
  %v4573 = vadd.f32 %v4557, %v4558
  %v4574 = vadd.f32 %v4573, %v4559
  %v4575 = vadd.f32 %v4574, %v4560
  %v4576 = vadd.f32 %v4575, %v4561
  %v4577 = vadd.f32 %v4576, %v4562
  %v4578 = vadd.f32 %v4577, %v4563
  %v4579 = vadd.f32 %v4578, %v4564
  %v4580 = vrot.slane %v4579, 4
  %v4581 = vadd.f32 %v4579, %v4580
  %v4582 = vrot.slane %v4581, 2
  %v4583 = vadd.f32 %v4581, %v4582
  %v4584 = vrot.slane %v4583, 1
  %v4585 = vadd.f32 %v4583, %v4584
  %v4586 = vadd.f32 %v4565, %v4566
  %v4587 = vadd.f32 %v4586, %v4567
  %v4588 = vadd.f32 %v4587, %v4568
  %v4589 = vadd.f32 %v4588, %v4569
  %v4590 = vadd.f32 %v4589, %v4570
  %v4591 = vadd.f32 %v4590, %v4571
  %v4592 = vadd.f32 %v4591, %v4572
  %v4593 = vrot.slane %v4592, 4
  %v4594 = vadd.f32 %v4592, %v4593
  %v4595 = vrot.slane %v4594, 2
  %v4596 = vadd.f32 %v4594, %v4595
  %v4597 = vrot.slane %v4596, 1
  %v4598 = vadd.f32 %v4596, %v4597
  %v4599 = vmul.f32 %v4585, 0.015625
  %v4600 = vmul.f32 %v4598, 0.015625
  %v4601 = vadd.f32 %v4599, 1e-05
  %v4602 = vadd.f32 %v4600, 1e-05
  %v4603 = vrsqrt.pop %v4601
  %v4604 = vrsqrt.pop %v4602
  %v4605 = vmul.f32 %v4541, %v4603
  %v4606 = vmul.f32 %v4542, %v4603
  %v4607 = vmul.f32 %v4543, %v4603
  %v4608 = vmul.f32 %v4544, %v4603
  %v4609 = vmul.f32 %v4545, %v4603
  %v4610 = vmul.f32 %v4546, %v4603
  %v4611 = vmul.f32 %v4547, %v4603
  %v4612 = vmul.f32 %v4548, %v4603
  %v4613 = vmul.f32 %v4549, %v4604
  %v4614 = vmul.f32 %v4550, %v4604
  %v4615 = vmul.f32 %v4551, %v4604
  %v4616 = vmul.f32 %v4552, %v4604
  %v4617 = vmul.f32 %v4553, %v4604
  %v4618 = vmul.f32 %v4554, %v4604
  %v4619 = vmul.f32 %v4555, %v4604
  %v4620 = vmul.f32 %v4556, %v4604
  %v4621 = vmul.f32 %v4605, 0.5
  %v4622 = vmul.f32 %v4606, 0.5
  %v4623 = vmul.f32 %v4607, 0.5
  %v4624 = vmul.f32 %v4608, 0.5
  %v4625 = vmul.f32 %v4609, 0.5
  %v4626 = vmul.f32 %v4610, 0.5
  %v4627 = vmul.f32 %v4611, 0.5
  %v4628 = vmul.f32 %v4612, 0.5
  %v4629 = vmul.f32 %v4613, 0.5
  %v4630 = vmul.f32 %v4614, 0.5
  %v4631 = vmul.f32 %v4615, 0.5
  %v4632 = vmul.f32 %v4616, 0.5
  %v4633 = vmul.f32 %v4617, 0.5
  %v4634 = vmul.f32 %v4618, 0.5
  %v4635 = vmul.f32 %v4619, 0.5
  %v4636 = vmul.f32 %v4620, 0.5
  %v4637 = vmul.f32 %v4605, 0.70710677
  %v4638 = vmul.f32 %v4606, 0.70710677
  %v4639 = vmul.f32 %v4607, 0.70710677
  %v4640 = vmul.f32 %v4608, 0.70710677
  %v4641 = vmul.f32 %v4609, 0.70710677
  %v4642 = vmul.f32 %v4610, 0.70710677
  %v4643 = vmul.f32 %v4611, 0.70710677
  %v4644 = vmul.f32 %v4612, 0.70710677
  %v4645 = vmul.f32 %v4613, 0.70710677
  %v4646 = vmul.f32 %v4614, 0.70710677
  %v4647 = vmul.f32 %v4615, 0.70710677
  %v4648 = vmul.f32 %v4616, 0.70710677
  %v4649 = vmul.f32 %v4617, 0.70710677
  %v4650 = vmul.f32 %v4618, 0.70710677
  %v4651 = vmul.f32 %v4619, 0.70710677
  %v4652 = vmul.f32 %v4620, 0.70710677
  %v4653 = verf.f32.pop %v4637
  %v4654 = verf.f32.pop %v4638
  %v4655 = verf.f32.pop %v4639
  %v4656 = verf.f32.pop %v4640
  %v4657 = verf.f32.pop %v4641
  %v4658 = verf.f32.pop %v4642
  %v4659 = verf.f32.pop %v4643
  %v4660 = verf.f32.pop %v4644
  %v4661 = verf.f32.pop %v4645
  %v4662 = verf.f32.pop %v4646
  %v4663 = verf.f32.pop %v4647
  %v4664 = verf.f32.pop %v4648
  %v4665 = verf.f32.pop %v4649
  %v4666 = verf.f32.pop %v4650
  %v4667 = verf.f32.pop %v4651
  %v4668 = verf.f32.pop %v4652
  %v4669 = vadd.f32 %v4653, 1.0
  %v4670 = vadd.f32 %v4654, 1.0
  %v4671 = vadd.f32 %v4655, 1.0
  %v4672 = vadd.f32 %v4656, 1.0
  %v4673 = vadd.f32 %v4657, 1.0
  %v4674 = vadd.f32 %v4658, 1.0
  %v4675 = vadd.f32 %v4659, 1.0
  %v4676 = vadd.f32 %v4660, 1.0
  %v4677 = vadd.f32 %v4661, 1.0
  %v4678 = vadd.f32 %v4662, 1.0
  %v4679 = vadd.f32 %v4663, 1.0
  %v4680 = vadd.f32 %v4664, 1.0
  %v4681 = vadd.f32 %v4665, 1.0
  %v4682 = vadd.f32 %v4666, 1.0
  %v4683 = vadd.f32 %v4667, 1.0
  %v4684 = vadd.f32 %v4668, 1.0
  %v4685 = vmul.f32 %v4621, %v4669
  %v4686 = vmul.f32 %v4622, %v4670
  %v4687 = vmul.f32 %v4623, %v4671
  %v4688 = vmul.f32 %v4624, %v4672
  %v4689 = vmul.f32 %v4625, %v4673
  %v4690 = vmul.f32 %v4626, %v4674
  %v4691 = vmul.f32 %v4627, %v4675
  %v4692 = vmul.f32 %v4628, %v4676
  %v4693 = vmul.f32 %v4629, %v4677
  %v4694 = vmul.f32 %v4630, %v4678
  %v4695 = vmul.f32 %v4631, %v4679
  %v4696 = vmul.f32 %v4632, %v4680
  %v4697 = vmul.f32 %v4633, %v4681
  %v4698 = vmul.f32 %v4634, %v4682
  %v4699 = vmul.f32 %v4635, %v4683
  %v4700 = vmul.f32 %v4636, %v4684
  %v4701 = vpack.c.bf16 %v4686, %v4685
  %v4702 = vpack.c.bf16 %v4688, %v4687
  %v4703 = vpack.c.bf16 %v4690, %v4689
  %v4704 = vpack.c.bf16 %v4692, %v4691
  %v4705 = vpack.c.bf16 %v4694, %v4693
  %v4706 = vpack.c.bf16 %v4696, %v4695
  %v4707 = vpack.c.bf16 %v4698, %v4697
  %v4708 = vpack.c.bf16 %v4700, %v4699
  %v4709 = vld [vmem:[%s16] sm:$0xff]
  %v4710 = vld [vmem:[%s16 + $0x8] sm:$0xff]
  %v4711 = vld [vmem:[%s16 + $0x10] sm:$0xff]
  %v4712 = vld [vmem:[%s16 + $0x18] sm:$0xff]
  %v4713 = vld [vmem:[%s16 + $0x20] sm:$0xff]
  %v4714 = vld [vmem:[%s16 + $0x28] sm:$0xff]
  %v4715 = vld [vmem:[%s16 + $0x30] sm:$0xff]
  %v4716 = vld [vmem:[%s16 + $0x38] sm:$0xff]
  %v4717 = vld [vmem:[%s16 + $0x40] sm:$0xff]
  %v4718 = vld [vmem:[%s16 + $0x48] sm:$0xff]
  %v4719 = vld [vmem:[%s16 + $0x50] sm:$0xff]
  %v4720 = vld [vmem:[%s16 + $0x58] sm:$0xff]
  %v4721 = vld [vmem:[%s16 + $0x60] sm:$0xff]
  %v4722 = vld [vmem:[%s16 + $0x68] sm:$0xff]
  %v4723 = vld [vmem:[%s16 + $0x70] sm:$0xff]
  %v4724 = vld [vmem:[%s16 + $0x78] sm:$0xff]
  %s4725 = scalar_lea.vmem %s18, 23
  %v4726 = vld [vmem:[%s4725] ss:$8 sm:$0x3]
  %v4728 = vlaneseq
  %v4729 = vshrl.u32 %v4728, 7
  %v4730 = vsub.s32 0, %v4729
  %v4731 = vrot.slane %v4726, %v4730
  %v4732 = vlaneseq
  %v4733 = vshrl.u32 %v4732, 7
  %v4734 = vsub.s32 1, %v4733
  %v4735 = vrot.slane %v4726, %v4734
  %v4754 = vunpack.c.l.b16 %v4709
  %v4755 = vunpack.c.h.b16 %v4709
  %v4756 = vunpack.c.l.b16 %v4710
  %v4757 = vunpack.c.h.b16 %v4710
  %v4758 = vunpack.c.l.b16 %v4711
  %v4759 = vunpack.c.h.b16 %v4711
  %v4760 = vunpack.c.l.b16 %v4712
  %v4761 = vunpack.c.h.b16 %v4712
  %v4762 = vunpack.c.l.b16 %v4713
  %v4763 = vunpack.c.h.b16 %v4713
  %v4764 = vunpack.c.l.b16 %v4714
  %v4765 = vunpack.c.h.b16 %v4714
  %v4766 = vunpack.c.l.b16 %v4715
  %v4767 = vunpack.c.h.b16 %v4715
  %v4768 = vunpack.c.l.b16 %v4716
  %v4769 = vunpack.c.h.b16 %v4716
  %v4770 = vunpack.c.l.b16 %v4717
  %v4771 = vunpack.c.h.b16 %v4717
  %v4772 = vunpack.c.l.b16 %v4718
  %v4773 = vunpack.c.h.b16 %v4718
  %v4774 = vunpack.c.l.b16 %v4719
  %v4775 = vunpack.c.h.b16 %v4719
  %v4776 = vunpack.c.l.b16 %v4720
  %v4777 = vunpack.c.h.b16 %v4720
  %v4778 = vunpack.c.l.b16 %v4721
  %v4779 = vunpack.c.h.b16 %v4721
  %v4780 = vunpack.c.l.b16 %v4722
  %v4781 = vunpack.c.h.b16 %v4722
  %v4782 = vunpack.c.l.b16 %v4723
  %v4783 = vunpack.c.h.b16 %v4723
  %v4784 = vunpack.c.l.b16 %v4724
  %v4785 = vunpack.c.h.b16 %v4724
  %v4786 = vpack.c.b16 %v4756, %v4754
  %v4787 = vpack.c.b16 %v4757, %v4755
  %v4788 = vpack.c.b16 %v4760, %v4758
  %v4789 = vpack.c.b16 %v4761, %v4759
  %v4790 = vpack.c.b16 %v4764, %v4762
  %v4791 = vpack.c.b16 %v4765, %v4763
  %v4792 = vpack.c.b16 %v4768, %v4766
  %v4793 = vpack.c.b16 %v4769, %v4767
  %v4794 = vpack.c.b16 %v4772, %v4770
  %v4795 = vpack.c.b16 %v4773, %v4771
  %v4796 = vpack.c.b16 %v4776, %v4774
  %v4797 = vpack.c.b16 %v4777, %v4775
  %v4798 = vpack.c.b16 %v4780, %v4778
  %v4799 = vpack.c.b16 %v4781, %v4779
  %v4800 = vpack.c.b16 %v4784, %v4782
  %v4801 = vpack.c.b16 %v4785, %v4783
  %4818 = vmatprep.subr.bf16.mxu0 %v4787
  %4819 = vmatpush1.bf16.msra.mxu0 %v4786
  %4820 = vmatprep.subr.bf16.mxu0 %v4789
  %4821 = vmatpush1.bf16.msra.mxu0 %v4788
  %4822 = vmatprep.subr.bf16.mxu0 %v4791
  %4823 = vmatpush1.bf16.msra.mxu0 %v4790
  %4824 = vmatprep.subr.bf16.mxu0 %v4793
  %4825 = vmatpush1.bf16.msra.mxu0 %v4792
  %4826 = vmatprep.subr.bf16.mxu0 %v4795
  %4827 = vmatpush1.bf16.msra.mxu0 %v4794
  %4828 = vmatprep.subr.bf16.mxu0 %v4797
  %4829 = vmatpush1.bf16.msra.mxu0 %v4796
  %4830 = vmatprep.subr.bf16.mxu0 %v4799
  %4831 = vmatpush1.bf16.msra.mxu0 %v4798
  %4832 = vmatprep.subr.bf16.mxu0 %v4801
  %4833 = vmatpush1.bf16.msra.mxu0 %v4800
  %4834 = vmatprep.subr.bf16.mxu0 0
  %4835 = vmatpush1.bf16.msra.mxu0 0
  %4836 = vmatprep.subr.bf16.mxu0 0
  %4837 = vmatpush1.bf16.msra.mxu0 0
  %4838 = vmatprep.subr.bf16.mxu0 0
  %4839 = vmatpush1.bf16.msra.mxu0 0
  %4840 = vmatprep.subr.bf16.mxu0 0
  %4841 = vmatpush1.bf16.msra.mxu0 0
  %4842 = vmatprep.subr.bf16.mxu0 0
  %4843 = vmatpush1.bf16.msra.mxu0 0
  %4844 = vmatprep.subr.bf16.mxu0 0
  %4845 = vmatpush1.bf16.msra.mxu0 0
  %4846 = vmatprep.subr.bf16.mxu0 0
  %4847 = vmatpush1.bf16.msra.mxu0 0
  %4848 = vmatprep.subr.bf16.mxu0 0
  %4849 = vmatpush1.bf16.msra.mxu0 0
  %4850 = vmatprep.mubr.bf16.mxu0 0
  %4851 = vmatmul.mubr.bf16.gmra.mrb[0].mxu0 %v4701
  %v4852 = vpop.f32.mrb[0].mxu0
  %v4853 = vadd.f32 %v4731, %v4852
  %v4854 = vpop.f32.mrb[0].mxu0
  %v4855 = vadd.f32 %v4735, %v4854
  %v4856 = vpop.f32.mrb[0].mxu0
  %v4857 = vadd.f32 %v4731, %v4856
  %v4858 = vpop.f32.mrb[0].mxu0
  %v4859 = vadd.f32 %v4735, %v4858
  %4860 = vmatprep.mubr.bf16.mxu0 0
  %4861 = vmatmul.mubr.bf16.gmra.mrb[0].mxu0 %v4702
  %v4862 = vpop.f32.mrb[0].mxu0
  %v4863 = vadd.f32 %v4731, %v4862
  %v4864 = vpop.f32.mrb[0].mxu0
  %v4865 = vadd.f32 %v4735, %v4864
  %v4866 = vpop.f32.mrb[0].mxu0
  %v4867 = vadd.f32 %v4731, %v4866
  %v4868 = vpop.f32.mrb[0].mxu0
  %v4869 = vadd.f32 %v4735, %v4868
  %4870 = vmatprep.mubr.bf16.mxu0 0
  %4871 = vmatmul.mubr.bf16.gmra.mrb[0].mxu0 %v4703
  %v4872 = vpop.f32.mrb[0].mxu0
  %v4873 = vadd.f32 %v4731, %v4872
  %v4874 = vpop.f32.mrb[0].mxu0
  %v4875 = vadd.f32 %v4735, %v4874
  %v4876 = vpop.f32.mrb[0].mxu0
  %v4877 = vadd.f32 %v4731, %v4876
  %v4878 = vpop.f32.mrb[0].mxu0
  %v4879 = vadd.f32 %v4735, %v4878
  %4880 = vmatprep.mubr.bf16.mxu0 0
  %4881 = vmatmul.mubr.bf16.gmra.mrb[0].mxu0 %v4704
  %v4882 = vpop.f32.mrb[0].mxu0
  %v4883 = vadd.f32 %v4731, %v4882
  %v4884 = vpop.f32.mrb[0].mxu0
  %v4885 = vadd.f32 %v4735, %v4884
  %v4886 = vpop.f32.mrb[0].mxu0
  %v4887 = vadd.f32 %v4731, %v4886
  %v4888 = vpop.f32.mrb[0].mxu0
  %v4889 = vadd.f32 %v4735, %v4888
  %4890 = vmatprep.mubr.bf16.mxu0 0
  %4891 = vmatmul.mubr.bf16.gmra.mrb[0].mxu0 %v4705
  %v4892 = vpop.f32.mrb[0].mxu0
  %v4893 = vadd.f32 %v4731, %v4892
  %v4894 = vpop.f32.mrb[0].mxu0
  %v4895 = vadd.f32 %v4735, %v4894
  %v4896 = vpop.f32.mrb[0].mxu0
  %v4897 = vadd.f32 %v4731, %v4896
  %v4898 = vpop.f32.mrb[0].mxu0
  %v4899 = vadd.f32 %v4735, %v4898
  %4900 = vmatprep.mubr.bf16.mxu0 0
  %4901 = vmatmul.mubr.bf16.gmra.mrb[0].mxu0 %v4706
  %v4902 = vpop.f32.mrb[0].mxu0
  %v4903 = vadd.f32 %v4731, %v4902
  %v4904 = vpop.f32.mrb[0].mxu0
  %v4905 = vadd.f32 %v4735, %v4904
  %v4906 = vpop.f32.mrb[0].mxu0
  %v4907 = vadd.f32 %v4731, %v4906
  %v4908 = vpop.f32.mrb[0].mxu0
  %v4909 = vadd.f32 %v4735, %v4908
  %4910 = vmatprep.mubr.bf16.mxu0 0
  %4911 = vmatmul.mubr.bf16.gmra.mrb[0].mxu0 %v4707
  %v4912 = vpop.f32.mrb[0].mxu0
  %v4913 = vadd.f32 %v4731, %v4912
  %v4914 = vpop.f32.mrb[0].mxu0
  %v4915 = vadd.f32 %v4735, %v4914
  %v4916 = vpop.f32.mrb[0].mxu0
  %v4917 = vadd.f32 %v4731, %v4916
  %v4918 = vpop.f32.mrb[0].mxu0
  %v4919 = vadd.f32 %v4735, %v4918
  %4920 = vmatprep.mubr.bf16.mxu0 0
  %4921 = vmatmul.mubr.bf16.gmra.mrb[0].mxu0 %v4708
  %v4922 = vpop.f32.mrb[0].mxu0
  %v4923 = vadd.f32 %v4731, %v4922
  %v4924 = vpop.f32.mrb[0].mxu0
  %v4925 = vadd.f32 %v4735, %v4924
  %v4926 = vpop.f32.mrb[0].mxu0
  %v4927 = vadd.f32 %v4731, %v4926
  %v4928 = vpop.f32.mrb[0].mxu0
  %v4929 = vadd.f32 %v4735, %v4928
  %4930 = vdwg.mxu0
  %v4931 = vpack.c.bf16 %v4857, %v4853
  %v4932 = vpack.c.bf16 %v4859, %v4855
  %v4933 = vpack.c.bf16 %v4867, %v4863
  %v4934 = vpack.c.bf16 %v4869, %v4865
  %v4935 = vpack.c.bf16 %v4877, %v4873
  %v4936 = vpack.c.bf16 %v4879, %v4875
  %v4937 = vpack.c.bf16 %v4887, %v4883
  %v4938 = vpack.c.bf16 %v4889, %v4885
  %v4939 = vpack.c.bf16 %v4897, %v4893
  %v4940 = vpack.c.bf16 %v4899, %v4895
  %v4941 = vpack.c.bf16 %v4907, %v4903
  %v4942 = vpack.c.bf16 %v4909, %v4905
  %v4943 = vpack.c.bf16 %v4917, %v4913
  %v4944 = vpack.c.bf16 %v4919, %v4915
  %v4945 = vpack.c.bf16 %v4927, %v4923
  %v4946 = vpack.c.bf16 %v4929, %v4925
  %v4947 = vld [vmem:[%s17] sm:$0xff]
  %v4948 = vld [vmem:[%s17 + $0x8] sm:$0xff]
  %v4949 = vld [vmem:[%s17 + $0x10] sm:$0xff]
  %v4950 = vld [vmem:[%s17 + $0x18] sm:$0xff]
  %v4951 = vld [vmem:[%s17 + $0x20] sm:$0xff]
  %v4952 = vld [vmem:[%s17 + $0x28] sm:$0xff]
  %v4953 = vld [vmem:[%s17 + $0x30] sm:$0xff]
  %v4954 = vld [vmem:[%s17 + $0x38] sm:$0xff]
  %v4955 = vld [vmem:[%s17 + $0x40] sm:$0xff]
  %v4956 = vld [vmem:[%s17 + $0x48] sm:$0xff]
  %v4957 = vld [vmem:[%s17 + $0x50] sm:$0xff]
  %v4958 = vld [vmem:[%s17 + $0x58] sm:$0xff]
  %v4959 = vld [vmem:[%s17 + $0x60] sm:$0xff]
  %v4960 = vld [vmem:[%s17 + $0x68] sm:$0xff]
  %v4961 = vld [vmem:[%s17 + $0x70] sm:$0xff]
  %v4962 = vld [vmem:[%s17 + $0x78] sm:$0xff]
  %v4963 = vld [vmem:[%s17 + $0x80] sm:$0xff]
  %v4964 = vld [vmem:[%s17 + $0x88] sm:$0xff]
  %v4965 = vld [vmem:[%s17 + $0x90] sm:$0xff]
  %v4966 = vld [vmem:[%s17 + $0x98] sm:$0xff]
  %v4967 = vld [vmem:[%s17 + $0xa0] sm:$0xff]
  %v4968 = vld [vmem:[%s17 + $0xa8] sm:$0xff]
  %v4969 = vld [vmem:[%s17 + $0xb0] sm:$0xff]
  %v4970 = vld [vmem:[%s17 + $0xb8] sm:$0xff]
  %v4971 = vld [vmem:[%s17 + $0xc0] sm:$0xff]
  %s4972 = scalar_lea.vmem %s18, 32
  %v4973 = vld [vmem:[%s4972] ss:$8 sm:$0x3]
  %v4975 = vlaneseq
  %v4976 = vshrl.u32 %v4975, 7
  %v4977 = vsub.s32 0, %v4976
  %v4978 = vrot.slane %v4973, %v4977
  %v4979 = vlaneseq
  %v4980 = vshrl.u32 %v4979, 7
  %v4981 = vsub.s32 1, %v4980
  %v4982 = vrot.slane %v4973, %v4981
  %v5010 = vunpack.c.l.b16 %v4947
  %v5011 = vunpack.c.h.b16 %v4947
  %v5012 = vunpack.c.l.b16 %v4948
  %v5013 = vunpack.c.h.b16 %v4948
  %v5014 = vunpack.c.l.b16 %v4949
  %v5015 = vunpack.c.h.b16 %v4949
  %v5016 = vunpack.c.l.b16 %v4950
  %v5017 = vunpack.c.h.b16 %v4950
  %v5018 = vunpack.c.l.b16 %v4951
  %v5019 = vunpack.c.h.b16 %v4951
  %v5020 = vunpack.c.l.b16 %v4952
  %v5021 = vunpack.c.h.b16 %v4952
  %v5022 = vunpack.c.l.b16 %v4953
  %v5023 = vunpack.c.h.b16 %v4953
  %v5024 = vunpack.c.l.b16 %v4954
  %v5025 = vunpack.c.h.b16 %v4954
  %v5026 = vunpack.c.l.b16 %v4955
  %v5027 = vunpack.c.h.b16 %v4955
  %v5028 = vunpack.c.l.b16 %v4956
  %v5029 = vunpack.c.h.b16 %v4956
  %v5030 = vunpack.c.l.b16 %v4957
  %v5031 = vunpack.c.h.b16 %v4957
  %v5032 = vunpack.c.l.b16 %v4958
  %v5033 = vunpack.c.h.b16 %v4958
  %v5034 = vunpack.c.l.b16 %v4959
  %v5035 = vunpack.c.h.b16 %v4959
  %v5036 = vunpack.c.l.b16 %v4960
  %v5037 = vunpack.c.h.b16 %v4960
  %v5038 = vunpack.c.l.b16 %v4961
  %v5039 = vunpack.c.h.b16 %v4961
  %v5040 = vunpack.c.l.b16 %v4962
  %v5041 = vunpack.c.h.b16 %v4962
  %v5042 = vunpack.c.l.b16 %v4963
  %v5043 = vunpack.c.h.b16 %v4963
  %v5044 = vunpack.c.l.b16 %v4964
  %v5045 = vunpack.c.h.b16 %v4964
  %v5046 = vunpack.c.l.b16 %v4965
  %v5047 = vunpack.c.h.b16 %v4965
  %v5048 = vunpack.c.l.b16 %v4966
  %v5049 = vunpack.c.h.b16 %v4966
  %v5050 = vunpack.c.l.b16 %v4967
  %v5051 = vunpack.c.h.b16 %v4967
  %v5052 = vunpack.c.l.b16 %v4968
  %v5053 = vunpack.c.h.b16 %v4968
  %v5054 = vunpack.c.l.b16 %v4969
  %v5055 = vunpack.c.h.b16 %v4969
  %v5056 = vunpack.c.l.b16 %v4970
  %v5057 = vunpack.c.h.b16 %v4970
  %v5058 = vunpack.c.l.b16 %v4971
  %v5059 = vunpack.c.h.b16 %v4971
  %v5060 = vpack.c.b16 %v5012, %v5010
  %v5061 = vpack.c.b16 %v5013, %v5011
  %v5062 = vpack.c.b16 %v5016, %v5014
  %v5063 = vpack.c.b16 %v5017, %v5015
  %v5064 = vpack.c.b16 %v5020, %v5018
  %v5065 = vpack.c.b16 %v5021, %v5019
  %v5066 = vpack.c.b16 %v5024, %v5022
  %v5067 = vpack.c.b16 %v5025, %v5023
  %v5068 = vpack.c.b16 %v5028, %v5026
  %v5069 = vpack.c.b16 %v5029, %v5027
  %v5070 = vpack.c.b16 %v5032, %v5030
  %v5071 = vpack.c.b16 %v5033, %v5031
  %v5072 = vpack.c.b16 %v5036, %v5034
  %v5073 = vpack.c.b16 %v5037, %v5035
  %v5074 = vpack.c.b16 %v5040, %v5038
  %v5075 = vpack.c.b16 %v5041, %v5039
  %v5076 = vpack.c.b16 %v5044, %v5042
  %v5077 = vpack.c.b16 %v5045, %v5043
  %v5078 = vpack.c.b16 %v5048, %v5046
  %v5079 = vpack.c.b16 %v5049, %v5047
  %v5080 = vpack.c.b16 %v5052, %v5050
  %v5081 = vpack.c.b16 %v5053, %v5051
  %v5082 = vpack.c.b16 %v5056, %v5054
  %v5083 = vpack.c.b16 %v5057, %v5055
  %v5084 = vpack.c.b16 %v5058, %v5058
  %v5085 = vpack.c.b16 %v5059, %v5059
  %v5111 = vsel %vm273, %v4932, 0
  %v5114 = vsel %vm273, %v4934, 0
  %v5117 = vsel %vm273, %v4936, 0
  %v5120 = vsel %vm273, %v4938, 0
  %v5123 = vsel %vm273, %v4940, 0
  %v5126 = vsel %vm273, %v4942, 0
  %v5129 = vsel %vm273, %v4944, 0
  %v5132 = vsel %vm273, %v4946, 0
  %v5135 = vsel %vm298, %v5084, 0
  %v5138 = vsel %vm298, %v5085, 0
  %5140 = vmatprep.subr.bf16.mxu0 %v5061
  %5141 = vmatpush1.bf16.msra.mxu0 %v5060
  %5142 = vmatprep.subr.bf16.mxu0 %v5063
  %5143 = vmatpush1.bf16.msra.mxu0 %v5062
  %5144 = vmatprep.subr.bf16.mxu0 %v5065
  %5145 = vmatpush1.bf16.msra.mxu0 %v5064
  %5146 = vmatprep.subr.bf16.mxu0 %v5067
  %5147 = vmatpush1.bf16.msra.mxu0 %v5066
  %5148 = vmatprep.subr.bf16.mxu0 %v5069
  %5149 = vmatpush1.bf16.msra.mxu0 %v5068
  %5150 = vmatprep.subr.bf16.mxu0 %v5071
  %5151 = vmatpush1.bf16.msra.mxu0 %v5070
  %5152 = vmatprep.subr.bf16.mxu0 %v5073
  %5153 = vmatpush1.bf16.msra.mxu0 %v5072
  %5154 = vmatprep.subr.bf16.mxu0 %v5075
  %5155 = vmatpush1.bf16.msra.mxu0 %v5074
  %5156 = vmatprep.subr.bf16.mxu0 %v5077
  %5157 = vmatpush1.bf16.msra.mxu0 %v5076
  %5158 = vmatprep.subr.bf16.mxu0 %v5079
  %5159 = vmatpush1.bf16.msra.mxu0 %v5078
  %5160 = vmatprep.subr.bf16.mxu0 %v5081
  %5161 = vmatpush1.bf16.msra.mxu0 %v5080
  %5162 = vmatprep.subr.bf16.mxu0 %v5083
  %5163 = vmatpush1.bf16.msra.mxu0 %v5082
  %5164 = vmatprep.subr.bf16.mxu0 %v5138
  %5165 = vmatpush1.bf16.msra.mxu0 %v5135
  %5166 = vmatprep.subr.bf16.mxu0 0
  %5167 = vmatpush1.bf16.msra.mxu0 0
  %5168 = vmatprep.subr.bf16.mxu0 0
  %5169 = vmatpush1.bf16.msra.mxu0 0
  %5170 = vmatprep.subr.bf16.mxu0 0
  %5171 = vmatpush1.bf16.msra.mxu0 0
  %5172 = vmatprep.mubr.bf16.mxu0 %v5111
  %5173 = vmatmul.mubr.bf16.gmra.mrb[0].mxu0 %v4931
  %v5174 = vpop.f32.mrb[0].mxu0
  %v5175 = vadd.f32 %v4978, %v5174
  %v5176 = vpop.f32.mrb[0].mxu0
  %v5177 = vadd.f32 %v4982, %v5176
  %v5178 = vpop.f32.mrb[0].mxu0
  %v5179 = vadd.f32 %v4978, %v5178
  %v5180 = vpop.f32.mrb[0].mxu0
  %v5181 = vadd.f32 %v4982, %v5180
  %5182 = vmatprep.mubr.bf16.mxu0 %v5114
  %5183 = vmatmul.mubr.bf16.gmra.mrb[0].mxu0 %v4933
  %v5184 = vpop.f32.mrb[0].mxu0
  %v5185 = vadd.f32 %v4978, %v5184
  %v5186 = vpop.f32.mrb[0].mxu0
  %v5187 = vadd.f32 %v4982, %v5186
  %v5188 = vpop.f32.mrb[0].mxu0
  %v5189 = vadd.f32 %v4978, %v5188
  %v5190 = vpop.f32.mrb[0].mxu0
  %v5191 = vadd.f32 %v4982, %v5190
  %5192 = vmatprep.mubr.bf16.mxu0 %v5117
  %5193 = vmatmul.mubr.bf16.gmra.mrb[0].mxu0 %v4935
  %v5194 = vpop.f32.mrb[0].mxu0
  %v5195 = vadd.f32 %v4978, %v5194
  %v5196 = vpop.f32.mrb[0].mxu0
  %v5197 = vadd.f32 %v4982, %v5196
  %v5198 = vpop.f32.mrb[0].mxu0
  %v5199 = vadd.f32 %v4978, %v5198
  %v5200 = vpop.f32.mrb[0].mxu0
  %v5201 = vadd.f32 %v4982, %v5200
  %5202 = vmatprep.mubr.bf16.mxu0 %v5120
  %5203 = vmatmul.mubr.bf16.gmra.mrb[0].mxu0 %v4937
  %v5204 = vpop.f32.mrb[0].mxu0
  %v5205 = vadd.f32 %v4978, %v5204
  %v5206 = vpop.f32.mrb[0].mxu0
  %v5207 = vadd.f32 %v4982, %v5206
  %v5208 = vpop.f32.mrb[0].mxu0
  %v5209 = vadd.f32 %v4978, %v5208
  %v5210 = vpop.f32.mrb[0].mxu0
  %v5211 = vadd.f32 %v4982, %v5210
  %5212 = vmatprep.mubr.bf16.mxu0 %v5123
  %5213 = vmatmul.mubr.bf16.gmra.mrb[0].mxu0 %v4939
  %v5214 = vpop.f32.mrb[0].mxu0
  %v5215 = vadd.f32 %v4978, %v5214
  %v5216 = vpop.f32.mrb[0].mxu0
  %v5217 = vadd.f32 %v4982, %v5216
  %v5218 = vpop.f32.mrb[0].mxu0
  %v5219 = vadd.f32 %v4978, %v5218
  %v5220 = vpop.f32.mrb[0].mxu0
  %v5221 = vadd.f32 %v4982, %v5220
  %5222 = vmatprep.mubr.bf16.mxu0 %v5126
  %5223 = vmatmul.mubr.bf16.gmra.mrb[0].mxu0 %v4941
  %v5224 = vpop.f32.mrb[0].mxu0
  %v5225 = vadd.f32 %v4978, %v5224
  %v5226 = vpop.f32.mrb[0].mxu0
  %v5227 = vadd.f32 %v4982, %v5226
  %v5228 = vpop.f32.mrb[0].mxu0
  %v5229 = vadd.f32 %v4978, %v5228
  %v5230 = vpop.f32.mrb[0].mxu0
  %v5231 = vadd.f32 %v4982, %v5230
  %5232 = vmatprep.mubr.bf16.mxu0 %v5129
  %5233 = vmatmul.mubr.bf16.gmra.mrb[0].mxu0 %v4943
  %v5234 = vpop.f32.mrb[0].mxu0
  %v5235 = vadd.f32 %v4978, %v5234
  %v5236 = vpop.f32.mrb[0].mxu0
  %v5237 = vadd.f32 %v4982, %v5236
  %v5238 = vpop.f32.mrb[0].mxu0
  %v5239 = vadd.f32 %v4978, %v5238
  %v5240 = vpop.f32.mrb[0].mxu0
  %v5241 = vadd.f32 %v4982, %v5240
  %5242 = vmatprep.mubr.bf16.mxu0 %v5132
  %5243 = vmatmul.mubr.bf16.gmra.mrb[0].mxu0 %v4945
  %v5244 = vpop.f32.mrb[0].mxu0
  %v5245 = vadd.f32 %v4978, %v5244
  %v5246 = vpop.f32.mrb[0].mxu0
  %v5247 = vadd.f32 %v4982, %v5246
  %v5248 = vpop.f32.mrb[0].mxu0
  %v5249 = vadd.f32 %v4978, %v5248
  %v5250 = vpop.f32.mrb[0].mxu0
  %v5251 = vadd.f32 %v4982, %v5250
  %5252 = vdwg.mxu0
  %v5253 = vadd.f32 %v5175, %v5179
  %v5254 = vadd.f32 %v5253, %v5185
  %v5255 = vadd.f32 %v5254, %v5189
  %v5256 = vadd.f32 %v5255, %v5195
  %v5257 = vadd.f32 %v5256, %v5199
  %v5258 = vadd.f32 %v5257, %v5205
  %v5259 = vadd.f32 %v5258, %v5209
  %v5260 = vrot.slane %v5259, 4
  %v5261 = vadd.f32 %v5259, %v5260
  %v5262 = vrot.slane %v5261, 2
  %v5263 = vadd.f32 %v5261, %v5262
  %v5264 = vrot.slane %v5263, 1
  %v5265 = vadd.f32 %v5263, %v5264
  %v5266 = vsel %vm273, %v5177, 0.0
  %v5267 = vsel %vm273, %v5181, 0.0
  %v5268 = vadd.f32 %v5266, %v5267
  %v5269 = vsel %vm273, %v5187, 0.0
  %v5270 = vadd.f32 %v5268, %v5269
  %v5271 = vsel %vm273, %v5191, 0.0
  %v5272 = vadd.f32 %v5270, %v5271
  %v5273 = vsel %vm273, %v5197, 0.0
  %v5274 = vadd.f32 %v5272, %v5273
  %v5275 = vsel %vm273, %v5201, 0.0
  %v5276 = vadd.f32 %v5274, %v5275
  %v5277 = vsel %vm273, %v5207, 0.0
  %v5278 = vadd.f32 %v5276, %v5277
  %v5279 = vsel %vm273, %v5211, 0.0
  %v5280 = vadd.f32 %v5278, %v5279
  %v5281 = vrot.slane %v5280, 4
  %v5282 = vadd.f32 %v5280, %v5281
  %v5283 = vrot.slane %v5282, 2
  %v5284 = vadd.f32 %v5282, %v5283
  %v5285 = vrot.slane %v5284, 1
  %v5286 = vadd.f32 %v5284, %v5285
  %v5287 = vadd.f32 %v5215, %v5219
  %v5288 = vadd.f32 %v5287, %v5225
  %v5289 = vadd.f32 %v5288, %v5229
  %v5290 = vadd.f32 %v5289, %v5235
  %v5291 = vadd.f32 %v5290, %v5239
  %v5292 = vadd.f32 %v5291, %v5245
  %v5293 = vadd.f32 %v5292, %v5249
  %v5294 = vrot.slane %v5293, 4
  %v5295 = vadd.f32 %v5293, %v5294
  %v5296 = vrot.slane %v5295, 2
  %v5297 = vadd.f32 %v5295, %v5296
  %v5298 = vrot.slane %v5297, 1
  %v5299 = vadd.f32 %v5297, %v5298
  %v5300 = vsel %vm273, %v5217, 0.0
  %v5301 = vsel %vm273, %v5221, 0.0
  %v5302 = vadd.f32 %v5300, %v5301
  %v5303 = vsel %vm273, %v5227, 0.0
  %v5304 = vadd.f32 %v5302, %v5303
  %v5305 = vsel %vm273, %v5231, 0.0
  %v5306 = vadd.f32 %v5304, %v5305
  %v5307 = vsel %vm273, %v5237, 0.0
  %v5308 = vadd.f32 %v5306, %v5307
  %v5309 = vsel %vm273, %v5241, 0.0
  %v5310 = vadd.f32 %v5308, %v5309
  %v5311 = vsel %vm273, %v5247, 0.0
  %v5312 = vadd.f32 %v5310, %v5311
  %v5313 = vsel %vm273, %v5251, 0.0
  %v5314 = vadd.f32 %v5312, %v5313
  %v5315 = vrot.slane %v5314, 4
  %v5316 = vadd.f32 %v5314, %v5315
  %v5317 = vrot.slane %v5316, 2
  %v5318 = vadd.f32 %v5316, %v5317
  %v5319 = vrot.slane %v5318, 1
  %v5320 = vadd.f32 %v5318, %v5319
  %v5321 = vmul.f32 %v5265, 0.015625
  %v5322 = vmul.f32 %v5286, 0.015625
  %v5323 = vmul.f32 %v5299, 0.015625
  %v5324 = vmul.f32 %v5320, 0.015625
  %v5325 = vsub.f32 %v5175, %v5321
  %v5326 = vsub.f32 %v5177, %v5322
  %v5327 = vsub.f32 %v5179, %v5321
  %v5328 = vsub.f32 %v5181, %v5322
  %v5329 = vsub.f32 %v5185, %v5321
  %v5330 = vsub.f32 %v5187, %v5322
  %v5331 = vsub.f32 %v5189, %v5321
  %v5332 = vsub.f32 %v5191, %v5322
  %v5333 = vsub.f32 %v5195, %v5321
  %v5334 = vsub.f32 %v5197, %v5322
  %v5335 = vsub.f32 %v5199, %v5321
  %v5336 = vsub.f32 %v5201, %v5322
  %v5337 = vsub.f32 %v5205, %v5321
  %v5338 = vsub.f32 %v5207, %v5322
  %v5339 = vsub.f32 %v5209, %v5321
  %v5340 = vsub.f32 %v5211, %v5322
  %v5341 = vsub.f32 %v5215, %v5323
  %v5342 = vsub.f32 %v5217, %v5324
  %v5343 = vsub.f32 %v5219, %v5323
  %v5344 = vsub.f32 %v5221, %v5324
  %v5345 = vsub.f32 %v5225, %v5323
  %v5346 = vsub.f32 %v5227, %v5324
  %v5347 = vsub.f32 %v5229, %v5323
  %v5348 = vsub.f32 %v5231, %v5324
  %v5349 = vsub.f32 %v5235, %v5323
  %v5350 = vsub.f32 %v5237, %v5324
  %v5351 = vsub.f32 %v5239, %v5323
  %v5352 = vsub.f32 %v5241, %v5324
  %v5353 = vsub.f32 %v5245, %v5323
  %v5354 = vsub.f32 %v5247, %v5324
  %v5355 = vsub.f32 %v5249, %v5323
  %v5356 = vsub.f32 %v5251, %v5324
  %v5357 = vmul.f32 %v5325, %v5325
  %v5358 = vmul.f32 %v5326, %v5326
  %v5359 = vmul.f32 %v5327, %v5327
  %v5360 = vmul.f32 %v5328, %v5328
  %v5361 = vmul.f32 %v5329, %v5329
  %v5362 = vmul.f32 %v5330, %v5330
  %v5363 = vmul.f32 %v5331, %v5331
  %v5364 = vmul.f32 %v5332, %v5332
  %v5365 = vmul.f32 %v5333, %v5333
  %v5366 = vmul.f32 %v5334, %v5334
  %v5367 = vmul.f32 %v5335, %v5335
  %v5368 = vmul.f32 %v5336, %v5336
  %v5369 = vmul.f32 %v5337, %v5337
  %v5370 = vmul.f32 %v5338, %v5338
  %v5371 = vmul.f32 %v5339, %v5339
  %v5372 = vmul.f32 %v5340, %v5340
  %v5373 = vmul.f32 %v5341, %v5341
  %v5374 = vmul.f32 %v5342, %v5342
  %v5375 = vmul.f32 %v5343, %v5343
  %v5376 = vmul.f32 %v5344, %v5344
  %v5377 = vmul.f32 %v5345, %v5345
  %v5378 = vmul.f32 %v5346, %v5346
  %v5379 = vmul.f32 %v5347, %v5347
  %v5380 = vmul.f32 %v5348, %v5348
  %v5381 = vmul.f32 %v5349, %v5349
  %v5382 = vmul.f32 %v5350, %v5350
  %v5383 = vmul.f32 %v5351, %v5351
  %v5384 = vmul.f32 %v5352, %v5352
  %v5385 = vmul.f32 %v5353, %v5353
  %v5386 = vmul.f32 %v5354, %v5354
  %v5387 = vmul.f32 %v5355, %v5355
  %v5388 = vmul.f32 %v5356, %v5356
  %v5389 = vadd.f32 %v5357, %v5359
  %v5390 = vadd.f32 %v5389, %v5361
  %v5391 = vadd.f32 %v5390, %v5363
  %v5392 = vadd.f32 %v5391, %v5365
  %v5393 = vadd.f32 %v5392, %v5367
  %v5394 = vadd.f32 %v5393, %v5369
  %v5395 = vadd.f32 %v5394, %v5371
  %v5396 = vrot.slane %v5395, 4
  %v5397 = vadd.f32 %v5395, %v5396
  %v5398 = vrot.slane %v5397, 2
  %v5399 = vadd.f32 %v5397, %v5398
  %v5400 = vrot.slane %v5399, 1
  %v5401 = vadd.f32 %v5399, %v5400
  %v5402 = vsel %vm273, %v5358, 0.0
  %v5403 = vsel %vm273, %v5360, 0.0
  %v5404 = vadd.f32 %v5402, %v5403
  %v5405 = vsel %vm273, %v5362, 0.0
  %v5406 = vadd.f32 %v5404, %v5405
  %v5407 = vsel %vm273, %v5364, 0.0
  %v5408 = vadd.f32 %v5406, %v5407
  %v5409 = vsel %vm273, %v5366, 0.0
  %v5410 = vadd.f32 %v5408, %v5409
  %v5411 = vsel %vm273, %v5368, 0.0
  %v5412 = vadd.f32 %v5410, %v5411
  %v5413 = vsel %vm273, %v5370, 0.0
  %v5414 = vadd.f32 %v5412, %v5413
  %v5415 = vsel %vm273, %v5372, 0.0
  %v5416 = vadd.f32 %v5414, %v5415
  %v5417 = vrot.slane %v5416, 4
  %v5418 = vadd.f32 %v5416, %v5417
  %v5419 = vrot.slane %v5418, 2
  %v5420 = vadd.f32 %v5418, %v5419
  %v5421 = vrot.slane %v5420, 1
  %v5422 = vadd.f32 %v5420, %v5421
  %v5423 = vadd.f32 %v5373, %v5375
  %v5424 = vadd.f32 %v5423, %v5377
  %v5425 = vadd.f32 %v5424, %v5379
  %v5426 = vadd.f32 %v5425, %v5381
  %v5427 = vadd.f32 %v5426, %v5383
  %v5428 = vadd.f32 %v5427, %v5385
  %v5429 = vadd.f32 %v5428, %v5387
  %v5430 = vrot.slane %v5429, 4
  %v5431 = vadd.f32 %v5429, %v5430
  %v5432 = vrot.slane %v5431, 2
  %v5433 = vadd.f32 %v5431, %v5432
  %v5434 = vrot.slane %v5433, 1
  %v5435 = vadd.f32 %v5433, %v5434
  %v5436 = vsel %vm273, %v5374, 0.0
  %v5437 = vsel %vm273, %v5376, 0.0
  %v5438 = vadd.f32 %v5436, %v5437
  %v5439 = vsel %vm273, %v5378, 0.0
  %v5440 = vadd.f32 %v5438, %v5439
  %v5441 = vsel %vm273, %v5380, 0.0
  %v5442 = vadd.f32 %v5440, %v5441
  %v5443 = vsel %vm273, %v5382, 0.0
  %v5444 = vadd.f32 %v5442, %v5443
  %v5445 = vsel %vm273, %v5384, 0.0
  %v5446 = vadd.f32 %v5444, %v5445
  %v5447 = vsel %vm273, %v5386, 0.0
  %v5448 = vadd.f32 %v5446, %v5447
  %v5449 = vsel %vm273, %v5388, 0.0
  %v5450 = vadd.f32 %v5448, %v5449
  %v5451 = vrot.slane %v5450, 4
  %v5452 = vadd.f32 %v5450, %v5451
  %v5453 = vrot.slane %v5452, 2
  %v5454 = vadd.f32 %v5452, %v5453
  %v5455 = vrot.slane %v5454, 1
  %v5456 = vadd.f32 %v5454, %v5455
  %v5457 = vmul.f32 %v5401, 0.015625
  %v5458 = vmul.f32 %v5422, 0.015625
  %v5459 = vmul.f32 %v5435, 0.015625
  %v5460 = vmul.f32 %v5456, 0.015625
  %v5461 = vadd.f32 %v5457, 1e-05
  %v5462 = vadd.f32 %v5458, 1e-05
  %v5463 = vadd.f32 %v5459, 1e-05
  %v5464 = vadd.f32 %v5460, 1e-05
  %v5465 = vrsqrt.pop %v5461
  %v5466 = vrsqrt.pop %v5462
  %v5467 = vrsqrt.pop %v5463
  %v5468 = vrsqrt.pop %v5464
  %v5469 = vmul.f32 %v5325, %v5465
  %v5470 = vmul.f32 %v5326, %v5466
  %v5471 = vmul.f32 %v5327, %v5465
  %v5472 = vmul.f32 %v5328, %v5466
  %v5473 = vmul.f32 %v5329, %v5465
  %v5474 = vmul.f32 %v5330, %v5466
  %v5475 = vmul.f32 %v5331, %v5465
  %v5476 = vmul.f32 %v5332, %v5466
  %v5477 = vmul.f32 %v5333, %v5465
  %v5478 = vmul.f32 %v5334, %v5466
  %v5479 = vmul.f32 %v5335, %v5465
  %v5480 = vmul.f32 %v5336, %v5466
  %v5481 = vmul.f32 %v5337, %v5465
  %v5482 = vmul.f32 %v5338, %v5466
  %v5483 = vmul.f32 %v5339, %v5465
  %v5484 = vmul.f32 %v5340, %v5466
  %v5485 = vmul.f32 %v5341, %v5467
  %v5486 = vmul.f32 %v5342, %v5468
  %v5487 = vmul.f32 %v5343, %v5467
  %v5488 = vmul.f32 %v5344, %v5468
  %v5489 = vmul.f32 %v5345, %v5467
  %v5490 = vmul.f32 %v5346, %v5468
  %v5491 = vmul.f32 %v5347, %v5467
  %v5492 = vmul.f32 %v5348, %v5468
  %v5493 = vmul.f32 %v5349, %v5467
  %v5494 = vmul.f32 %v5350, %v5468
  %v5495 = vmul.f32 %v5351, %v5467
  %v5496 = vmul.f32 %v5352, %v5468
  %v5497 = vmul.f32 %v5353, %v5467
  %v5498 = vmul.f32 %v5354, %v5468
  %v5499 = vmul.f32 %v5355, %v5467
  %v5500 = vmul.f32 %v5356, %v5468
  %v5501 = vmul.f32 %v5469, 0.5
  %v5502 = vmul.f32 %v5470, 0.5
  %v5503 = vmul.f32 %v5471, 0.5
  %v5504 = vmul.f32 %v5472, 0.5
  %v5505 = vmul.f32 %v5473, 0.5
  %v5506 = vmul.f32 %v5474, 0.5
  %v5507 = vmul.f32 %v5475, 0.5
  %v5508 = vmul.f32 %v5476, 0.5
  %v5509 = vmul.f32 %v5477, 0.5
  %v5510 = vmul.f32 %v5478, 0.5
  %v5511 = vmul.f32 %v5479, 0.5
  %v5512 = vmul.f32 %v5480, 0.5
  %v5513 = vmul.f32 %v5481, 0.5
  %v5514 = vmul.f32 %v5482, 0.5
  %v5515 = vmul.f32 %v5483, 0.5
  %v5516 = vmul.f32 %v5484, 0.5
  %v5517 = vmul.f32 %v5485, 0.5
  %v5518 = vmul.f32 %v5486, 0.5
  %v5519 = vmul.f32 %v5487, 0.5
  %v5520 = vmul.f32 %v5488, 0.5
  %v5521 = vmul.f32 %v5489, 0.5
  %v5522 = vmul.f32 %v5490, 0.5
  %v5523 = vmul.f32 %v5491, 0.5
  %v5524 = vmul.f32 %v5492, 0.5
  %v5525 = vmul.f32 %v5493, 0.5
  %v5526 = vmul.f32 %v5494, 0.5
  %v5527 = vmul.f32 %v5495, 0.5
  %v5528 = vmul.f32 %v5496, 0.5
  %v5529 = vmul.f32 %v5497, 0.5
  %v5530 = vmul.f32 %v5498, 0.5
  %v5531 = vmul.f32 %v5499, 0.5
  %v5532 = vmul.f32 %v5500, 0.5
  %v5533 = vmul.f32 %v5469, 0.70710677
  %v5534 = vmul.f32 %v5470, 0.70710677
  %v5535 = vmul.f32 %v5471, 0.70710677
  %v5536 = vmul.f32 %v5472, 0.70710677
  %v5537 = vmul.f32 %v5473, 0.70710677
  %v5538 = vmul.f32 %v5474, 0.70710677
  %v5539 = vmul.f32 %v5475, 0.70710677
  %v5540 = vmul.f32 %v5476, 0.70710677
  %v5541 = vmul.f32 %v5477, 0.70710677
  %v5542 = vmul.f32 %v5478, 0.70710677
  %v5543 = vmul.f32 %v5479, 0.70710677
  %v5544 = vmul.f32 %v5480, 0.70710677
  %v5545 = vmul.f32 %v5481, 0.70710677
  %v5546 = vmul.f32 %v5482, 0.70710677
  %v5547 = vmul.f32 %v5483, 0.70710677
  %v5548 = vmul.f32 %v5484, 0.70710677
  %v5549 = vmul.f32 %v5485, 0.70710677
  %v5550 = vmul.f32 %v5486, 0.70710677
  %v5551 = vmul.f32 %v5487, 0.70710677
  %v5552 = vmul.f32 %v5488, 0.70710677
  %v5553 = vmul.f32 %v5489, 0.70710677
  %v5554 = vmul.f32 %v5490, 0.70710677
  %v5555 = vmul.f32 %v5491, 0.70710677
  %v5556 = vmul.f32 %v5492, 0.70710677
  %v5557 = vmul.f32 %v5493, 0.70710677
  %v5558 = vmul.f32 %v5494, 0.70710677
  %v5559 = vmul.f32 %v5495, 0.70710677
  %v5560 = vmul.f32 %v5496, 0.70710677
  %v5561 = vmul.f32 %v5497, 0.70710677
  %v5562 = vmul.f32 %v5498, 0.70710677
  %v5563 = vmul.f32 %v5499, 0.70710677
  %v5564 = vmul.f32 %v5500, 0.70710677
  %v5565 = verf.f32.pop %v5533
  %v5566 = verf.f32.pop %v5534
  %v5567 = verf.f32.pop %v5535
  %v5568 = verf.f32.pop %v5536
  %v5569 = verf.f32.pop %v5537
  %v5570 = verf.f32.pop %v5538
  %v5571 = verf.f32.pop %v5539
  %v5572 = verf.f32.pop %v5540
  %v5573 = verf.f32.pop %v5541
  %v5574 = verf.f32.pop %v5542
  %v5575 = verf.f32.pop %v5543
  %v5576 = verf.f32.pop %v5544
  %v5577 = verf.f32.pop %v5545
  %v5578 = verf.f32.pop %v5546
  %v5579 = verf.f32.pop %v5547
  %v5580 = verf.f32.pop %v5548
  %v5581 = verf.f32.pop %v5549
  %v5582 = verf.f32.pop %v5550
  %v5583 = verf.f32.pop %v5551
  %v5584 = verf.f32.pop %v5552
  %v5585 = verf.f32.pop %v5553
  %v5586 = verf.f32.pop %v5554
  %v5587 = verf.f32.pop %v5555
  %v5588 = verf.f32.pop %v5556
  %v5589 = verf.f32.pop %v5557
  %v5590 = verf.f32.pop %v5558
  %v5591 = verf.f32.pop %v5559
  %v5592 = verf.f32.pop %v5560
  %v5593 = verf.f32.pop %v5561
  %v5594 = verf.f32.pop %v5562
  %v5595 = verf.f32.pop %v5563
  %v5596 = verf.f32.pop %v5564
  %v5597 = vadd.f32 %v5565, 1.0
  %v5598 = vadd.f32 %v5566, 1.0
  %v5599 = vadd.f32 %v5567, 1.0
  %v5600 = vadd.f32 %v5568, 1.0
  %v5601 = vadd.f32 %v5569, 1.0
  %v5602 = vadd.f32 %v5570, 1.0
  %v5603 = vadd.f32 %v5571, 1.0
  %v5604 = vadd.f32 %v5572, 1.0
  %v5605 = vadd.f32 %v5573, 1.0
  %v5606 = vadd.f32 %v5574, 1.0
  %v5607 = vadd.f32 %v5575, 1.0
  %v5608 = vadd.f32 %v5576, 1.0
  %v5609 = vadd.f32 %v5577, 1.0
  %v5610 = vadd.f32 %v5578, 1.0
  %v5611 = vadd.f32 %v5579, 1.0
  %v5612 = vadd.f32 %v5580, 1.0
  %v5613 = vadd.f32 %v5581, 1.0
  %v5614 = vadd.f32 %v5582, 1.0
  %v5615 = vadd.f32 %v5583, 1.0
  %v5616 = vadd.f32 %v5584, 1.0
  %v5617 = vadd.f32 %v5585, 1.0
  %v5618 = vadd.f32 %v5586, 1.0
  %v5619 = vadd.f32 %v5587, 1.0
  %v5620 = vadd.f32 %v5588, 1.0
  %v5621 = vadd.f32 %v5589, 1.0
  %v5622 = vadd.f32 %v5590, 1.0
  %v5623 = vadd.f32 %v5591, 1.0
  %v5624 = vadd.f32 %v5592, 1.0
  %v5625 = vadd.f32 %v5593, 1.0
  %v5626 = vadd.f32 %v5594, 1.0
  %v5627 = vadd.f32 %v5595, 1.0
  %v5628 = vadd.f32 %v5596, 1.0
  %v5629 = vmul.f32 %v5501, %v5597
  %v5630 = vmul.f32 %v5502, %v5598
  %v5631 = vmul.f32 %v5503, %v5599
  %v5632 = vmul.f32 %v5504, %v5600
  %v5633 = vmul.f32 %v5505, %v5601
  %v5634 = vmul.f32 %v5506, %v5602
  %v5635 = vmul.f32 %v5507, %v5603
  %v5636 = vmul.f32 %v5508, %v5604
  %v5637 = vmul.f32 %v5509, %v5605
  %v5638 = vmul.f32 %v5510, %v5606
  %v5639 = vmul.f32 %v5511, %v5607
  %v5640 = vmul.f32 %v5512, %v5608
  %v5641 = vmul.f32 %v5513, %v5609
  %v5642 = vmul.f32 %v5514, %v5610
  %v5643 = vmul.f32 %v5515, %v5611
  %v5644 = vmul.f32 %v5516, %v5612
  %v5645 = vmul.f32 %v5517, %v5613
  %v5646 = vmul.f32 %v5518, %v5614
  %v5647 = vmul.f32 %v5519, %v5615
  %v5648 = vmul.f32 %v5520, %v5616
  %v5649 = vmul.f32 %v5521, %v5617
  %v5650 = vmul.f32 %v5522, %v5618
  %v5651 = vmul.f32 %v5523, %v5619
  %v5652 = vmul.f32 %v5524, %v5620
  %v5653 = vmul.f32 %v5525, %v5621
  %v5654 = vmul.f32 %v5526, %v5622
  %v5655 = vmul.f32 %v5527, %v5623
  %v5656 = vmul.f32 %v5528, %v5624
  %v5657 = vmul.f32 %v5529, %v5625
  %v5658 = vmul.f32 %v5530, %v5626
  %v5659 = vmul.f32 %v5531, %v5627
  %v5660 = vmul.f32 %v5532, %v5628
  %5677 = vrot.lane.b32.xlu0 %v3591, 64
  %v5678 = vpop.permute.xlu0 %5677
  %5679 = vrot.lane.b32.xlu0 %v3594, 64
  %v5680 = vpop.permute.xlu0 %5679
  %5681 = vrot.lane.b32.xlu0 %v3599, 64
  %v5682 = vpop.permute.xlu0 %5681
  %5683 = vrot.lane.b32.xlu0 %v3602, 64
  %v5684 = vpop.permute.xlu0 %5683
  %5685 = vrot.lane.b32.xlu0 %v3607, 64
  %v5686 = vpop.permute.xlu0 %5685
  %5687 = vrot.lane.b32.xlu0 %v3610, 64
  %v5688 = vpop.permute.xlu0 %5687
  %5689 = vrot.lane.b32.xlu0 %v3615, 64
  %v5690 = vpop.permute.xlu0 %5689
  %5691 = vrot.lane.b32.xlu0 %v3618, 64
  %v5692 = vpop.permute.xlu0 %5691
  %5693 = vrot.lane.b32.xlu0 %v3623, 64
  %v5694 = vpop.permute.xlu0 %5693
  %5695 = vrot.lane.b32.xlu0 %v3626, 64
  %v5696 = vpop.permute.xlu0 %5695
  %5697 = vrot.lane.b32.xlu0 %v3631, 64
  %v5698 = vpop.permute.xlu0 %5697
  %5699 = vrot.lane.b32.xlu0 %v3634, 64
  %v5700 = vpop.permute.xlu0 %5699
  %5701 = vrot.lane.b32.xlu0 %v3639, 64
  %v5702 = vpop.permute.xlu0 %5701
  %5703 = vrot.lane.b32.xlu0 %v3642, 64
  %v5704 = vpop.permute.xlu0 %5703
  %5705 = vrot.lane.b32.xlu0 %v3647, 64
  %v5706 = vpop.permute.xlu0 %5705
  %5707 = vrot.lane.b32.xlu0 %v3650, 64
  %v5708 = vpop.permute.xlu0 %5707
  %5741 = vrot.lane.b32.xlu0 %v4165, 96
  %v5742 = vpop.permute.xlu0 %5741
  %5743 = vrot.lane.b32.xlu0 %v4166, 96
  %v5744 = vpop.permute.xlu0 %5743
  %5745 = vrot.lane.b32.xlu0 %v4167, 96
  %v5746 = vpop.permute.xlu0 %5745
  %5747 = vrot.lane.b32.xlu0 %v4168, 96
  %v5748 = vpop.permute.xlu0 %5747
  %5749 = vrot.lane.b32.xlu0 %v4169, 96
  %v5750 = vpop.permute.xlu0 %5749
  %5751 = vrot.lane.b32.xlu0 %v4170, 96
  %v5752 = vpop.permute.xlu0 %5751
  %5753 = vrot.lane.b32.xlu0 %v4171, 96
  %v5754 = vpop.permute.xlu0 %5753
  %5755 = vrot.lane.b32.xlu0 %v4172, 96
  %v5756 = vpop.permute.xlu0 %5755
  %5757 = vrot.lane.b32.xlu0 %v4173, 96
  %v5758 = vpop.permute.xlu0 %5757
  %5759 = vrot.lane.b32.xlu0 %v4174, 96
  %v5760 = vpop.permute.xlu0 %5759
  %5761 = vrot.lane.b32.xlu0 %v4175, 96
  %v5762 = vpop.permute.xlu0 %5761
  %5763 = vrot.lane.b32.xlu0 %v4176, 96
  %v5764 = vpop.permute.xlu0 %5763
  %5765 = vrot.lane.b32.xlu0 %v4177, 96
  %v5766 = vpop.permute.xlu0 %5765
  %5767 = vrot.lane.b32.xlu0 %v4178, 96
  %v5768 = vpop.permute.xlu0 %5767
  %5769 = vrot.lane.b32.xlu0 %v4179, 96
  %v5770 = vpop.permute.xlu0 %5769
  %5771 = vrot.lane.b32.xlu0 %v4180, 96
  %v5772 = vpop.permute.xlu0 %5771
  %5821 = vrot.lane.b32.xlu0 %v5629, 32
  %v5822 = vpop.permute.xlu0 %5821
  %5823 = vrot.lane.b32.xlu0 %v5630, 32
  %v5824 = vpop.permute.xlu0 %5823
  %5825 = vrot.lane.b32.xlu0 %v5631, 32
  %v5826 = vpop.permute.xlu0 %5825
  %5827 = vrot.lane.b32.xlu0 %v5632, 32
  %v5828 = vpop.permute.xlu0 %5827
  %5829 = vrot.lane.b32.xlu0 %v5633, 32
  %v5830 = vpop.permute.xlu0 %5829
  %5831 = vrot.lane.b32.xlu0 %v5634, 32
  %v5832 = vpop.permute.xlu0 %5831
  %5833 = vrot.lane.b32.xlu0 %v5635, 32
  %v5834 = vpop.permute.xlu0 %5833
  %5835 = vrot.lane.b32.xlu0 %v5636, 32
  %v5836 = vpop.permute.xlu0 %5835
  %5837 = vrot.lane.b32.xlu0 %v5637, 32
  %v5838 = vpop.permute.xlu0 %5837
  %5839 = vrot.lane.b32.xlu0 %v5638, 32
  %v5840 = vpop.permute.xlu0 %5839
  %5841 = vrot.lane.b32.xlu0 %v5639, 32
  %v5842 = vpop.permute.xlu0 %5841
  %5843 = vrot.lane.b32.xlu0 %v5640, 32
  %v5844 = vpop.permute.xlu0 %5843
  %5845 = vrot.lane.b32.xlu0 %v5641, 32
  %v5846 = vpop.permute.xlu0 %5845
  %5847 = vrot.lane.b32.xlu0 %v5642, 32
  %v5848 = vpop.permute.xlu0 %5847
  %5849 = vrot.lane.b32.xlu0 %v5643, 32
  %v5850 = vpop.permute.xlu0 %5849
  %5851 = vrot.lane.b32.xlu0 %v5644, 32
  %v5852 = vpop.permute.xlu0 %5851
  %5853 = vrot.lane.b32.xlu0 %v5645, 32
  %v5854 = vpop.permute.xlu0 %5853
  %5855 = vrot.lane.b32.xlu0 %v5646, 32
  %v5856 = vpop.permute.xlu0 %5855
  %5857 = vrot.lane.b32.xlu0 %v5647, 32
  %v5858 = vpop.permute.xlu0 %5857
  %5859 = vrot.lane.b32.xlu0 %v5648, 32
  %v5860 = vpop.permute.xlu0 %5859
  %5861 = vrot.lane.b32.xlu0 %v5649, 32
  %v5862 = vpop.permute.xlu0 %5861
  %5863 = vrot.lane.b32.xlu0 %v5650, 32
  %v5864 = vpop.permute.xlu0 %5863
  %5865 = vrot.lane.b32.xlu0 %v5651, 32
  %v5866 = vpop.permute.xlu0 %5865
  %5867 = vrot.lane.b32.xlu0 %v5652, 32
  %v5868 = vpop.permute.xlu0 %5867
  %5869 = vrot.lane.b32.xlu0 %v5653, 32
  %v5870 = vpop.permute.xlu0 %5869
  %5871 = vrot.lane.b32.xlu0 %v5654, 32
  %v5872 = vpop.permute.xlu0 %5871
  %5873 = vrot.lane.b32.xlu0 %v5655, 32
  %v5874 = vpop.permute.xlu0 %5873
  %5875 = vrot.lane.b32.xlu0 %v5656, 32
  %v5876 = vpop.permute.xlu0 %5875
  %5877 = vrot.lane.b32.xlu0 %v5657, 32
  %v5878 = vpop.permute.xlu0 %5877
  %5879 = vrot.lane.b32.xlu0 %v5658, 32
  %v5880 = vpop.permute.xlu0 %5879
  %5881 = vrot.lane.b32.xlu0 %v5659, 32
  %v5882 = vpop.permute.xlu0 %5881
  %5883 = vrot.lane.b32.xlu0 %v5660, 32
  %v5884 = vpop.permute.xlu0 %5883
  %v5885 = vsel %vm2262, %v5822, %v5824
  %v5886 = vsel %vm2262, %v5826, %v5828
  %v5887 = vsel %vm2262, %v5830, %v5832
  %v5888 = vsel %vm2262, %v5834, %v5836
  %v5889 = vsel %vm2262, %v5838, %v5840
  %v5890 = vsel %vm2262, %v5842, %v5844
  %v5891 = vsel %vm2262, %v5846, %v5848
  %v5892 = vsel %vm2262, %v5850, %v5852
  %v5893 = vsel %vm2262, %v5854, %v5856
  %v5894 = vsel %vm2262, %v5858, %v5860
  %v5895 = vsel %vm2262, %v5862, %v5864
  %v5896 = vsel %vm2262, %v5866, %v5868
  %v5897 = vsel %vm2262, %v5870, %v5872
  %v5898 = vsel %vm2262, %v5874, %v5876
  %v5899 = vsel %vm2262, %v5878, %v5880
  %v5900 = vsel %vm2262, %v5882, %v5884
  %v5933 = vsel %vm1399, %v2588, %v5678
  %v5934 = vsel %vm1399, %v2589, %v5680
  %v5935 = vsel %vm1399, %v2590, %v5682
  %v5936 = vsel %vm1399, %v2591, %v5684
  %v5937 = vsel %vm1399, %v2592, %v5686
  %v5938 = vsel %vm1399, %v2593, %v5688
  %v5939 = vsel %vm1399, %v2594, %v5690
  %v5940 = vsel %vm1399, %v2595, %v5692
  %v5941 = vsel %vm1399, %v2596, %v5694
  %v5942 = vsel %vm1399, %v2597, %v5696
  %v5943 = vsel %vm1399, %v2598, %v5698
  %v5944 = vsel %vm1399, %v2599, %v5700
  %v5945 = vsel %vm1399, %v2600, %v5702
  %v5946 = vsel %vm1399, %v2601, %v5704
  %v5947 = vsel %vm1399, %v2602, %v5706
  %v5948 = vsel %vm1399, %v2603, %v5708
  %vm5949 = vcmask 785408
  %v5950 = vsel %vm5949, %v5933, %v5742
  %v5951 = vsel %vm5949, %v5934, %v5744
  %v5952 = vsel %vm5949, %v5935, %v5746
  %v5953 = vsel %vm5949, %v5936, %v5748
  %v5954 = vsel %vm5949, %v5937, %v5750
  %v5955 = vsel %vm5949, %v5938, %v5752
  %v5956 = vsel %vm5949, %v5939, %v5754
  %v5957 = vsel %vm5949, %v5940, %v5756
  %v5958 = vsel %vm5949, %v5941, %v5758
  %v5959 = vsel %vm5949, %v5942, %v5760
  %v5960 = vsel %vm5949, %v5943, %v5762
  %v5961 = vsel %vm5949, %v5944, %v5764
  %v5962 = vsel %vm5949, %v5945, %v5766
  %v5963 = vsel %vm5949, %v5946, %v5768
  %v5964 = vsel %vm5949, %v5947, %v5770
  %v5965 = vsel %vm5949, %v5948, %v5772
  %v5966 = vsel %vm2262, %v5742, %v5822
  %v5967 = vsel %vm2262, %v5744, %v5826
  %v5968 = vsel %vm2262, %v5746, %v5830
  %v5969 = vsel %vm2262, %v5748, %v5834
  %v5970 = vsel %vm2262, %v5750, %v5838
  %v5971 = vsel %vm2262, %v5752, %v5842
  %v5972 = vsel %vm2262, %v5754, %v5846
  %v5973 = vsel %vm2262, %v5756, %v5850
  %v5974 = vsel %vm2262, %v5758, %v5854
  %v5975 = vsel %vm2262, %v5760, %v5858
  %v5976 = vsel %vm2262, %v5762, %v5862
  %v5977 = vsel %vm2262, %v5764, %v5866
  %v5978 = vsel %vm2262, %v5766, %v5870
  %v5979 = vsel %vm2262, %v5768, %v5874
  %v5980 = vsel %vm2262, %v5770, %v5878
  %v5981 = vsel %vm2262, %v5772, %v5882
  %vm5982 = vcmask 850944
  %v5983 = vsel %vm5982, %v5885, 0.0
  %v5984 = vsel %vm5982, %v5886, 0.0
  %v5985 = vsel %vm5982, %v5887, 0.0
  %v5986 = vsel %vm5982, %v5888, 0.0
  %v5987 = vsel %vm5982, %v5889, 0.0
  %v5988 = vsel %vm5982, %v5890, 0.0
  %v5989 = vsel %vm5982, %v5891, 0.0
  %v5990 = vsel %vm5982, %v5892, 0.0
  %v5991 = vsel %vm5982, %v5893, 0.0
  %v5992 = vsel %vm5982, %v5894, 0.0
  %v5993 = vsel %vm5982, %v5895, 0.0
  %v5994 = vsel %vm5982, %v5896, 0.0
  %v5995 = vsel %vm5982, %v5897, 0.0
  %v5996 = vsel %vm5982, %v5898, 0.0
  %v5997 = vsel %vm5982, %v5899, 0.0
  %v5998 = vsel %vm5982, %v5900, 0.0
  %5999 = vst [vmem:[%s19] sm:$0xff] %v5950
  %6000 = vst [vmem:[%s19 + $0x8] sm:$0xff] %v5966
  %6001 = vst [vmem:[%s19 + $0x10] sm:$0xff] %v5983
  %6002 = vst [vmem:[%s19 + $0x18] sm:$0xff] %v5951
  %6003 = vst [vmem:[%s19 + $0x20] sm:$0xff] %v5967
  %6004 = vst [vmem:[%s19 + $0x28] sm:$0xff] %v5984
  %6005 = vst [vmem:[%s19 + $0x30] sm:$0xff] %v5952
  %6006 = vst [vmem:[%s19 + $0x38] sm:$0xff] %v5968
  %6007 = vst [vmem:[%s19 + $0x40] sm:$0xff] %v5985
  %6008 = vst [vmem:[%s19 + $0x48] sm:$0xff] %v5953
  %6009 = vst [vmem:[%s19 + $0x50] sm:$0xff] %v5969
  %6010 = vst [vmem:[%s19 + $0x58] sm:$0xff] %v5986
  %6011 = vst [vmem:[%s19 + $0x60] sm:$0xff] %v5954
  %6012 = vst [vmem:[%s19 + $0x68] sm:$0xff] %v5970
  %6013 = vst [vmem:[%s19 + $0x70] sm:$0xff] %v5987
  %6014 = vst [vmem:[%s19 + $0x78] sm:$0xff] %v5955
  %6015 = vst [vmem:[%s19 + $0x80] sm:$0xff] %v5971
  %6016 = vst [vmem:[%s19 + $0x88] sm:$0xff] %v5988
  %6017 = vst [vmem:[%s19 + $0x90] sm:$0xff] %v5956
  %6018 = vst [vmem:[%s19 + $0x98] sm:$0xff] %v5972
  %6019 = vst [vmem:[%s19 + $0xa0] sm:$0xff] %v5989
  %6020 = vst [vmem:[%s19 + $0xa8] sm:$0xff] %v5957
  %6021 = vst [vmem:[%s19 + $0xb0] sm:$0xff] %v5973
  %6022 = vst [vmem:[%s19 + $0xb8] sm:$0xff] %v5990
  %6023 = vst [vmem:[%s19 + $0xc0] sm:$0xff] %v5958
  %6024 = vst [vmem:[%s19 + $0xc8] sm:$0xff] %v5974
  %6025 = vst [vmem:[%s19 + $0xd0] sm:$0xff] %v5991
  %6026 = vst [vmem:[%s19 + $0xd8] sm:$0xff] %v5959
  %6027 = vst [vmem:[%s19 + $0xe0] sm:$0xff] %v5975
  %6028 = vst [vmem:[%s19 + $0xe8] sm:$0xff] %v5992
  %6029 = vst [vmem:[%s19 + $0xf0] sm:$0xff] %v5960
  %6030 = vst [vmem:[%s19 + $0xf8] sm:$0xff] %v5976
  %6031 = vst [vmem:[%s19 + $0x100] sm:$0xff] %v5993
  %6032 = vst [vmem:[%s19 + $0x108] sm:$0xff] %v5961
  %6033 = vst [vmem:[%s19 + $0x110] sm:$0xff] %v5977
  %6034 = vst [vmem:[%s19 + $0x118] sm:$0xff] %v5994
  %6035 = vst [vmem:[%s19 + $0x120] sm:$0xff] %v5962
  %6036 = vst [vmem:[%s19 + $0x128] sm:$0xff] %v5978
  %6037 = vst [vmem:[%s19 + $0x130] sm:$0xff] %v5995
  %6038 = vst [vmem:[%s19 + $0x138] sm:$0xff] %v5963
  %6039 = vst [vmem:[%s19 + $0x140] sm:$0xff] %v5979
  %6040 = vst [vmem:[%s19 + $0x148] sm:$0xff] %v5996
  %6041 = vst [vmem:[%s19 + $0x150] sm:$0xff] %v5964
  %6042 = vst [vmem:[%s19 + $0x158] sm:$0xff] %v5980
  %6043 = vst [vmem:[%s19 + $0x160] sm:$0xff] %v5997
  %6044 = vst [vmem:[%s19 + $0x168] sm:$0xff] %v5965
  %6045 = vst [vmem:[%s19 + $0x170] sm:$0xff] %v5981
  %6046 = vst [vmem:[%s19 + $0x178] sm:$0xff] %v5998
  // Predicated region
  $region78: #{auto_forward.1} parent=0 // pred_check
    _
  $region79: #{auto_forward.1} parent=0 // pred_check_branch
    %6048 = sbr.rel (0) target = $region81
  $region80: #{auto_forward.1} parent=0 // pred_region
    _
  $region81: #{auto_forward.1} parent=0 // pred_fallthru
    _
  // Predicated region
  $region82: #{auto_forward.1} parent=0 // pred_check
    _
  $region83: #{auto_forward.1} parent=0 // pred_check_branch
    %6050 = sbr.rel (0) target = $region85
  $region84: #{auto_forward.1} parent=0 // pred_region
    _
  $region85: #{auto_forward.1} parent=0 // pred_fallthru
    _

</llo_original>
